<compile_context>
chip_gen: v6e
topology: v6e:2x2x1
jax: 0.10.0
libtpu: 0.0.40
codegen_flags: <defaults>
</compile_context>

<pallas_src>
import jax
import jax.numpy as jnp
from jax import lax
from jax.experimental import pallas as pl
from jax.experimental.pallas import tpu as pltpu

EPS = 1e-5
VMEM_LIMIT = 32 * 1024 * 1024   # generous vs. the <1 MiB per-step working set,
                                # and within every generation's physical VMEM.


# --------------------------------------------------------------------------
# kernels
# --------------------------------------------------------------------------
def _stats_kernel(x_ref, sum_ref, ssq_ref):
    """Per-tile, per-channel sum and sum-of-squares (single pass, f32)."""
    x = x_ref[...].astype(jnp.float32)                       # (TM, C)
    sum_ref[0] = jnp.sum(x, axis=0, keepdims=True)           # (1, C)
    ssq_ref[0] = jnp.sum(x * x, axis=0, keepdims=True)


def _bn_conv1x1_stats_kernel(scale_ref, shift_ref, x_ref, w_ref,
                             y_ref, sum_ref, ssq_ref):
    """y = relu(x*scale+shift) @ w  (bf16 MXU operands, f32 accumulation),
    plus per-tile partial stats of y for the *next* BatchNorm."""
    a = jnp.maximum(
        x_ref[...].astype(jnp.float32) * scale_ref[...] + shift_ref[...], 0.0)
    y = jnp.dot(a.astype(jnp.bfloat16), w_ref[...],
                preferred_element_type=jnp.float32)           # (TM, P) f32
    sum_ref[0] = jnp.sum(y, axis=0, keepdims=True)
    ssq_ref[0] = jnp.sum(y * y, axis=0, keepdims=True)
    y_ref[...] = y.astype(y_ref.dtype)


def _bn_conv3x3_stats_kernel(scale_ref, shift_ref, x_ref, w_ref,
                             y_ref, sum_ref, ssq_ref, pad_ref):
    """BN2+ReLU then 3x3/stride1/pad1 conv for one sample, as a single fused
    (H*W, 9P) @ (9P, P) matmul, plus partial stats of the result (for BN3)."""
    _, H, W, P = x_ref.shape
    dt = pad_ref.dtype

    # zero only the 1-element halo strips (the interior is fully overwritten
    # below; halo zeroing is repeated per step so it is megacore-safe).
    zrow = jnp.zeros((1, W + 2, P), dt)
    pad_ref[0:1, :, :] = zrow
    pad_ref[H + 1:H + 2, :, :] = zrow
    zcol = jnp.zeros((H + 2, 1, P), dt)
    pad_ref[:, 0:1, :] = zcol
    pad_ref[:, W + 1:W + 2, :] = zcol

    a = jnp.maximum(
        x_ref[0].astype(jnp.float32) * scale_ref[...] + shift_ref[...], 0.0)
    pad_ref[1:H + 1, 1:W + 1, :] = a.astype(dt)               # interior only

    # fused im2col: 9 shifted taps concatenated on the channel (lane) axis.
    taps = [pad_ref[dh:dh + H, dw:dw + W, :]
            for dh in range(3) for dw in range(3)]            # each (H, W, P)
    patches = jnp.concatenate(taps, axis=-1)                  # (H, W, 9P) bf16
    patches = patches.reshape(H * W, 9 * P)
    y = jnp.dot(patches, w_ref[...],
                preferred_element_type=jnp.float32)           # (H*W, P) f32

    sum_ref[0] = jnp.sum(y, axis=0, keepdims=True)
    ssq_ref[0] = jnp.sum(y * y, axis=0, keepdims=True)
    y_ref[0] = y.reshape(H, W, P).astype(y_ref.dtype)


def _bn_conv1x1_residual_kernel(scale_ref, shift_ref, x_ref, w_ref,
                                res_ref, out_ref):
    """out = relu(x*scale+shift) @ w + residual (lane-dense f32 store)."""
    a = jnp.maximum(
        x_ref[...].astype(jnp.float32) * scale_ref[...] + shift_ref[...], 0.0)
    y = jnp.dot(a.astype(jnp.bfloat16), w_ref[...],
                preferred_element_type=jnp.float32)           # (TM, C) f32
    out_ref[...] = (y + res_ref[...].astype(jnp.float32)).astype(out_ref.dtype)


# --------------------------------------------------------------------------
# wrapper
# --------------------------------------------------------------------------
def _bn_affine(psum, pssq, gamma, beta, count):
    """Combine per-tile partial sums into per-channel BN scale/shift (f32)."""
    mean = jnp.sum(psum, axis=0) / count                      # (1, C)
    var = jnp.maximum(jnp.sum(pssq, axis=0) / count - mean * mean, 0.0)
    scale = gamma * lax.rsqrt(var + EPS)
    shift = beta - mean * scale
    return scale, shift


def preact_bottleneck_nhwc(x_nhwc, params, *, tile_m=256):
    """NHWC-native forward (no relayout). x_nhwc: (N, H, W, Cin) float32."""
    N, H, W, Cin = x_nhwc.shape
    P = params["w1"].shape[1]
    assert params["w1"].shape == (Cin, P)
    assert params["w2"].shape == (3, 3, P, P)
    assert params["w3"].shape == (P, Cin), "identity residual needs 4*planes == inplanes"

    M = N * H * W
    TM = min(tile_m, M)
    while TM > 8 and M % TM:
        TM //= 2
    assert M % TM == 0 and TM % 8 == 0
    T = M // TM

    f32, bf16 = jnp.float32, jnp.bfloat16
    x2d = x_nhwc.astype(f32).reshape(M, Cin)                  # free reshape
    w1 = params["w1"].astype(bf16)                            # (Cin, P)
    w2 = params["w2"].astype(bf16).reshape(9 * P, P)          # (9P, P), tap order (kh,kw,ci)
    w3 = params["w3"].astype(bf16)                            # (P, Cin)

    cparams = pltpu.CompilerParams(
        dimension_semantics=("parallel",),
        vmem_limit_bytes=VMEM_LIMIT,
    )

    # ---- pass 0: BN1 batch statistics of x (per-tile partial sums) --------
    psum, pssq = pl.pallas_call(
        _stats_kernel,
        grid=(T,),
        in_specs=[pl.BlockSpec((TM, Cin), lambda i: (i, 0))],
        out_specs=(pl.BlockSpec((1, 1, Cin), lambda i: (i, 0, 0)),
                   pl.BlockSpec((1, 1, Cin), lambda i: (i, 0, 0))),
        out_shape=(jax.ShapeDtypeStruct((T, 1, Cin), f32),
                   jax.ShapeDtypeStruct((T, 1, Cin), f32)),
        compiler_params=cparams,
    )(x2d)
    scale1, shift1 = _bn_affine(psum, pssq, params["g1"], params["b1"], M)

    # ---- pass 1: relu(bn1(x)) @ w1, plus BN2 partial stats -----------------
    y1, p1s, p1q = pl.pallas_call(
        _bn_conv1x1_stats_kernel,
        grid=(T,),
        in_specs=[pl.BlockSpec((1, Cin), lambda i: (0, 0)),
                  pl.BlockSpec((1, Cin), lambda i: (0, 0)),
                  pl.BlockSpec((TM, Cin), lambda i: (i, 0)),
                  pl.BlockSpec((Cin, P), lambda i: (0, 0))],
        out_specs=(pl.BlockSpec((TM, P), lambda i: (i, 0)),
                   pl.BlockSpec((1, 1, P), lambda i: (i, 0, 0)),
                   pl.BlockSpec((1, 1, P), lambda i: (i, 0, 0))),
        out_shape=(jax.ShapeDtypeStruct((M, P), bf16),
                   jax.ShapeDtypeStruct((T, 1, P), f32),
                   jax.ShapeDtypeStruct((T, 1, P), f32)),
        compiler_params=cparams,
    )(scale1, shift1, x2d, w1)
    scale2, shift2 = _bn_affine(p1s, p1q, params["g2"], params["b2"], M)

    # ---- pass 2: relu(bn2(y1)) -> fused 3x3 conv (per sample), BN3 stats ---
    y2, p2s, p2q = pl.pallas_call(
        _bn_conv3x3_stats_kernel,
        grid=(N,),
        in_specs=[pl.BlockSpec((1, P), lambda n: (0, 0)),
                  pl.BlockSpec((1, P), lambda n: (0, 0)),
                  pl.BlockSpec((1, H, W, P), lambda n: (n, 0, 0, 0)),
                  pl.BlockSpec((9 * P, P), lambda n: (0, 0))],
        out_specs=(pl.BlockSpec((1, H, W, P), lambda n: (n, 0, 0, 0)),
                   pl.BlockSpec((1, 1, P), lambda n: (n, 0, 0)),
                   pl.BlockSpec((1, 1, P), lambda n: (n, 0, 0))),
        out_shape=(jax.ShapeDtypeStruct((N, H, W, P), bf16),
                   jax.ShapeDtypeStruct((N, 1, P), f32),
                   jax.ShapeDtypeStruct((N, 1, P), f32)),
        scratch_shapes=[pltpu.VMEM((H + 2, W + 2, P), bf16)],
        compiler_params=cparams,
    )(scale2, shift2, y1.reshape(N, H, W, P), w2)
    scale3, shift3 = _bn_affine(p2s, p2q, params["g3"], params["b3"], M)

    # ---- pass 3: relu(bn3(y2)) @ w3 + residual -----------------------------
    out2d = pl.pallas_call(
        _bn_conv1x1_residual_kernel,
        grid=(T,),
        in_specs=[pl.BlockSpec((1, P), lambda i: (0, 0)),
                  pl.BlockSpec((1, P), lambda i: (0, 0)),
                  pl.BlockSpec((TM, P), lambda i: (i, 0)),
                  pl.BlockSpec((P, Cin), lambda i: (0, 0)),
                  pl.BlockSpec((TM, Cin), lambda i: (i, 0))],
        out_specs=pl.BlockSpec((TM, Cin), lambda i: (i, 0)),
        out_shape=jax.ShapeDtypeStruct((M, Cin), f32),
        compiler_params=cparams,
    )(scale3, shift3, y2.reshape(M, P), w3, x2d)

    return out2d.reshape(N, H, W, Cin)


def preact_bottleneck_nchw(x_nchw, params):
    """Thin NCHW adapter matching the PyTorch interface.  In a full network
    keep activations NHWC end-to-end and call preact_bottleneck_nhwc directly
    (avoids these two full-tensor relayouts)."""
    x_nhwc = jnp.transpose(x_nchw, (0, 2, 3, 1))
    out = preact_bottleneck_nhwc(x_nhwc, params)
    return jnp.transpose(out, (0, 3, 1, 2))


# --------------------------------------------------------------------------
# pure-JAX reference (f32 XLA convs) for correctness checking
# --------------------------------------------------------------------------
def reference_nchw(x_nchw, params):
    x = jnp.transpose(x_nchw, (0, 2, 3, 1))  # NHWC
    hi = lax.Precision.HIGHEST

    def bn_relu(v, g, b):
        mean = jnp.mean(v, axis=(0, 1, 2), keepdims=True)
        var = jnp.mean((v - mean) ** 2, axis=(0, 1, 2), keepdims=True)
        return jnp.maximum((v - mean) * lax.rsqrt(var + EPS) * g + b, 0.0)

    o = bn_relu(x, params["g1"][0], params["b1"][0])
    o = jnp.einsum("nhwc,cp->nhwp", o, params["w1"], precision=hi)
    o = bn_relu(o, params["g2"][0], params["b2"][0])
    o = lax.conv_general_dilated(o, params["w2"], (1, 1), "SAME",
                                 dimension_numbers=("NHWC", "HWIO", "NHWC"),
                                 precision=hi)
    o = bn_relu(o, params["g3"][0], params["b3"][0])
    o = jnp.einsum("nhwp,pc->nhwc", o, params["w3"], precision=hi)
    o = o + x
    return jnp.transpose(o, (0, 3, 1, 2))  # NCHW


if __name__ == "__main__":
    # small but TPU-tile-friendly shapes: inplanes = 4*planes (identity
    # residual, as the module requires when downsample=None), and the
    # residual/output channel count (128) is lane-dense.
    N, H, W = 4, 16, 16
    planes = 32
    inplanes = planes * 4          # 128

    key = jax.random.PRNGKey(0)
    ks = jax.random.split(key, 10)
    x = jax.random.normal(ks[0], (N, inplanes, H, W), jnp.float32)

    params = dict(
        w1=jax.random.normal(ks[1], (inplanes, planes), jnp.float32) * 0.05,
        w2=jax.random.normal(ks[2], (3, 3, planes, planes), jnp.float32) * 0.05,
        w3=jax.random.normal(ks[3], (planes, inplanes), jnp.float32) * 0.05,
        g1=1.0 + 0.1 * jax.random.normal(ks[4], (1, inplanes), jnp.float32),
        b1=0.1 * jax.random.normal(ks[5], (1, inplanes), jnp.float32),
        g2=1.0 + 0.1 * jax.random.normal(ks[6], (1, planes), jnp.float32),
        b2=0.1 * jax.random.normal(ks[7], (1, planes), jnp.float32),
        g3=1.0 + 0.1 * jax.random.normal(ks[8], (1, planes), jnp.float32),
        b3=0.1 * jax.random.normal(ks[9], (1, planes), jnp.float32),
    )

    fwd = jax.jit(preact_bottleneck_nchw)
    out = jax.block_until_ready(fwd(x, params))
    ref = reference_nchw(x, params)

    assert out.shape == (N, inplanes, H, W), out.shape
    max_err = float(jnp.max(jnp.abs(out - ref)))
    # tolerance accounts for bf16 MXU operands / bf16 intermediate storage
    # (vs. the f32-precision reference).
    tol = max(1e-3, 3e-2 * float(jnp.max(jnp.abs(ref))))
    if max_err > tol:
        raise AssertionError(f"kernel mismatch vs reference: max_err={max_err}, tol={tol}")
    print("KERNEL_OK")
</pallas_src>

<mosaic_0001>
module attributes {stable_mosaic.version = 11 : i64} {
  func.func @_stats_kernel(%arg0: i32, %arg1: memref<256x128xf32, #tpu.memory_space<vmem>>, %arg2: memref<1x1x128xf32, #tpu.memory_space<vmem>>, %arg3: memref<1x1x128xf32, #tpu.memory_space<vmem>>) attributes {dimension_semantics = [#tpu.dimension_semantics<parallel>], iteration_bounds = array<i64: 4>, scalar_prefetch = 0 : i64, scratch_operands = 0 : i64, tpu.core_type = #tpu.core_type<tc>, window_params = [{transform_indices = @transform_0, window_bounds = array<i64: 256, 128>}, {transform_indices = @transform_1, window_bounds = array<i64: 1, 1, 128>}, {transform_indices = @transform_2, window_bounds = array<i64: 1, 1, 128>}]} {
    %c0 = arith.constant 0 : index
    %c0_0 = arith.constant 0 : index
    %0 = vector.load %arg1[%c0, %c0_0] : memref<256x128xf32, #tpu.memory_space<vmem>>, vector<256x128xf32>
    %cst = arith.constant dense<0.000000e+00> : vector<128xf32>
    %1 = vector.multi_reduction <add>, %0, %cst [0] : vector<256x128xf32> to vector<128xf32>
    %2 = vector.shape_cast %1 : vector<128xf32> to vector<1x128xf32>
    %c0_1 = arith.constant 0 : index
    %c0_2 = arith.constant 0 : index
    %c0_3 = arith.constant 0 : index
    %3 = vector.load %arg2[%c0_1, %c0_2, %c0_3] : memref<1x1x128xf32, #tpu.memory_space<vmem>>, vector<1x1x128xf32>
    %4 = vector.shape_cast %3 : vector<1x1x128xf32> to vector<1x128xf32>
    %5 = vector.shape_cast %2 : vector<1x128xf32> to vector<1x1x128xf32>
    tpu.vector_store %arg2[%c0_1, %c0_2, %c0_3], %5 {strides = array<i32>} : memref<1x1x128xf32, #tpu.memory_space<vmem>>, vector<1x1x128xf32>,
    %6 = arith.mulf %0, %0 : vector<256x128xf32>
    %cst_4 = arith.constant dense<0.000000e+00> : vector<128xf32>
    %7 = vector.multi_reduction <add>, %6, %cst_4 [0] : vector<256x128xf32> to vector<128xf32>
    %8 = vector.shape_cast %7 : vector<128xf32> to vector<1x128xf32>
    %c0_5 = arith.constant 0 : index
    %c0_6 = arith.constant 0 : index
    %c0_7 = arith.constant 0 : index
    %9 = vector.load %arg3[%c0_5, %c0_6, %c0_7] : memref<1x1x128xf32, #tpu.memory_space<vmem>>, vector<1x1x128xf32>
    %10 = vector.shape_cast %9 : vector<1x1x128xf32> to vector<1x128xf32>
    %11 = vector.shape_cast %8 : vector<1x128xf32> to vector<1x1x128xf32>
    tpu.vector_store %arg3[%c0_5, %c0_6, %c0_7], %11 {strides = array<i32>} : memref<1x1x128xf32, #tpu.memory_space<vmem>>, vector<1x1x128xf32>,
    return
  }
  func.func @transform_0(%arg0: i32) -> (i32, i32) {
    %c0_i32 = arith.constant 0 : i32
    %c0_i32_0 = arith.constant 0 : i32
    return %arg0, %c0_i32 : i32, i32
  }
  func.func @transform_1(%arg0: i32) -> (i32, i32, i32) {
    %c0_i32 = arith.constant 0 : i32
    %c0_i32_0 = arith.constant 0 : i32
    %c0_i32_1 = arith.constant 0 : i32
    return %arg0, %c0_i32, %c0_i32_0 : i32, i32, i32
  }
  func.func @transform_2(%arg0: i32) -> (i32, i32, i32) {
    %c0_i32 = arith.constant 0 : i32
    %c0_i32_0 = arith.constant 0 : i32
    %c0_i32_1 = arith.constant 0 : i32
    return %arg0, %c0_i32, %c0_i32_0 : i32, i32, i32
  }
}

module attributes {stable_mosaic.version = 11 : i64} {
  func.func @_bn_conv1x1_stats_kernel(%arg0: i32, %arg1: memref<1x128xf32, #tpu.memory_space<vmem>>, %arg2: memref<1x128xf32, #tpu.memory_space<vmem>>, %arg3: memref<256x128xf32, #tpu.memory_space<vmem>>, %arg4: memref<128x32xbf16, #tpu.memory_space<vmem>>, %arg5: memref<256x32xbf16, #tpu.memory_space<vmem>>, %arg6: memref<1x1x32xf32, #tpu.memory_space<vmem>>, %arg7: memref<1x1x32xf32, #tpu.memory_space<vmem>>) attributes {dimension_semantics = [#tpu.dimension_semantics<parallel>], iteration_bounds = array<i64: 4>, scalar_prefetch = 0 : i64, scratch_operands = 0 : i64, tpu.core_type = #tpu.core_type<tc>, window_params = [{pipeline_mode = #tpu.pipeline_mode<synchronous>, transform_indices = @transform_0, window_bounds = array<i64: 1, 128>}, {pipeline_mode = #tpu.pipeline_mode<synchronous>, transform_indices = @transform_1, window_bounds = array<i64: 1, 128>}, {transform_indices = @transform_2, window_bounds = array<i64: 256, 128>}, {pipeline_mode = #tpu.pipeline_mode<synchronous>, transform_indices = @transform_3, window_bounds = array<i64: 128, 32>}, {transform_indices = @transform_4, window_bounds = array<i64: 256, 32>}, {transform_indices = @transform_5, window_bounds = array<i64: 1, 1, 32>}, {transform_indices = @transform_6, window_bounds = array<i64: 1, 1, 32>}]} {
    %c0 = arith.constant 0 : index
    %c0_0 = arith.constant 0 : index
    %0 = vector.load %arg3[%c0, %c0_0] : memref<256x128xf32, #tpu.memory_space<vmem>>, vector<256x128xf32>
    %c0_1 = arith.constant 0 : index
    %c0_2 = arith.constant 0 : index
    %1 = vector.load %arg1[%c0_1, %c0_2] : memref<1x128xf32, #tpu.memory_space<vmem>>, vector<1x128xf32>
    %2 = vector.broadcast %1 : vector<1x128xf32> to vector<256x128xf32>
    %3 = arith.mulf %0, %2 : vector<256x128xf32>
    %c0_3 = arith.constant 0 : index
    %c0_4 = arith.constant 0 : index
    %4 = vector.load %arg2[%c0_3, %c0_4] : memref<1x128xf32, #tpu.memory_space<vmem>>, vector<1x128xf32>
    %5 = vector.broadcast %4 : vector<1x128xf32> to vector<256x128xf32>
    %6 = arith.addf %3, %5 : vector<256x128xf32>
    %cst = arith.constant 0.000000e+00 : f32
    %7 = vector.broadcast %cst : f32 to vector<256x128xf32>
    %8 = arith.maximumf %6, %7 : vector<256x128xf32>
    %9 = arith.truncf %8 : vector<256x128xf32> to vector<256x128xbf16>
    %c0_5 = arith.constant 0 : index
    %c0_6 = arith.constant 0 : index
    %10 = vector.load %arg4[%c0_5, %c0_6] : memref<128x32xbf16, #tpu.memory_space<vmem>>, vector<128x32xbf16>
    %cst_7 = arith.constant dense<0.000000e+00> : vector<256x32xf32>
    %11 = tpu.matmul %9, %10, %cst_7 {dimension_numbers = #tpu.dot_dimension_numbers<[1], [0], [0], [1], [0, 0, 1, 1], [], []>} : vector<256x128xbf16>, vector<128x32xbf16>, vector<256x32xf32> -> vector<256x32xf32>
    %cst_8 = arith.constant dense<0.000000e+00> : vector<32xf32>
    %12 = vector.multi_reduction <add>, %11, %cst_8 [0] : vector<256x32xf32> to vector<32xf32>
    %13 = vector.shape_cast %12 : vector<32xf32> to vector<1x32xf32>
    %c0_9 = arith.constant 0 : index
    %c0_10 = arith.constant 0 : index
    %c0_11 = arith.constant 0 : index
    %14 = vector.load %arg6[%c0_9, %c0_10, %c0_11] : memref<1x1x32xf32, #tpu.memory_space<vmem>>, vector<1x1x32xf32>
    %15 = vector.shape_cast %14 : vector<1x1x32xf32> to vector<1x32xf32>
    %16 = vector.shape_cast %13 : vector<1x32xf32> to vector<1x1x32xf32>
    tpu.vector_store %arg6[%c0_9, %c0_10, %c0_11], %16 {strides = array<i32>} : memref<1x1x32xf32, #tpu.memory_space<vmem>>, vector<1x1x32xf32>,
    %17 = arith.mulf %11, %11 : vector<256x32xf32>
    %cst_12 = arith.constant dense<0.000000e+00> : vector<32xf32>
    %18 = vector.multi_reduction <add>, %17, %cst_12 [0] : vector<256x32xf32> to vector<32xf32>
    %19 = vector.shape_cast %18 : vector<32xf32> to vector<1x32xf32>
    %c0_13 = arith.constant 0 : index
    %c0_14 = arith.constant 0 : index
    %c0_15 = arith.constant 0 : index
    %20 = vector.load %arg7[%c0_13, %c0_14, %c0_15] : memref<1x1x32xf32, #tpu.memory_space<vmem>>, vector<1x1x32xf32>
    %21 = vector.shape_cast %20 : vector<1x1x32xf32> to vector<1x32xf32>
    %22 = vector.shape_cast %19 : vector<1x32xf32> to vector<1x1x32xf32>
    tpu.vector_store %arg7[%c0_13, %c0_14, %c0_15], %22 {strides = array<i32>} : memref<1x1x32xf32, #tpu.memory_space<vmem>>, vector<1x1x32xf32>,
    %23 = arith.truncf %11 : vector<256x32xf32> to vector<256x32xbf16>
    %c0_16 = arith.constant 0 : index
    %c0_17 = arith.constant 0 : index
    %24 = vector.load %arg5[%c0_16, %c0_17] : memref<256x32xbf16, #tpu.memory_space<vmem>>, vector<256x32xbf16>
    tpu.vector_store %arg5[%c0_16, %c0_17], %23 {strides = array<i32>} : memref<256x32xbf16, #tpu.memory_space<vmem>>, vector<256x32xbf16>,
    return
  }
  func.func @transform_0(%arg0: i32) -> (i32, i32) {
    %c0_i32 = arith.constant 0 : i32
    %c0_i32_0 = arith.constant 0 : i32
    %c0_i32_1 = arith.constant 0 : i32
    return %c0_i32, %c0_i32_0 : i32, i32
  }
  func.func @transform_1(%arg0: i32) -> (i32, i32) {
    %c0_i32 = arith.constant 0 : i32
    %c0_i32_0 = arith.constant 0 : i32
    %c0_i32_1 = arith.constant 0 : i32
    return %c0_i32, %c0_i32_0 : i32, i32
  }
  func.func @transform_2(%arg0: i32) -> (i32, i32) {
    %c0_i32 = arith.constant 0 : i32
    %c0_i32_0 = arith.constant 0 : i32
    return %arg0, %c0_i32 : i32, i32
  }
  func.func @transform_3(%arg0: i32) -> (i32, i32) {
    %c0_i32 = arith.constant 0 : i32
    %c0_i32_0 = arith.constant 0 : i32
    %c0_i32_1 = arith.constant 0 : i32
    return %c0_i32, %c0_i32_0 : i32, i32
  }
  func.func @transform_4(%arg0: i32) -> (i32, i32) {
    %c0_i32 = arith.constant 0 : i32
    %c0_i32_0 = arith.constant 0 : i32
    return %arg0, %c0_i32 : i32, i32
  }
  func.func @transform_5(%arg0: i32) -> (i32, i32, i32) {
    %c0_i32 = arith.constant 0 : i32
    %c0_i32_0 = arith.constant 0 : i32
    %c0_i32_1 = arith.constant 0 : i32
    return %arg0, %c0_i32, %c0_i32_0 : i32, i32, i32
  }
  func.func @transform_6(%arg0: i32) -> (i32, i32, i32) {
    %c0_i32 = arith.constant 0 : i32
    %c0_i32_0 = arith.constant 0 : i32
    %c0_i32_1 = arith.constant 0 : i32
    return %arg0, %c0_i32, %c0_i32_0 : i32, i32, i32
  }
}

module attributes {stable_mosaic.version = 11 : i64} {
  func.func @_bn_conv3x3_stats_kernel(%arg0: i32, %arg1: memref<1x32xf32, #tpu.memory_space<vmem>>, %arg2: memref<1x32xf32, #tpu.memory_space<vmem>>, %arg3: memref<1x16x16x32xbf16, #tpu.memory_space<vmem>>, %arg4: memref<288x32xbf16, #tpu.memory_space<vmem>>, %arg5: memref<1x16x16x32xbf16, #tpu.memory_space<vmem>>, %arg6: memref<1x1x32xf32, #tpu.memory_space<vmem>>, %arg7: memref<1x1x32xf32, #tpu.memory_space<vmem>>, %arg8: memref<18x18x32xbf16, #tpu.memory_space<vmem>>) attributes {dimension_semantics = [#tpu.dimension_semantics<parallel>], iteration_bounds = array<i64: 4>, scalar_prefetch = 0 : i64, scratch_operands = 1 : i64, tpu.core_type = #tpu.core_type<tc>, window_params = [{pipeline_mode = #tpu.pipeline_mode<synchronous>, transform_indices = @transform_0, window_bounds = array<i64: 1, 32>}, {pipeline_mode = #tpu.pipeline_mode<synchronous>, transform_indices = @transform_1, window_bounds = array<i64: 1, 32>}, {transform_indices = @transform_2, window_bounds = array<i64: 1, 16, 16, 32>}, {pipeline_mode = #tpu.pipeline_mode<synchronous>, transform_indices = @transform_3, window_bounds = array<i64: 288, 32>}, {transform_indices = @transform_4, window_bounds = array<i64: 1, 16, 16, 32>}, {transform_indices = @transform_5, window_bounds = array<i64: 1, 1, 32>}, {transform_indices = @transform_6, window_bounds = array<i64: 1, 1, 32>}]} {
    %cst = arith.constant 0.000000e+00 : bf16
    %0 = vector.broadcast %cst : bf16 to vector<1x18x32xbf16>
    %c0 = arith.constant 0 : index
    %c0_0 = arith.constant 0 : index
    %c0_1 = arith.constant 0 : index
    %1 = vector.load %arg8[%c0, %c0_0, %c0_1] : memref<18x18x32xbf16, #tpu.memory_space<vmem>>, vector<1x18x32xbf16>
    tpu.vector_store %arg8[%c0, %c0_0, %c0_1], %0 {strides = array<i32>} : memref<18x18x32xbf16, #tpu.memory_space<vmem>>, vector<1x18x32xbf16>,
    %c17 = arith.constant 17 : index
    %c0_2 = arith.constant 0 : index
    %c0_3 = arith.constant 0 : index
    %2 = vector.load %arg8[%c17, %c0_2, %c0_3] : memref<18x18x32xbf16, #tpu.memory_space<vmem>>, vector<1x18x32xbf16>
    tpu.vector_store %arg8[%c17, %c0_2, %c0_3], %0 {strides = array<i32>} : memref<18x18x32xbf16, #tpu.memory_space<vmem>>, vector<1x18x32xbf16>,
    %cst_4 = arith.constant 0.000000e+00 : bf16
    %3 = vector.broadcast %cst_4 : bf16 to vector<18x1x32xbf16>
    %c0_5 = arith.constant 0 : index
    %c0_6 = arith.constant 0 : index
    %c0_7 = arith.constant 0 : index
    %4 = vector.load %arg8[%c0_5, %c0_6, %c0_7] : memref<18x18x32xbf16, #tpu.memory_space<vmem>>, vector<18x1x32xbf16>
    tpu.vector_store %arg8[%c0_5, %c0_6, %c0_7], %3 {strides = array<i32>} : memref<18x18x32xbf16, #tpu.memory_space<vmem>>, vector<18x1x32xbf16>,
    %c0_8 = arith.constant 0 : index
    %c17_9 = arith.constant 17 : index
    %c0_10 = arith.constant 0 : index
    %5 = vector.load %arg8[%c0_8, %c17_9, %c0_10] : memref<18x18x32xbf16, #tpu.memory_space<vmem>>, vector<18x1x32xbf16>
    tpu.vector_store %arg8[%c0_8, %c17_9, %c0_10], %3 {strides = array<i32>} : memref<18x18x32xbf16, #tpu.memory_space<vmem>>, vector<18x1x32xbf16>,
    %c0_11 = arith.constant 0 : index
    %c0_12 = arith.constant 0 : index
    %c0_13 = arith.constant 0 : index
    %c0_14 = arith.constant 0 : index
    %6 = vector.load %arg3[%c0_11, %c0_12, %c0_13, %c0_14] : memref<1x16x16x32xbf16, #tpu.memory_space<vmem>>, vector<1x16x16x32xbf16>
    %7 = vector.shape_cast %6 : vector<1x16x16x32xbf16> to vector<16x16x32xbf16>
    %8 = arith.extf %7 : vector<16x16x32xbf16> to vector<16x16x32xf32>
    %c0_15 = arith.constant 0 : index
    %c0_16 = arith.constant 0 : index
    %9 = vector.load %arg1[%c0_15, %c0_16] : memref<1x32xf32, #tpu.memory_space<vmem>>, vector<1x32xf32>
    %10 = vector.shape_cast %9 : vector<1x32xf32> to vector<1x1x32xf32>
    %11 = vector.broadcast %10 : vector<1x1x32xf32> to vector<16x16x32xf32>
    %12 = arith.mulf %8, %11 : vector<16x16x32xf32>
    %c0_17 = arith.constant 0 : index
    %c0_18 = arith.constant 0 : index
    %13 = vector.load %arg2[%c0_17, %c0_18] : memref<1x32xf32, #tpu.memory_space<vmem>>, vector<1x32xf32>
    %14 = vector.shape_cast %13 : vector<1x32xf32> to vector<1x1x32xf32>
    %15 = vector.broadcast %14 : vector<1x1x32xf32> to vector<16x16x32xf32>
    %16 = arith.addf %12, %15 : vector<16x16x32xf32>
    %cst_19 = arith.constant 0.000000e+00 : f32
    %17 = vector.broadcast %cst_19 : f32 to vector<16x16x32xf32>
    %18 = arith.maximumf %16, %17 : vector<16x16x32xf32>
    %19 = arith.truncf %18 : vector<16x16x32xf32> to vector<16x16x32xbf16>
    %c1 = arith.constant 1 : index
    %c1_20 = arith.constant 1 : index
    %c0_21 = arith.constant 0 : index
    %20 = vector.load %arg8[%c1, %c1_20, %c0_21] : memref<18x18x32xbf16, #tpu.memory_space<vmem>>, vector<16x16x32xbf16>
    tpu.vector_store %arg8[%c1, %c1_20, %c0_21], %19 {strides = array<i32>} : memref<18x18x32xbf16, #tpu.memory_space<vmem>>, vector<16x16x32xbf16>,
    %c0_22 = arith.constant 0 : index
    %c0_23 = arith.constant 0 : index
    %c0_24 = arith.constant 0 : index
    %21 = vector.load %arg8[%c0_22, %c0_23, %c0_24] : memref<18x18x32xbf16, #tpu.memory_space<vmem>>, vector<16x16x32xbf16>
    %c0_25 = arith.constant 0 : index
    %c1_26 = arith.constant 1 : index
    %c0_27 = arith.constant 0 : index
    %22 = vector.load %arg8[%c0_25, %c1_26, %c0_27] : memref<18x18x32xbf16, #tpu.memory_space<vmem>>, vector<16x16x32xbf16>
    %c0_28 = arith.constant 0 : index
    %c2 = arith.constant 2 : index
    %c0_29 = arith.constant 0 : index
    %23 = vector.load %arg8[%c0_28, %c2, %c0_29] : memref<18x18x32xbf16, #tpu.memory_space<vmem>>, vector<16x16x32xbf16>
    %c1_30 = arith.constant 1 : index
    %c0_31 = arith.constant 0 : index
    %c0_32 = arith.constant 0 : index
    %24 = vector.load %arg8[%c1_30, %c0_31, %c0_32] : memref<18x18x32xbf16, #tpu.memory_space<vmem>>, vector<16x16x32xbf16>
    %c1_33 = arith.constant 1 : index
    %c1_34 = arith.constant 1 : index
    %c0_35 = arith.constant 0 : index
    %25 = vector.load %arg8[%c1_33, %c1_34, %c0_35] : memref<18x18x32xbf16, #tpu.memory_space<vmem>>, vector<16x16x32xbf16>
    %c1_36 = arith.constant 1 : index
    %c2_37 = arith.constant 2 : index
    %c0_38 = arith.constant 0 : index
    %26 = vector.load %arg8[%c1_36, %c2_37, %c0_38] : memref<18x18x32xbf16, #tpu.memory_space<vmem>>, vector<16x16x32xbf16>
    %c2_39 = arith.constant 2 : index
    %c0_40 = arith.constant 0 : index
    %c0_41 = arith.constant 0 : index
    %27 = vector.load %arg8[%c2_39, %c0_40, %c0_41] : memref<18x18x32xbf16, #tpu.memory_space<vmem>>, vector<16x16x32xbf16>
    %c2_42 = arith.constant 2 : index
    %c1_43 = arith.constant 1 : index
    %c0_44 = arith.constant 0 : index
    %28 = vector.load %arg8[%c2_42, %c1_43, %c0_44] : memref<18x18x32xbf16, #tpu.memory_space<vmem>>, vector<16x16x32xbf16>
    %c2_45 = arith.constant 2 : index
    %c2_46 = arith.constant 2 : index
    %c0_47 = arith.constant 0 : index
    %29 = vector.load %arg8[%c2_45, %c2_46, %c0_47] : memref<18x18x32xbf16, #tpu.memory_space<vmem>>, vector<16x16x32xbf16>
    %30 = tpu.concatenate %21, %22, %23, %24, %25, %26, %27, %28, %29 in 2 : vector<16x16x32xbf16>, vector<16x16x32xbf16>, vector<16x16x32xbf16>, vector<16x16x32xbf16>, vector<16x16x32xbf16>, vector<16x16x32xbf16>, vector<16x16x32xbf16>, vector<16x16x32xbf16>, vector<16x16x32xbf16> -> vector<16x16x288xbf16>
    %31 = vector.shape_cast %30 : vector<16x16x288xbf16> to vector<256x288xbf16>
    %c0_48 = arith.constant 0 : index
    %c0_49 = arith.constant 0 : index
    %32 = vector.load %arg4[%c0_48, %c0_49] : memref<288x32xbf16, #tpu.memory_space<vmem>>, vector<288x32xbf16>
    %cst_50 = arith.constant dense<0.000000e+00> : vector<256x32xf32>
    %33 = tpu.matmul %31, %32, %cst_50 {dimension_numbers = #tpu.dot_dimension_numbers<[1], [0], [0], [1], [0, 0, 1, 1], [], []>} : vector<256x288xbf16>, vector<288x32xbf16>, vector<256x32xf32> -> vector<256x32xf32>
    %cst_51 = arith.constant dense<0.000000e+00> : vector<32xf32>
    %34 = vector.multi_reduction <add>, %33, %cst_51 [0] : vector<256x32xf32> to vector<32xf32>
    %35 = vector.shape_cast %34 : vector<32xf32> to vector<1x32xf32>
    %c0_52 = arith.constant 0 : index
    %c0_53 = arith.constant 0 : index
    %c0_54 = arith.constant 0 : index
    %36 = vector.load %arg6[%c0_52, %c0_53, %c0_54] : memref<1x1x32xf32, #tpu.memory_space<vmem>>, vector<1x1x32xf32>
    %37 = vector.shape_cast %36 : vector<1x1x32xf32> to vector<1x32xf32>
    %38 = vector.shape_cast %35 : vector<1x32xf32> to vector<1x1x32xf32>
    tpu.vector_store %arg6[%c0_52, %c0_53, %c0_54], %38 {strides = array<i32>} : memref<1x1x32xf32, #tpu.memory_space<vmem>>, vector<1x1x32xf32>,
    %39 = arith.mulf %33, %33 : vector<256x32xf32>
    %cst_55 = arith.constant dense<0.000000e+00> : vector<32xf32>
    %40 = vector.multi_reduction <add>, %39, %cst_55 [0] : vector<256x32xf32> to vector<32xf32>
    %41 = vector.shape_cast %40 : vector<32xf32> to vector<1x32xf32>
    %c0_56 = arith.constant 0 : index
    %c0_57 = arith.constant 0 : index
    %c0_58 = arith.constant 0 : index
    %42 = vector.load %arg7[%c0_56, %c0_57, %c0_58] : memref<1x1x32xf32, #tpu.memory_space<vmem>>, vector<1x1x32xf32>
    %43 = vector.shape_cast %42 : vector<1x1x32xf32> to vector<1x32xf32>
    %44 = vector.shape_cast %41 : vector<1x32xf32> to vector<1x1x32xf32>
    tpu.vector_store %arg7[%c0_56, %c0_57, %c0_58], %44 {strides = array<i32>} : memref<1x1x32xf32, #tpu.memory_space<vmem>>, vector<1x1x32xf32>,
    %45 = vector.shape_cast %33 : vector<256x32xf32> to vector<16x16x32xf32>
    %46 = arith.truncf %45 : vector<16x16x32xf32> to vector<16x16x32xbf16>
    %c0_59 = arith.constant 0 : index
    %c0_60 = arith.constant 0 : index
    %c0_61 = arith.constant 0 : index
    %c0_62 = arith.constant 0 : index
    %47 = vector.load %arg5[%c0_59, %c0_60, %c0_61, %c0_62] : memref<1x16x16x32xbf16, #tpu.memory_space<vmem>>, vector<1x16x16x32xbf16>
    %48 = vector.shape_cast %47 : vector<1x16x16x32xbf16> to vector<16x16x32xbf16>
    %49 = vector.shape_cast %46 : vector<16x16x32xbf16> to vector<1x16x16x32xbf16>
    tpu.vector_store %arg5[%c0_59, %c0_60, %c0_61, %c0_62], %49 {strides = array<i32>} : memref<1x16x16x32xbf16, #tpu.memory_space<vmem>>, vector<1x16x16x32xbf16>,
    return
  }
  func.func @transform_0(%arg0: i32) -> (i32, i32) {
    %c0_i32 = arith.constant 0 : i32
    %c0_i32_0 = arith.constant 0 : i32
    %c0_i32_1 = arith.constant 0 : i32
    return %c0_i32, %c0_i32_0 : i32, i32
  }
  func.func @transform_1(%arg0: i32) -> (i32, i32) {
    %c0_i32 = arith.constant 0 : i32
    %c0_i32_0 = arith.constant 0 : i32
    %c0_i32_1 = arith.constant 0 : i32
    return %c0_i32, %c0_i32_0 : i32, i32
  }
  func.func @transform_2(%arg0: i32) -> (i32, i32, i32, i32) {
    %c0_i32 = arith.constant 0 : i32
    %c0_i32_0 = arith.constant 0 : i32
    %c0_i32_1 = arith.constant 0 : i32
    %c0_i32_2 = arith.constant 0 : i32
    return %arg0, %c0_i32, %c0_i32_0, %c0_i32_1 : i32, i32, i32, i32
  }
  func.func @transform_3(%arg0: i32) -> (i32, i32) {
    %c0_i32 = arith.constant 0 : i32
    %c0_i32_0 = arith.constant 0 : i32
    %c0_i32_1 = arith.constant 0 : i32
    return %c0_i32, %c0_i32_0 : i32, i32
  }
  func.func @transform_4(%arg0: i32) -> (i32, i32, i32, i32) {
    %c0_i32 = arith.constant 0 : i32
    %c0_i32_0 = arith.constant 0 : i32
    %c0_i32_1 = arith.constant 0 : i32
    %c0_i32_2 = arith.constant 0 : i32
    return %arg0, %c0_i32, %c0_i32_0, %c0_i32_1 : i32, i32, i32, i32
  }
  func.func @transform_5(%arg0: i32) -> (i32, i32, i32) {
    %c0_i32 = arith.constant 0 : i32
    %c0_i32_0 = arith.constant 0 : i32
    %c0_i32_1 = arith.constant 0 : i32
    return %arg0, %c0_i32, %c0_i32_0 : i32, i32, i32
  }
  func.func @transform_6(%arg0: i32) -> (i32, i32, i32) {
    %c0_i32 = arith.constant 0 : i32
    %c0_i32_0 = arith.constant 0 : i32
    %c0_i32_1 = arith.constant 0 : i32
    return %arg0, %c0_i32, %c0_i32_0 : i32, i32, i32
  }
}

module attributes {stable_mosaic.version = 11 : i64} {
  func.func @_bn_conv1x1_residual_kernel(%arg0: i32, %arg1: memref<1x32xf32, #tpu.memory_space<vmem>>, %arg2: memref<1x32xf32, #tpu.memory_space<vmem>>, %arg3: memref<256x32xbf16, #tpu.memory_space<vmem>>, %arg4: memref<32x128xbf16, #tpu.memory_space<vmem>>, %arg5: memref<256x128xf32, #tpu.memory_space<vmem>>, %arg6: memref<256x128xf32, #tpu.memory_space<vmem>>) attributes {dimension_semantics = [#tpu.dimension_semantics<parallel>], iteration_bounds = array<i64: 4>, scalar_prefetch = 0 : i64, scratch_operands = 0 : i64, tpu.core_type = #tpu.core_type<tc>, window_params = [{pipeline_mode = #tpu.pipeline_mode<synchronous>, transform_indices = @transform_0, window_bounds = array<i64: 1, 32>}, {pipeline_mode = #tpu.pipeline_mode<synchronous>, transform_indices = @transform_1, window_bounds = array<i64: 1, 32>}, {transform_indices = @transform_2, window_bounds = array<i64: 256, 32>}, {pipeline_mode = #tpu.pipeline_mode<synchronous>, transform_indices = @transform_3, window_bounds = array<i64: 32, 128>}, {transform_indices = @transform_4, window_bounds = array<i64: 256, 128>}, {transform_indices = @transform_5, window_bounds = array<i64: 256, 128>}]} {
    %c0 = arith.constant 0 : index
    %c0_0 = arith.constant 0 : index
    %0 = vector.load %arg3[%c0, %c0_0] : memref<256x32xbf16, #tpu.memory_space<vmem>>, vector<256x32xbf16>
    %1 = arith.extf %0 : vector<256x32xbf16> to vector<256x32xf32>
    %c0_1 = arith.constant 0 : index
    %c0_2 = arith.constant 0 : index
    %2 = vector.load %arg1[%c0_1, %c0_2] : memref<1x32xf32, #tpu.memory_space<vmem>>, vector<1x32xf32>
    %3 = vector.broadcast %2 : vector<1x32xf32> to vector<256x32xf32>
    %4 = arith.mulf %1, %3 : vector<256x32xf32>
    %c0_3 = arith.constant 0 : index
    %c0_4 = arith.constant 0 : index
    %5 = vector.load %arg2[%c0_3, %c0_4] : memref<1x32xf32, #tpu.memory_space<vmem>>, vector<1x32xf32>
    %6 = vector.broadcast %5 : vector<1x32xf32> to vector<256x32xf32>
    %7 = arith.addf %4, %6 : vector<256x32xf32>
    %cst = arith.constant 0.000000e+00 : f32
    %8 = vector.broadcast %cst : f32 to vector<256x32xf32>
    %9 = arith.maximumf %7, %8 : vector<256x32xf32>
    %10 = arith.truncf %9 : vector<256x32xf32> to vector<256x32xbf16>
    %c0_5 = arith.constant 0 : index
    %c0_6 = arith.constant 0 : index
    %11 = vector.load %arg4[%c0_5, %c0_6] : memref<32x128xbf16, #tpu.memory_space<vmem>>, vector<32x128xbf16>
    %cst_7 = arith.constant dense<0.000000e+00> : vector<256x128xf32>
    %12 = tpu.matmul %10, %11, %cst_7 {dimension_numbers = #tpu.dot_dimension_numbers<[1], [0], [0], [1], [0, 0, 1, 1], [], []>} : vector<256x32xbf16>, vector<32x128xbf16>, vector<256x128xf32> -> vector<256x128xf32>
    %c0_8 = arith.constant 0 : index
    %c0_9 = arith.constant 0 : index
    %13 = vector.load %arg5[%c0_8, %c0_9] : memref<256x128xf32, #tpu.memory_space<vmem>>, vector<256x128xf32>
    %14 = arith.addf %12, %13 : vector<256x128xf32>
    %c0_10 = arith.constant 0 : index
    %c0_11 = arith.constant 0 : index
    %15 = vector.load %arg6[%c0_10, %c0_11] : memref<256x128xf32, #tpu.memory_space<vmem>>, vector<256x128xf32>
    tpu.vector_store %arg6[%c0_10, %c0_11], %14 {strides = array<i32>} : memref<256x128xf32, #tpu.memory_space<vmem>>, vector<256x128xf32>,
    return
  }
  func.func @transform_0(%arg0: i32) -> (i32, i32) {
    %c0_i32 = arith.constant 0 : i32
    %c0_i32_0 = arith.constant 0 : i32
    %c0_i32_1 = arith.constant 0 : i32
    return %c0_i32, %c0_i32_0 : i32, i32
  }
  func.func @transform_1(%arg0: i32) -> (i32, i32) {
    %c0_i32 = arith.constant 0 : i32
    %c0_i32_0 = arith.constant 0 : i32
    %c0_i32_1 = arith.constant 0 : i32
    return %c0_i32, %c0_i32_0 : i32, i32
  }
  func.func @transform_2(%arg0: i32) -> (i32, i32) {
    %c0_i32 = arith.constant 0 : i32
    %c0_i32_0 = arith.constant 0 : i32
    return %arg0, %c0_i32 : i32, i32
  }
  func.func @transform_3(%arg0: i32) -> (i32, i32) {
    %c0_i32 = arith.constant 0 : i32
    %c0_i32_0 = arith.constant 0 : i32
    %c0_i32_1 = arith.constant 0 : i32
    return %c0_i32, %c0_i32_0 : i32, i32
  }
  func.func @transform_4(%arg0: i32) -> (i32, i32) {
    %c0_i32 = arith.constant 0 : i32
    %c0_i32_0 = arith.constant 0 : i32
    return %arg0, %c0_i32 : i32, i32
  }
  func.func @transform_5(%arg0: i32) -> (i32, i32) {
    %c0_i32 = arith.constant 0 : i32
    %c0_i32_0 = arith.constant 0 : i32
    return %arg0, %c0_i32 : i32, i32
  }
}

</mosaic_0001>

<llo_original>
// kernel: preact_bottleneck_nchw.4
$region0: #{preact_bottleneck_nchw.4}
  #allocation0 [shape = 'u32[]', space=smem, size = 0x4, offset = 0x4, fixed_abs, tag = 'smem constant byte address 0x4 - core index']
  #allocation1 [shape = 'u32[144,128]{1,0:T(1,128)}', space=vmem, size = 0x12000, scoped, tag = 'internal scratch']
  %s0 = inlined_call_operand.hbm [shape: f32[1024,128], index: 0, kind: input, shape index: {}]
  %s1 = inlined_call_operand.vmem [shape: f32[4,1,128], index: 1, kind: output, shape index: {0}]
  %s2 = inlined_call_operand.vmem [shape: f32[4,1,128], index: 2, kind: output, shape index: {1}]
  %3 = xla_tuple %s1, %s2
  %s4 = sld [smem:[#allocation0]]
  $region49: #{preact_bottleneck_nchw.4} parent=0
    _
  %s6 = ssub.s32 1, %s4
  %s7 = scalar_select 0, %s6, %s4
  $region1: #{preact_bottleneck_nchw.4} parent=0
    #allocation2 [shape = 'u8[262144]{0}', space=vmem, size = 0x40000, scoped, tag = 'input window, operand 0']
    #allocation3 [shape = 's32[2]{0}', space=sflag, size = 0x8, scoped, tag = 'scoped memory for preact_bottleneck_nchw.4']
    %8 = vsyncpa [#allocation3], 0
    %s9 = scalar_lea.sflag [#allocation3], 1
    %10 = vsyncpa %s9, 0
    loop: start=0, step=1, limit=6
    $region2: #{preact_bottleneck_nchw.4} parent=1 // loop_pre_header
      _
    $region3: #{preact_bottleneck_nchw.4} parent=1 // loop_header
      %s12 = sphi 0, %s16
      %p13 = scmp.ge.s32.totalorder %s12, 6
      %s22 = sphi 0, %s24
      %s25 = sphi 0, %s22
      %s26 = sphi 0, %s25
      %s42 = sphi 0, %s26
      %s48 = sphi 0, %s50
      %s51 = sphi 0, %s48
      %s52 = sphi 0, %s51
      %s68 = sphi 0, %s52
      %s74 = sphi 0, %s76
      %s77 = sphi 0, %s74
      %s78 = sphi 0, %s77
      %s94 = sphi 0, %s78
    $region4: #{preact_bottleneck_nchw.4} parent=1 // loop_header_branch
      %15 = sbr.rel (%p13) target = $region8
    $region5: #{preact_bottleneck_nchw.4} parent=1 // loop_body
      %s17 = ssub.s32 %s12, 1
      %s18 = ssub.s32 %s12, 2
      %s19 = sadd.s32 %s12, 1
      %s20 = ssub.s32 %s12, %s19
      %p21 = scmp.eq.s32.totalorder %s20, 0
      %s23 = sadd.s32 %s22, 1
      %s24 = scalar_select %p21, %s22, %s23
      %p27 = pneg %p21
      %p28 = scmp.eq.s32.totalorder %s12, 3
      %p29 = por %p27, %p28
      %p30 = scmp.ne.s32.totalorder %s22, %s25
      %p31 = scmp.eq.s32.totalorder %s12, 0
      %p32 = por %p30, %p31
      %p33 = scmp.ne.s32.totalorder %s22, %s25
      %p34 = scmp.eq.s32.totalorder %s17, 3
      %p35 = por %p33, %p34
      %p36 = scmp.ne.s32.totalorder %s25, %s26
      %p37 = scmp.eq.s32.totalorder %s17, 0
      %p38 = por %p36, %p37
      %p39 = scmp.ne.s32.totalorder %s25, %s26
      %p40 = scmp.eq.s32.totalorder %s18, 3
      %p41 = por %p39, %p40
      %p43 = scmp.ne.s32.totalorder %s26, %s42
      %p44 = scmp.eq.s32.totalorder %s18, 0
      %p45 = por %p43, %p44
      %s46 = ssub.s32 %s12, %s19
      %p47 = scmp.eq.s32.totalorder %s46, 0
      %s49 = sadd.s32 %s48, 1
      %s50 = scalar_select %p47, %s48, %s49
      %p53 = pneg %p47
      %p54 = scmp.eq.s32.totalorder %s12, 3
      %p55 = por %p53, %p54
      %p56 = scmp.ne.s32.totalorder %s48, %s51
      %p57 = scmp.eq.s32.totalorder %s12, 0
      %p58 = por %p56, %p57
      %p59 = scmp.ne.s32.totalorder %s48, %s51
      %p60 = scmp.eq.s32.totalorder %s17, 3
      %p61 = por %p59, %p60
      %p62 = scmp.ne.s32.totalorder %s51, %s52
      %p63 = scmp.eq.s32.totalorder %s17, 0
      %p64 = por %p62, %p63
      %p65 = scmp.ne.s32.totalorder %s51, %s52
      %p66 = scmp.eq.s32.totalorder %s18, 3
      %p67 = por %p65, %p66
      %p69 = scmp.ne.s32.totalorder %s52, %s68
      %p70 = scmp.eq.s32.totalorder %s18, 0
      %p71 = por %p69, %p70
      %s72 = ssub.s32 %s12, %s19
      %p73 = scmp.eq.s32.totalorder %s72, 0
      %s75 = sadd.s32 %s74, 1
      %s76 = scalar_select %p73, %s74, %s75
      %p79 = pneg %p73
      %p80 = scmp.eq.s32.totalorder %s12, 3
      %p81 = por %p79, %p80
      %p82 = scmp.ne.s32.totalorder %s74, %s77
      %p83 = scmp.eq.s32.totalorder %s12, 0
      %p84 = por %p82, %p83
      %p85 = scmp.ne.s32.totalorder %s74, %s77
      %p86 = scmp.eq.s32.totalorder %s17, 3
      %p87 = por %p85, %p86
      %p88 = scmp.ne.s32.totalorder %s77, %s78
      %p89 = scmp.eq.s32.totalorder %s17, 0
      %p90 = por %p88, %p89
      %p91 = scmp.ne.s32.totalorder %s77, %s78
      %p92 = scmp.eq.s32.totalorder %s18, 3
      %p93 = por %p91, %p92
      %p95 = scmp.ne.s32.totalorder %s78, %s94
      %p96 = scmp.eq.s32.totalorder %s18, 0
      %p97 = por %p95, %p96
      %p98 = scmp.le.s32.totalorder 1, %s12
      %p99 = scmp.lt.s32.totalorder %s12, 5
      %p100 = pnand %p98, %p99
      %p101 = pneg %p100
      // Predicated region
      $region9: #{preact_bottleneck_nchw.4} parent=5 // pred_check
        _
      $region10: #{preact_bottleneck_nchw.4} parent=5 // pred_check_branch
        %103 = sbr.rel (%p100) target = $region12
      $region11: #{preact_bottleneck_nchw.4} parent=5 // pred_region
        %s104 = ssub.s32 %s12, 1
      $region12: #{preact_bottleneck_nchw.4} parent=5 // pred_fallthru
        _
      %p105 = scmp.lt.s32.totalorder %s12, 4
      // Predicated region
      $region13: #{preact_bottleneck_nchw.4} parent=5 // pred_check
        %p106 = pneg %p105
      $region14: #{preact_bottleneck_nchw.4} parent=5 // pred_check_branch
        %108 = sbr.rel (%p106) target = $region16
      $region15: #{preact_bottleneck_nchw.4} parent=5 // pred_region
        // Predicated region
        $region17: #{preact_bottleneck_nchw.4} parent=15 // pred_check
          %p109 = pneg %p32
        $region18: #{preact_bottleneck_nchw.4} parent=15 // pred_check_branch
          %111 = sbr.rel (%p109) target = $region20
        $region19: #{preact_bottleneck_nchw.4} parent=15 // pred_region
          %s112 = sand.u32 %s22, 1
          %s113 = scalar_lea.sflag [#allocation3], %s112
          %s114 = sand.u32 %s22, 1
          %s115 = smul.addr %s114, 256
          %s116 = scalar_lea.vmem [#allocation2], %s115
          %s117 = smul.u32 32, %s12
          %s119 = ssub.s32 4096, 4096
          %120 = vsyncadd %s113, %s119
          %s121 = smul.addr %s117, 128
          %s122 = scalar_lea.hbm %s0, %s121
          %s123 = sshll.u32 %s116, 4
          %s124 = int_to_ptr.vmem [resolvable:$true] %s123
          %129 = dma.hbm_to_vmem [thread:$0]  %s122, 4096, %s124, %s113, 128, 128, 8
        $region20: #{preact_bottleneck_nchw.4} parent=15 // pred_fallthru
          _
      $region16: #{preact_bottleneck_nchw.4} parent=5 // pred_fallthru
        _
      %p130 = scmp.le.s32.totalorder 1, %s12
      %p131 = scmp.lt.s32.totalorder %s12, 5
      %p132 = pnand %p130, %p131
      %p133 = pneg %p132
      // Predicated region
      $region21: #{preact_bottleneck_nchw.4} parent=5 // pred_check
        _
      $region22: #{preact_bottleneck_nchw.4} parent=5 // pred_check_branch
        %135 = sbr.rel (%p132) target = $region24
      $region23: #{preact_bottleneck_nchw.4} parent=5 // pred_region
        %s136 = ssub.s32 %s12, 1
        %s137 = sand.u32 %s25, 1
        %s138 = scalar_lea.sflag [#allocation3], %s137
        %s139 = sand.u32 %s25, 1
        %s140 = smul.addr %s139, 256
        %s141 = scalar_lea.vmem [#allocation2], %s140
        // Predicated region
        $region25: #{preact_bottleneck_nchw.4} parent=23 // pred_check
          %p142 = pneg %p38
        $region26: #{preact_bottleneck_nchw.4} parent=23 // pred_check_branch
          %144 = sbr.rel (%p142) target = $region28
        $region27: #{preact_bottleneck_nchw.4} parent=23 // pred_region
          %145 = dma.done %s138, 4096
        $region28: #{preact_bottleneck_nchw.4} parent=23 // pred_fallthru
          _
        %s146 = sand.u32 %s25, 1
        %s147 = scalar_lea.sflag [#allocation3], %s146
        %s148 = sand.u32 %s25, 1
        %s149 = smul.addr %s148, 256
        %s150 = scalar_lea.vmem [#allocation2], %s149
        %p151 = pneg %p38
        %p152 = pneg %p35
        %p153 = pneg %p64
        %p154 = pneg %p61
        %p155 = scmp.lt.s32.totalorder %s17, 3
        %s156 = scalar_select %p155, %s17, 3
        %s157 = scalar_lea.vmem %s1, %s156
        %p158 = pneg %p90
        %p159 = pneg %p87
        %p160 = scmp.lt.s32.totalorder %s17, 3
        %s161 = scalar_select %p160, %s17, 3
        %s162 = scalar_lea.vmem %s2, %s161
        %s163 = smul.u32 32, %s17
        %p164 = scmp.lt.s32.totalorder %s17, 3
        %s165 = scalar_select %p164, %s17, 3
        %s166 = scalar_lea.vmem %s1, %s165
        %p167 = scmp.lt.s32.totalorder %s17, 3
        %s168 = scalar_select %p167, %s17, 3
        %s169 = scalar_lea.vmem %s2, %s168
        %v170 = vld [vmem:[%s141] sm:$0xff]
        %v171 = vld [vmem:[%s141 + $0x8] sm:$0xff]
        %v172 = vld [vmem:[%s141 + $0x10] sm:$0xff]
        %v173 = vld [vmem:[%s141 + $0x18] sm:$0xff]
        %v174 = vld [vmem:[%s141 + $0x20] sm:$0xff]
        %v175 = vld [vmem:[%s141 + $0x28] sm:$0xff]
        %v176 = vld [vmem:[%s141 + $0x30] sm:$0xff]
        %v177 = vld [vmem:[%s141 + $0x38] sm:$0xff]
        %v178 = vld [vmem:[%s141 + $0x40] sm:$0xff]
        %v179 = vld [vmem:[%s141 + $0x48] sm:$0xff]
        %v180 = vld [vmem:[%s141 + $0x50] sm:$0xff]
        %v181 = vld [vmem:[%s141 + $0x58] sm:$0xff]
        %v182 = vld [vmem:[%s141 + $0x60] sm:$0xff]
        %v183 = vld [vmem:[%s141 + $0x68] sm:$0xff]
        %v184 = vld [vmem:[%s141 + $0x70] sm:$0xff]
        %v185 = vld [vmem:[%s141 + $0x78] sm:$0xff]
        %v186 = vld [vmem:[%s141 + $0x80] sm:$0xff]
        %v187 = vld [vmem:[%s141 + $0x88] sm:$0xff]
        %v188 = vld [vmem:[%s141 + $0x90] sm:$0xff]
        %v189 = vld [vmem:[%s141 + $0x98] sm:$0xff]
        %v190 = vld [vmem:[%s141 + $0xa0] sm:$0xff]
        %v191 = vld [vmem:[%s141 + $0xa8] sm:$0xff]
        %v192 = vld [vmem:[%s141 + $0xb0] sm:$0xff]
        %v193 = vld [vmem:[%s141 + $0xb8] sm:$0xff]
        %v194 = vld [vmem:[%s141 + $0xc0] sm:$0xff]
        %v195 = vld [vmem:[%s141 + $0xc8] sm:$0xff]
        %v196 = vld [vmem:[%s141 + $0xd0] sm:$0xff]
        %v197 = vld [vmem:[%s141 + $0xd8] sm:$0xff]
        %v198 = vld [vmem:[%s141 + $0xe0] sm:$0xff]
        %v199 = vld [vmem:[%s141 + $0xe8] sm:$0xff]
        %v200 = vld [vmem:[%s141 + $0xf0] sm:$0xff]
        %v201 = vld [vmem:[%s141 + $0xf8] sm:$0xff]
        %v202 = vadd.f32 %v170, %v171
        %v203 = vadd.f32 %v202, %v172
        %v204 = vadd.f32 %v203, %v173
        %v205 = vadd.f32 %v204, %v174
        %v206 = vadd.f32 %v205, %v175
        %v207 = vadd.f32 %v206, %v176
        %v208 = vadd.f32 %v207, %v177
        %v209 = vadd.f32 %v208, %v178
        %v210 = vadd.f32 %v209, %v179
        %v211 = vadd.f32 %v210, %v180
        %v212 = vadd.f32 %v211, %v181
        %v213 = vadd.f32 %v212, %v182
        %v214 = vadd.f32 %v213, %v183
        %v215 = vadd.f32 %v214, %v184
        %v216 = vadd.f32 %v215, %v185
        %v217 = vadd.f32 %v216, %v186
        %v218 = vadd.f32 %v217, %v187
        %v219 = vadd.f32 %v218, %v188
        %v220 = vadd.f32 %v219, %v189
        %v221 = vadd.f32 %v220, %v190
        %v222 = vadd.f32 %v221, %v191
        %v223 = vadd.f32 %v222, %v192
        %v224 = vadd.f32 %v223, %v193
        %v225 = vadd.f32 %v224, %v194
        %v226 = vadd.f32 %v225, %v195
        %v227 = vadd.f32 %v226, %v196
        %v228 = vadd.f32 %v227, %v197
        %v229 = vadd.f32 %v228, %v198
        %v230 = vadd.f32 %v229, %v199
        %v231 = vadd.f32 %v230, %v200
        %v232 = vadd.f32 %v231, %v201
        %v233 = vrot.slane %v232, 4
        %v234 = vadd.f32 %v232, %v233
        %v235 = vrot.slane %v234, 2
        %v236 = vadd.f32 %v234, %v235
        %v237 = vrot.slane %v236, 1
        %v238 = vadd.f32 %v236, %v237
        %239 = vst [vmem:[%s166] sm:$0x1] %v238
        %v240 = vmul.f32 %v170, %v170
        %v241 = vmul.f32 %v171, %v171
        %v242 = vmul.f32 %v172, %v172
        %v243 = vmul.f32 %v173, %v173
        %v244 = vmul.f32 %v174, %v174
        %v245 = vmul.f32 %v175, %v175
        %v246 = vmul.f32 %v176, %v176
        %v247 = vmul.f32 %v177, %v177
        %v248 = vmul.f32 %v178, %v178
        %v249 = vmul.f32 %v179, %v179
        %v250 = vmul.f32 %v180, %v180
        %v251 = vmul.f32 %v181, %v181
        %v252 = vmul.f32 %v182, %v182
        %v253 = vmul.f32 %v183, %v183
        %v254 = vmul.f32 %v184, %v184
        %v255 = vmul.f32 %v185, %v185
        %v256 = vmul.f32 %v186, %v186
        %v257 = vmul.f32 %v187, %v187
        %v258 = vmul.f32 %v188, %v188
        %v259 = vmul.f32 %v189, %v189
        %v260 = vmul.f32 %v190, %v190
        %v261 = vmul.f32 %v191, %v191
        %v262 = vmul.f32 %v192, %v192
        %v263 = vmul.f32 %v193, %v193
        %v264 = vmul.f32 %v194, %v194
        %v265 = vmul.f32 %v195, %v195
        %v266 = vmul.f32 %v196, %v196
        %v267 = vmul.f32 %v197, %v197
        %v268 = vmul.f32 %v198, %v198
        %v269 = vmul.f32 %v199, %v199
        %v270 = vmul.f32 %v200, %v200
        %v271 = vmul.f32 %v201, %v201
        %v272 = vadd.f32 %v240, %v241
        %v273 = vadd.f32 %v272, %v242
        %v274 = vadd.f32 %v273, %v243
        %v275 = vadd.f32 %v274, %v244
        %v276 = vadd.f32 %v275, %v245
        %v277 = vadd.f32 %v276, %v246
        %v278 = vadd.f32 %v277, %v247
        %v279 = vadd.f32 %v278, %v248
        %v280 = vadd.f32 %v279, %v249
        %v281 = vadd.f32 %v280, %v250
        %v282 = vadd.f32 %v281, %v251
        %v283 = vadd.f32 %v282, %v252
        %v284 = vadd.f32 %v283, %v253
        %v285 = vadd.f32 %v284, %v254
        %v286 = vadd.f32 %v285, %v255
        %v287 = vadd.f32 %v286, %v256
        %v288 = vadd.f32 %v287, %v257
        %v289 = vadd.f32 %v288, %v258
        %v290 = vadd.f32 %v289, %v259
        %v291 = vadd.f32 %v290, %v260
        %v292 = vadd.f32 %v291, %v261
        %v293 = vadd.f32 %v292, %v262
        %v294 = vadd.f32 %v293, %v263
        %v295 = vadd.f32 %v294, %v264
        %v296 = vadd.f32 %v295, %v265
        %v297 = vadd.f32 %v296, %v266
        %v298 = vadd.f32 %v297, %v267
        %v299 = vadd.f32 %v298, %v268
        %v300 = vadd.f32 %v299, %v269
        %v301 = vadd.f32 %v300, %v270
        %v302 = vadd.f32 %v301, %v271
        %v303 = vrot.slane %v302, 4
        %v304 = vadd.f32 %v302, %v303
        %v305 = vrot.slane %v304, 2
        %v306 = vadd.f32 %v304, %v305
        %v307 = vrot.slane %v306, 1
        %v308 = vadd.f32 %v306, %v307
        %309 = vst [vmem:[%s169] sm:$0x1] %v308
        %p310 = scmp.lt.s32.totalorder %s17, 3
        %s311 = scalar_select %p310, %s17, 3
        %s312 = scalar_lea.vmem %s1, %s311
        %p313 = scmp.lt.s32.totalorder %s17, 3
        %s314 = scalar_select %p313, %s17, 3
        %s315 = scalar_lea.vmem %s2, %s314
        // Predicated region
        $region29: #{preact_bottleneck_nchw.4} parent=23 // pred_check
          %p316 = pneg %p61
        $region30: #{preact_bottleneck_nchw.4} parent=23 // pred_check_branch
          %318 = sbr.rel (%p316) target = $region32
        $region31: #{preact_bottleneck_nchw.4} parent=23 // pred_region
          _
        $region32: #{preact_bottleneck_nchw.4} parent=23 // pred_fallthru
          _
        // Predicated region
        $region33: #{preact_bottleneck_nchw.4} parent=23 // pred_check
          %p319 = pneg %p87
        $region34: #{preact_bottleneck_nchw.4} parent=23 // pred_check_branch
          %321 = sbr.rel (%p319) target = $region36
        $region35: #{preact_bottleneck_nchw.4} parent=23 // pred_region
          _
        $region36: #{preact_bottleneck_nchw.4} parent=23 // pred_fallthru
          _
      $region24: #{preact_bottleneck_nchw.4} parent=5 // pred_fallthru
        _
      %p322 = scmp.le.s32.totalorder 2, %s12
      // Predicated region
      $region37: #{preact_bottleneck_nchw.4} parent=5 // pred_check
        %p323 = pneg %p322
      $region38: #{preact_bottleneck_nchw.4} parent=5 // pred_check_branch
        %325 = sbr.rel (%p323) target = $region40
      $region39: #{preact_bottleneck_nchw.4} parent=5 // pred_region
        %s326 = ssub.s32 %s12, 2
        // Predicated region
        $region41: #{preact_bottleneck_nchw.4} parent=39 // pred_check
          %p327 = pneg %p67
        $region42: #{preact_bottleneck_nchw.4} parent=39 // pred_check_branch
          %329 = sbr.rel (%p327) target = $region44
        $region43: #{preact_bottleneck_nchw.4} parent=39 // pred_region
          %p330 = scmp.lt.s32.totalorder %s18, 3
          %s331 = scalar_select %p330, %s18, 3
          %s332 = scalar_lea.vmem %s1, %s331
        $region44: #{preact_bottleneck_nchw.4} parent=39 // pred_fallthru
          _
        // Predicated region
        $region45: #{preact_bottleneck_nchw.4} parent=39 // pred_check
          %p333 = pneg %p93
        $region46: #{preact_bottleneck_nchw.4} parent=39 // pred_check_branch
          %335 = sbr.rel (%p333) target = $region48
        $region47: #{preact_bottleneck_nchw.4} parent=39 // pred_region
          %p336 = scmp.lt.s32.totalorder %s18, 3
          %s337 = scalar_select %p336, %s18, 3
          %s338 = scalar_lea.vmem %s2, %s337
        $region48: #{preact_bottleneck_nchw.4} parent=39 // pred_fallthru
          _
      $region40: #{preact_bottleneck_nchw.4} parent=5 // pred_fallthru
        _
    $region6: #{preact_bottleneck_nchw.4} parent=1 // loop_footer
      %s16 = sadd.s32 1, %s12
    $region7: #{preact_bottleneck_nchw.4} parent=1 // loop_footer_branch
      %11 = sbr.rel target = $region3
    $region8: #{preact_bottleneck_nchw.4} parent=1 // loop_exit
      _
    %339 = vsyncpa [#allocation3], 1
    %s340 = scalar_lea.sflag [#allocation3], 1
    %341 = vsyncpa %s340, 1

// kernel: preact_bottleneck_nchw.5
$region0: #{preact_bottleneck_nchw.5}
  #allocation0 [shape = 'u32[]', space=smem, size = 0x4, offset = 0x4, fixed_abs, tag = 'smem constant byte address 0x4 - core index']
  #allocation1 [shape = 'u32[144,128]{1,0:T(1,128)}', space=vmem, size = 0x12000, scoped, tag = 'internal scratch']
  %s0 = inlined_call_operand.vmem [shape: f32[1,128], index: 0, kind: input, shape index: {}]
  %s1 = inlined_call_operand.vmem [shape: f32[1,128], index: 1, kind: input, shape index: {}]
  %s2 = inlined_call_operand.vmem [shape: f32[1024,128], index: 2, kind: input, shape index: {}]
  %s3 = inlined_call_operand.vmem [shape: bf16[128,32], index: 3, kind: input, shape index: {}]
  %s4 = inlined_call_operand.vmem [shape: bf16[1024,32], index: 4, kind: output, shape index: {0}]
  %s5 = inlined_call_operand.vmem [shape: f32[4,1,32], index: 5, kind: output, shape index: {1}]
  %s6 = inlined_call_operand.vmem [shape: f32[4,1,32], index: 6, kind: output, shape index: {2}]
  %7 = xla_tuple %s4, %s5, %s6
  %s8 = sld [smem:[#allocation0]]
  $region65: #{preact_bottleneck_nchw.5} parent=0
    _
  %s10 = ssub.s32 1, %s8
  %s11 = scalar_select 0, %s10, %s8
  loop: start=0, step=1, limit=6
  $region2: #{preact_bottleneck_nchw.5} parent=0 // loop_pre_header
    _
  $region3: #{preact_bottleneck_nchw.5} parent=0 // loop_header
    %s13 = sphi 0, %s17
    %p14 = scmp.ge.s32.totalorder %s13, 6
    %s21 = sphi 0, %s21
    %s23 = sphi 0, %s21
    %s24 = sphi 0, %s23
    %s38 = sphi 0, %s24
    %s42 = sphi 0, %s42
    %s44 = sphi 0, %s42
    %s45 = sphi 0, %s44
    %s59 = sphi 0, %s45
    %s65 = sphi 0, %s67
    %s68 = sphi 0, %s65
    %s69 = sphi 0, %s68
    %s85 = sphi 0, %s69
    %s89 = sphi 0, %s89
    %s91 = sphi 0, %s89
    %s92 = sphi 0, %s91
    %s106 = sphi 0, %s92
    %s112 = sphi 0, %s114
    %s115 = sphi 0, %s112
    %s116 = sphi 0, %s115
    %s132 = sphi 0, %s116
    %s138 = sphi 0, %s140
    %s141 = sphi 0, %s138
    %s142 = sphi 0, %s141
    %s158 = sphi 0, %s142
    %s164 = sphi 0, %s166
    %s167 = sphi 0, %s164
    %s168 = sphi 0, %s167
    %s184 = sphi 0, %s168
  $region4: #{preact_bottleneck_nchw.5} parent=0 // loop_header_branch
    %16 = sbr.rel (%p14) target = $region8
  $region5: #{preact_bottleneck_nchw.5} parent=0 // loop_body
    %s18 = ssub.s32 %s13, 1
    %s19 = ssub.s32 %s13, 2
    %s20 = sadd.s32 %s13, 1
    %s22 = sadd.s32 %s21, 1
    %p25 = scmp.eq.s32.totalorder %s13, 3
    %p26 = scmp.ne.s32.totalorder %s21, %s23
    %p27 = scmp.eq.s32.totalorder %s13, 0
    %p28 = por %p26, %p27
    %p29 = scmp.ne.s32.totalorder %s21, %s23
    %p30 = scmp.eq.s32.totalorder %s18, 3
    %p31 = por %p29, %p30
    %p32 = scmp.ne.s32.totalorder %s23, %s24
    %p33 = scmp.eq.s32.totalorder %s18, 0
    %p34 = por %p32, %p33
    %p35 = scmp.ne.s32.totalorder %s23, %s24
    %p36 = scmp.eq.s32.totalorder %s19, 3
    %p37 = por %p35, %p36
    %p39 = scmp.ne.s32.totalorder %s24, %s38
    %p40 = scmp.eq.s32.totalorder %s19, 0
    %p41 = por %p39, %p40
    %s43 = sadd.s32 %s42, 1
    %p46 = scmp.eq.s32.totalorder %s13, 3
    %p47 = scmp.ne.s32.totalorder %s42, %s44
    %p48 = scmp.eq.s32.totalorder %s13, 0
    %p49 = por %p47, %p48
    %p50 = scmp.ne.s32.totalorder %s42, %s44
    %p51 = scmp.eq.s32.totalorder %s18, 3
    %p52 = por %p50, %p51
    %p53 = scmp.ne.s32.totalorder %s44, %s45
    %p54 = scmp.eq.s32.totalorder %s18, 0
    %p55 = por %p53, %p54
    %p56 = scmp.ne.s32.totalorder %s44, %s45
    %p57 = scmp.eq.s32.totalorder %s19, 3
    %p58 = por %p56, %p57
    %p60 = scmp.ne.s32.totalorder %s45, %s59
    %p61 = scmp.eq.s32.totalorder %s19, 0
    %p62 = por %p60, %p61
    %s63 = ssub.s32 %s13, %s20
    %p64 = scmp.eq.s32.totalorder %s63, 0
    %s66 = sadd.s32 %s65, 1
    %s67 = scalar_select %p64, %s65, %s66
    %p70 = pneg %p64
    %p71 = scmp.eq.s32.totalorder %s13, 3
    %p72 = por %p70, %p71
    %p73 = scmp.ne.s32.totalorder %s65, %s68
    %p74 = scmp.eq.s32.totalorder %s13, 0
    %p75 = por %p73, %p74
    %p76 = scmp.ne.s32.totalorder %s65, %s68
    %p77 = scmp.eq.s32.totalorder %s18, 3
    %p78 = por %p76, %p77
    %p79 = scmp.ne.s32.totalorder %s68, %s69
    %p80 = scmp.eq.s32.totalorder %s18, 0
    %p81 = por %p79, %p80
    %p82 = scmp.ne.s32.totalorder %s68, %s69
    %p83 = scmp.eq.s32.totalorder %s19, 3
    %p84 = por %p82, %p83
    %p86 = scmp.ne.s32.totalorder %s69, %s85
    %p87 = scmp.eq.s32.totalorder %s19, 0
    %p88 = por %p86, %p87
    %s90 = sadd.s32 %s89, 1
    %p93 = scmp.eq.s32.totalorder %s13, 3
    %p94 = scmp.ne.s32.totalorder %s89, %s91
    %p95 = scmp.eq.s32.totalorder %s13, 0
    %p96 = por %p94, %p95
    %p97 = scmp.ne.s32.totalorder %s89, %s91
    %p98 = scmp.eq.s32.totalorder %s18, 3
    %p99 = por %p97, %p98
    %p100 = scmp.ne.s32.totalorder %s91, %s92
    %p101 = scmp.eq.s32.totalorder %s18, 0
    %p102 = por %p100, %p101
    %p103 = scmp.ne.s32.totalorder %s91, %s92
    %p104 = scmp.eq.s32.totalorder %s19, 3
    %p105 = por %p103, %p104
    %p107 = scmp.ne.s32.totalorder %s92, %s106
    %p108 = scmp.eq.s32.totalorder %s19, 0
    %p109 = por %p107, %p108
    %s110 = ssub.s32 %s13, %s20
    %p111 = scmp.eq.s32.totalorder %s110, 0
    %s113 = sadd.s32 %s112, 1
    %s114 = scalar_select %p111, %s112, %s113
    %p117 = pneg %p111
    %p118 = scmp.eq.s32.totalorder %s13, 3
    %p119 = por %p117, %p118
    %p120 = scmp.ne.s32.totalorder %s112, %s115
    %p121 = scmp.eq.s32.totalorder %s13, 0
    %p122 = por %p120, %p121
    %p123 = scmp.ne.s32.totalorder %s112, %s115
    %p124 = scmp.eq.s32.totalorder %s18, 3
    %p125 = por %p123, %p124
    %p126 = scmp.ne.s32.totalorder %s115, %s116
    %p127 = scmp.eq.s32.totalorder %s18, 0
    %p128 = por %p126, %p127
    %p129 = scmp.ne.s32.totalorder %s115, %s116
    %p130 = scmp.eq.s32.totalorder %s19, 3
    %p131 = por %p129, %p130
    %p133 = scmp.ne.s32.totalorder %s116, %s132
    %p134 = scmp.eq.s32.totalorder %s19, 0
    %p135 = por %p133, %p134
    %s136 = ssub.s32 %s13, %s20
    %p137 = scmp.eq.s32.totalorder %s136, 0
    %s139 = sadd.s32 %s138, 1
    %s140 = scalar_select %p137, %s138, %s139
    %p143 = pneg %p137
    %p144 = scmp.eq.s32.totalorder %s13, 3
    %p145 = por %p143, %p144
    %p146 = scmp.ne.s32.totalorder %s138, %s141
    %p147 = scmp.eq.s32.totalorder %s13, 0
    %p148 = por %p146, %p147
    %p149 = scmp.ne.s32.totalorder %s138, %s141
    %p150 = scmp.eq.s32.totalorder %s18, 3
    %p151 = por %p149, %p150
    %p152 = scmp.ne.s32.totalorder %s141, %s142
    %p153 = scmp.eq.s32.totalorder %s18, 0
    %p154 = por %p152, %p153
    %p155 = scmp.ne.s32.totalorder %s141, %s142
    %p156 = scmp.eq.s32.totalorder %s19, 3
    %p157 = por %p155, %p156
    %p159 = scmp.ne.s32.totalorder %s142, %s158
    %p160 = scmp.eq.s32.totalorder %s19, 0
    %p161 = por %p159, %p160
    %s162 = ssub.s32 %s13, %s20
    %p163 = scmp.eq.s32.totalorder %s162, 0
    %s165 = sadd.s32 %s164, 1
    %s166 = scalar_select %p163, %s164, %s165
    %p169 = pneg %p163
    %p170 = scmp.eq.s32.totalorder %s13, 3
    %p171 = por %p169, %p170
    %p172 = scmp.ne.s32.totalorder %s164, %s167
    %p173 = scmp.eq.s32.totalorder %s13, 0
    %p174 = por %p172, %p173
    %p175 = scmp.ne.s32.totalorder %s164, %s167
    %p176 = scmp.eq.s32.totalorder %s18, 3
    %p177 = por %p175, %p176
    %p178 = scmp.ne.s32.totalorder %s167, %s168
    %p179 = scmp.eq.s32.totalorder %s18, 0
    %p180 = por %p178, %p179
    %p181 = scmp.ne.s32.totalorder %s167, %s168
    %p182 = scmp.eq.s32.totalorder %s19, 3
    %p183 = por %p181, %p182
    %p185 = scmp.ne.s32.totalorder %s168, %s184
    %p186 = scmp.eq.s32.totalorder %s19, 0
    %p187 = por %p185, %p186
    %p188 = scmp.le.s32.totalorder 1, %s13
    %p189 = scmp.lt.s32.totalorder %s13, 5
    %p190 = pnand %p188, %p189
    %p191 = pneg %p190
    // Predicated region
    $region9: #{preact_bottleneck_nchw.5} parent=5 // pred_check
      _
    $region10: #{preact_bottleneck_nchw.5} parent=5 // pred_check_branch
      %193 = sbr.rel (%p190) target = $region12
    $region11: #{preact_bottleneck_nchw.5} parent=5 // pred_region
      %s194 = ssub.s32 %s13, 1
      // Predicated region
      $region13: #{preact_bottleneck_nchw.5} parent=11 // pred_check
        %p195 = pneg %p34
      $region14: #{preact_bottleneck_nchw.5} parent=11 // pred_check_branch
        %197 = sbr.rel (%p195) target = $region16
      $region15: #{preact_bottleneck_nchw.5} parent=11 // pred_region
        _
      $region16: #{preact_bottleneck_nchw.5} parent=11 // pred_fallthru
        _
      // Predicated region
      $region17: #{preact_bottleneck_nchw.5} parent=11 // pred_check
        %p198 = pneg %p55
      $region18: #{preact_bottleneck_nchw.5} parent=11 // pred_check_branch
        %200 = sbr.rel (%p198) target = $region20
      $region19: #{preact_bottleneck_nchw.5} parent=11 // pred_region
        _
      $region20: #{preact_bottleneck_nchw.5} parent=11 // pred_fallthru
        _
      // Predicated region
      $region21: #{preact_bottleneck_nchw.5} parent=11 // pred_check
        %p201 = pneg %p102
      $region22: #{preact_bottleneck_nchw.5} parent=11 // pred_check_branch
        %203 = sbr.rel (%p201) target = $region24
      $region23: #{preact_bottleneck_nchw.5} parent=11 // pred_region
        _
      $region24: #{preact_bottleneck_nchw.5} parent=11 // pred_fallthru
        _
    $region12: #{preact_bottleneck_nchw.5} parent=5 // pred_fallthru
      _
    %p204 = scmp.lt.s32.totalorder %s13, 4
    // Predicated region
    $region25: #{preact_bottleneck_nchw.5} parent=5 // pred_check
      %p205 = pneg %p204
    $region26: #{preact_bottleneck_nchw.5} parent=5 // pred_check_branch
      %207 = sbr.rel (%p205) target = $region28
    $region27: #{preact_bottleneck_nchw.5} parent=5 // pred_region
      // Predicated region
      $region29: #{preact_bottleneck_nchw.5} parent=27 // pred_check
        %p208 = pneg %p75
      $region30: #{preact_bottleneck_nchw.5} parent=27 // pred_check_branch
        %210 = sbr.rel (%p208) target = $region32
      $region31: #{preact_bottleneck_nchw.5} parent=27 // pred_region
        %s211 = smul.u32 32, %s13
        %p212 = scmp.lt.s32.totalorder %s211, 127
        %s213 = scalar_select %p212, %s211, 127
        %s214 = smul.addr %s213, 8
        %s215 = scalar_lea.vmem %s2, %s214
        %s216 = smul.u32 32, %s13
      $region32: #{preact_bottleneck_nchw.5} parent=27 // pred_fallthru
        _
    $region28: #{preact_bottleneck_nchw.5} parent=5 // pred_fallthru
      _
    %p217 = scmp.le.s32.totalorder 1, %s13
    %p218 = scmp.lt.s32.totalorder %s13, 5
    %p219 = pnand %p217, %p218
    %p220 = pneg %p219
    // Predicated region
    $region33: #{preact_bottleneck_nchw.5} parent=5 // pred_check
      _
    $region34: #{preact_bottleneck_nchw.5} parent=5 // pred_check_branch
      %222 = sbr.rel (%p219) target = $region36
    $region35: #{preact_bottleneck_nchw.5} parent=5 // pred_region
      %s223 = ssub.s32 %s13, 1
      %p224 = pneg %p34
      %p225 = pneg %p31
      %p226 = pneg %p55
      %p227 = pneg %p52
      %s228 = smul.u32 32, %s18
      %p229 = scmp.lt.s32.totalorder %s228, 127
      %s230 = scalar_select %p229, %s228, 127
      %s231 = smul.addr %s230, 8
      %s232 = scalar_lea.vmem %s2, %s231
      %p233 = pneg %p81
      %p234 = pneg %p78
      %p235 = pneg %p102
      %p236 = pneg %p99
      %p237 = pneg %p128
      %p238 = pneg %p125
      %s239 = smul.u32 32, %s18
      %p240 = scmp.lt.s32.totalorder %s239, 127
      %s241 = scalar_select %p240, %s239, 127
      %s242 = smul.addr %s241, 4
      %s243 = scalar_lea.vmem %s4, %s242
      %p244 = pneg %p154
      %p245 = pneg %p151
      %p246 = scmp.lt.s32.totalorder %s18, 3
      %s247 = scalar_select %p246, %s18, 3
      %s248 = scalar_lea.vmem %s5, %s247
      %p249 = pneg %p180
      %p250 = pneg %p177
      %p251 = scmp.lt.s32.totalorder %s18, 3
      %s252 = scalar_select %p251, %s18, 3
      %s253 = scalar_lea.vmem %s6, %s252
      %s254 = smul.u32 32, %s18
      %p255 = scmp.lt.s32.totalorder %s254, 127
      %s256 = scalar_select %p255, %s254, 127
      %s257 = smul.addr %s256, 8
      %s258 = scalar_lea.vmem %s2, %s257
      %s259 = smul.u32 32, %s18
      %s260 = smul.u32 32, %s18
      %p261 = scmp.lt.s32.totalorder %s260, 127
      %s262 = scalar_select %p261, %s260, 127
      %s263 = smul.addr %s262, 4
      %s264 = scalar_lea.vmem %s4, %s263
      %s265 = smul.u32 32, %s18
      %p266 = scmp.lt.s32.totalorder %s18, 3
      %s267 = scalar_select %p266, %s18, 3
      %s268 = scalar_lea.vmem %s5, %s267
      %p269 = scmp.lt.s32.totalorder %s18, 3
      %s270 = scalar_select %p269, %s18, 3
      %s271 = scalar_lea.vmem %s6, %s270
      %v273 = vld [vmem:[%s258] sm:$0xff]
      %v274 = vld [vmem:[%s258 + $0x8] sm:$0xff]
      %v275 = vld [vmem:[%s258 + $0x10] sm:$0xff]
      %v276 = vld [vmem:[%s258 + $0x18] sm:$0xff]
      %v277 = vld [vmem:[%s258 + $0x20] sm:$0xff]
      %v278 = vld [vmem:[%s258 + $0x28] sm:$0xff]
      %v279 = vld [vmem:[%s258 + $0x30] sm:$0xff]
      %v280 = vld [vmem:[%s258 + $0x38] sm:$0xff]
      %v281 = vld [vmem:[%s258 + $0x40] sm:$0xff]
      %v282 = vld [vmem:[%s258 + $0x48] sm:$0xff]
      %v283 = vld [vmem:[%s258 + $0x50] sm:$0xff]
      %v284 = vld [vmem:[%s258 + $0x58] sm:$0xff]
      %v285 = vld [vmem:[%s258 + $0x60] sm:$0xff]
      %v286 = vld [vmem:[%s258 + $0x68] sm:$0xff]
      %v287 = vld [vmem:[%s258 + $0x70] sm:$0xff]
      %v288 = vld [vmem:[%s258 + $0x78] sm:$0xff]
      %v289 = vld [vmem:[%s258 + $0x80] sm:$0xff]
      %v290 = vld [vmem:[%s258 + $0x88] sm:$0xff]
      %v291 = vld [vmem:[%s258 + $0x90] sm:$0xff]
      %v292 = vld [vmem:[%s258 + $0x98] sm:$0xff]
      %v293 = vld [vmem:[%s258 + $0xa0] sm:$0xff]
      %v294 = vld [vmem:[%s258 + $0xa8] sm:$0xff]
      %v295 = vld [vmem:[%s258 + $0xb0] sm:$0xff]
      %v296 = vld [vmem:[%s258 + $0xb8] sm:$0xff]
      %v297 = vld [vmem:[%s258 + $0xc0] sm:$0xff]
      %v298 = vld [vmem:[%s258 + $0xc8] sm:$0xff]
      %v299 = vld [vmem:[%s258 + $0xd0] sm:$0xff]
      %v300 = vld [vmem:[%s258 + $0xd8] sm:$0xff]
      %v301 = vld [vmem:[%s258 + $0xe0] sm:$0xff]
      %v302 = vld [vmem:[%s258 + $0xe8] sm:$0xff]
      %v303 = vld [vmem:[%s258 + $0xf0] sm:$0xff]
      %v304 = vld [vmem:[%s258 + $0xf8] sm:$0xff]
      %v305 = vld [vmem:[%s0] sm:$0x1]
      %v307 = vlaneseq
      %v308 = vshrl.u32 %v307, 7
      %v309 = vsub.s32 0, %v308
      %v310 = vrot.slane %v305, %v309
      %v312 = vmul.f32 %v273, %v310
      %v313 = vmul.f32 %v274, %v310
      %v314 = vmul.f32 %v275, %v310
      %v315 = vmul.f32 %v276, %v310
      %v316 = vmul.f32 %v277, %v310
      %v317 = vmul.f32 %v278, %v310
      %v318 = vmul.f32 %v279, %v310
      %v319 = vmul.f32 %v280, %v310
      %v320 = vmul.f32 %v281, %v310
      %v321 = vmul.f32 %v282, %v310
      %v322 = vmul.f32 %v283, %v310
      %v323 = vmul.f32 %v284, %v310
      %v324 = vmul.f32 %v285, %v310
      %v325 = vmul.f32 %v286, %v310
      %v326 = vmul.f32 %v287, %v310
      %v327 = vmul.f32 %v288, %v310
      %v328 = vmul.f32 %v289, %v310
      %v329 = vmul.f32 %v290, %v310
      %v330 = vmul.f32 %v291, %v310
      %v331 = vmul.f32 %v292, %v310
      %v332 = vmul.f32 %v293, %v310
      %v333 = vmul.f32 %v294, %v310
      %v334 = vmul.f32 %v295, %v310
      %v335 = vmul.f32 %v296, %v310
      %v336 = vmul.f32 %v297, %v310
      %v337 = vmul.f32 %v298, %v310
      %v338 = vmul.f32 %v299, %v310
      %v339 = vmul.f32 %v300, %v310
      %v340 = vmul.f32 %v301, %v310
      %v341 = vmul.f32 %v302, %v310
      %v342 = vmul.f32 %v303, %v310
      %v343 = vmul.f32 %v304, %v310
      %v344 = vld [vmem:[%s1] sm:$0x1]
      %v346 = vlaneseq
      %v347 = vshrl.u32 %v346, 7
      %v348 = vsub.s32 0, %v347
      %v349 = vrot.slane %v344, %v348
      %v351 = vadd.f32 %v312, %v349
      %v352 = vadd.f32 %v313, %v349
      %v353 = vadd.f32 %v314, %v349
      %v354 = vadd.f32 %v315, %v349
      %v355 = vadd.f32 %v316, %v349
      %v356 = vadd.f32 %v317, %v349
      %v357 = vadd.f32 %v318, %v349
      %v358 = vadd.f32 %v319, %v349
      %v359 = vadd.f32 %v320, %v349
      %v360 = vadd.f32 %v321, %v349
      %v361 = vadd.f32 %v322, %v349
      %v362 = vadd.f32 %v323, %v349
      %v363 = vadd.f32 %v324, %v349
      %v364 = vadd.f32 %v325, %v349
      %v365 = vadd.f32 %v326, %v349
      %v366 = vadd.f32 %v327, %v349
      %v367 = vadd.f32 %v328, %v349
      %v368 = vadd.f32 %v329, %v349
      %v369 = vadd.f32 %v330, %v349
      %v370 = vadd.f32 %v331, %v349
      %v371 = vadd.f32 %v332, %v349
      %v372 = vadd.f32 %v333, %v349
      %v373 = vadd.f32 %v334, %v349
      %v374 = vadd.f32 %v335, %v349
      %v375 = vadd.f32 %v336, %v349
      %v376 = vadd.f32 %v337, %v349
      %v377 = vadd.f32 %v338, %v349
      %v378 = vadd.f32 %v339, %v349
      %v379 = vadd.f32 %v340, %v349
      %v380 = vadd.f32 %v341, %v349
      %v381 = vadd.f32 %v342, %v349
      %v382 = vadd.f32 %v343, %v349
      %v383 = vmax.f32 %v351, 0.0
      %v384 = vmax.f32 %v352, 0.0
      %v385 = vmax.f32 %v353, 0.0
      %v386 = vmax.f32 %v354, 0.0
      %v387 = vmax.f32 %v355, 0.0
      %v388 = vmax.f32 %v356, 0.0
      %v389 = vmax.f32 %v357, 0.0
      %v390 = vmax.f32 %v358, 0.0
      %v391 = vmax.f32 %v359, 0.0
      %v392 = vmax.f32 %v360, 0.0
      %v393 = vmax.f32 %v361, 0.0
      %v394 = vmax.f32 %v362, 0.0
      %v395 = vmax.f32 %v363, 0.0
      %v396 = vmax.f32 %v364, 0.0
      %v397 = vmax.f32 %v365, 0.0
      %v398 = vmax.f32 %v366, 0.0
      %v399 = vmax.f32 %v367, 0.0
      %v400 = vmax.f32 %v368, 0.0
      %v401 = vmax.f32 %v369, 0.0
      %v402 = vmax.f32 %v370, 0.0
      %v403 = vmax.f32 %v371, 0.0
      %v404 = vmax.f32 %v372, 0.0
      %v405 = vmax.f32 %v373, 0.0
      %v406 = vmax.f32 %v374, 0.0
      %v407 = vmax.f32 %v375, 0.0
      %v408 = vmax.f32 %v376, 0.0
      %v409 = vmax.f32 %v377, 0.0
      %v410 = vmax.f32 %v378, 0.0
      %v411 = vmax.f32 %v379, 0.0
      %v412 = vmax.f32 %v380, 0.0
      %v413 = vmax.f32 %v381, 0.0
      %v414 = vmax.f32 %v382, 0.0
      %v415 = vpack.c.bf16 %v384, %v383
      %v416 = vpack.c.bf16 %v386, %v385
      %v417 = vpack.c.bf16 %v388, %v387
      %v418 = vpack.c.bf16 %v390, %v389
      %v419 = vpack.c.bf16 %v392, %v391
      %v420 = vpack.c.bf16 %v394, %v393
      %v421 = vpack.c.bf16 %v396, %v395
      %v422 = vpack.c.bf16 %v398, %v397
      %v423 = vpack.c.bf16 %v400, %v399
      %v424 = vpack.c.bf16 %v402, %v401
      %v425 = vpack.c.bf16 %v404, %v403
      %v426 = vpack.c.bf16 %v406, %v405
      %v427 = vpack.c.bf16 %v408, %v407
      %v428 = vpack.c.bf16 %v410, %v409
      %v429 = vpack.c.bf16 %v412, %v411
      %v430 = vpack.c.bf16 %v414, %v413
      %v431 = vld [vmem:[%s3] sm:$0xf]
      %v432 = vld [vmem:[%s3 + $0x4] sm:$0xf]
      %v433 = vld [vmem:[%s3 + $0x8] sm:$0xf]
      %v434 = vld [vmem:[%s3 + $0xc] sm:$0xf]
      %v435 = vld [vmem:[%s3 + $0x10] sm:$0xf]
      %v436 = vld [vmem:[%s3 + $0x14] sm:$0xf]
      %v437 = vld [vmem:[%s3 + $0x18] sm:$0xf]
      %v438 = vld [vmem:[%s3 + $0x1c] sm:$0xf]
      %v439 = vld [vmem:[%s3 + $0x20] sm:$0xf]
      %v440 = vld [vmem:[%s3 + $0x24] sm:$0xf]
      %v441 = vld [vmem:[%s3 + $0x28] sm:$0xf]
      %v442 = vld [vmem:[%s3 + $0x2c] sm:$0xf]
      %v443 = vld [vmem:[%s3 + $0x30] sm:$0xf]
      %v444 = vld [vmem:[%s3 + $0x34] sm:$0xf]
      %v445 = vld [vmem:[%s3 + $0x38] sm:$0xf]
      %v446 = vld [vmem:[%s3 + $0x3c] sm:$0xf]
      %v463 = vunpack.c.l.b16 %v431
      %v464 = vunpack.c.l.b16 %v432
      %v465 = vunpack.c.l.b16 %v433
      %v466 = vunpack.c.l.b16 %v434
      %v467 = vunpack.c.l.b16 %v435
      %v468 = vunpack.c.l.b16 %v436
      %v469 = vunpack.c.l.b16 %v437
      %v470 = vunpack.c.l.b16 %v438
      %v471 = vunpack.c.l.b16 %v439
      %v472 = vunpack.c.l.b16 %v440
      %v473 = vunpack.c.l.b16 %v441
      %v474 = vunpack.c.l.b16 %v442
      %v475 = vunpack.c.l.b16 %v443
      %v476 = vunpack.c.l.b16 %v444
      %v477 = vunpack.c.l.b16 %v445
      %v478 = vunpack.c.l.b16 %v446
      %v479 = vpack.c.b16 %v464, %v463
      %v480 = vpack.c.b16 %v466, %v465
      %v481 = vpack.c.b16 %v468, %v467
      %v482 = vpack.c.b16 %v470, %v469
      %v483 = vpack.c.b16 %v472, %v471
      %v484 = vpack.c.b16 %v474, %v473
      %v485 = vpack.c.b16 %v476, %v475
      %v486 = vpack.c.b16 %v478, %v477
      %495 = vmatprep.subr.bf16.mxu0 0
      %496 = vmatpush1.bf16.msra.mxu0 %v486
      %497 = vmatprep.subr.bf16.mxu0 0
      %498 = vmatpush1.bf16.msra.mxu0 %v485
      %499 = vmatprep.subr.bf16.mxu0 0
      %500 = vmatpush1.bf16.msra.mxu0 %v484
      %501 = vmatprep.subr.bf16.mxu0 0
      %502 = vmatpush1.bf16.msra.mxu0 %v483
      %503 = vmatprep.subr.bf16.mxu0 0
      %504 = vmatpush1.bf16.msra.mxu0 %v482
      %505 = vmatprep.subr.bf16.mxu0 0
      %506 = vmatpush1.bf16.msra.mxu0 %v481
      %507 = vmatprep.subr.bf16.mxu0 0
      %508 = vmatpush1.bf16.msra.mxu0 %v480
      %509 = vmatprep.subr.bf16.mxu0 0
      %510 = vmatpush1.bf16.msra.mxu0 %v479
      %511 = vmatprep.subr.bf16.mxu0 0
      %512 = vmatpush2.bf16.msra.mxu0 0
      %513 = vmatprep.subr.bf16.mxu0 0
      %514 = vmatpush2.bf16.msra.mxu0 0
      %515 = vmatprep.subr.bf16.mxu0 0
      %516 = vmatpush2.bf16.msra.mxu0 0
      %517 = vmatprep.subr.bf16.mxu0 0
      %518 = vmatpush2.bf16.msra.mxu0 0
      %519 = vmatprep.subr.bf16.mxu0 0
      %520 = vmatpush2.bf16.msra.mxu0 0
      %521 = vmatprep.subr.bf16.mxu0 0
      %522 = vmatpush2.bf16.msra.mxu0 0
      %523 = vmatprep.subr.bf16.mxu0 0
      %524 = vmatpush2.bf16.msra.mxu0 0
      %525 = vmatprep.subr.bf16.mxu0 0
      %526 = vmatpush2.bf16.msra.mxu0 0
      %527 = vmatprep.mubr.bf16.mxu0 0
      %528 = vmatmul.mubr.bf16.gmra.mxu0 %v415
      %v529 = vpop.f32.mrf.mxu0
      %v530 = vadd.f32 0.0, %v529
      %v531 = vpop.f32.mrf.mxu0
      %v532 = vpop.f32.mrf.mxu0
      %v533 = vadd.f32 0.0, %v532
      %v534 = vpop.f32.mrf.mxu0
      %535 = vmatprep.mubr.bf16.mxu0 0
      %536 = vmatmul.mubr.bf16.gmra.mxu0 %v416
      %v537 = vpop.f32.mrf.mxu0
      %v538 = vadd.f32 0.0, %v537
      %v539 = vpop.f32.mrf.mxu0
      %v540 = vpop.f32.mrf.mxu0
      %v541 = vadd.f32 0.0, %v540
      %v542 = vpop.f32.mrf.mxu0
      %543 = vmatprep.mubr.bf16.mxu0 0
      %544 = vmatmul.mubr.bf16.gmra.mxu0 %v417
      %v545 = vpop.f32.mrf.mxu0
      %v546 = vadd.f32 0.0, %v545
      %v547 = vpop.f32.mrf.mxu0
      %v548 = vpop.f32.mrf.mxu0
      %v549 = vadd.f32 0.0, %v548
      %v550 = vpop.f32.mrf.mxu0
      %551 = vmatprep.mubr.bf16.mxu0 0
      %552 = vmatmul.mubr.bf16.gmra.mxu0 %v418
      %v553 = vpop.f32.mrf.mxu0
      %v554 = vadd.f32 0.0, %v553
      %v555 = vpop.f32.mrf.mxu0
      %v556 = vpop.f32.mrf.mxu0
      %v557 = vadd.f32 0.0, %v556
      %v558 = vpop.f32.mrf.mxu0
      %559 = vmatprep.mubr.bf16.mxu0 0
      %560 = vmatmul.mubr.bf16.gmra.mxu0 %v419
      %v561 = vpop.f32.mrf.mxu0
      %v562 = vadd.f32 0.0, %v561
      %v563 = vpop.f32.mrf.mxu0
      %v564 = vpop.f32.mrf.mxu0
      %v565 = vadd.f32 0.0, %v564
      %v566 = vpop.f32.mrf.mxu0
      %567 = vmatprep.mubr.bf16.mxu0 0
      %568 = vmatmul.mubr.bf16.gmra.mxu0 %v420
      %v569 = vpop.f32.mrf.mxu0
      %v570 = vadd.f32 0.0, %v569
      %v571 = vpop.f32.mrf.mxu0
      %v572 = vpop.f32.mrf.mxu0
      %v573 = vadd.f32 0.0, %v572
      %v574 = vpop.f32.mrf.mxu0
      %575 = vmatprep.mubr.bf16.mxu0 0
      %576 = vmatmul.mubr.bf16.gmra.mxu0 %v421
      %v577 = vpop.f32.mrf.mxu0
      %v578 = vadd.f32 0.0, %v577
      %v579 = vpop.f32.mrf.mxu0
      %v580 = vpop.f32.mrf.mxu0
      %v581 = vadd.f32 0.0, %v580
      %v582 = vpop.f32.mrf.mxu0
      %583 = vmatprep.mubr.bf16.mxu0 0
      %584 = vmatmul.mubr.bf16.gmra.mxu0 %v422
      %v585 = vpop.f32.mrf.mxu0
      %v586 = vadd.f32 0.0, %v585
      %v587 = vpop.f32.mrf.mxu0
      %v588 = vpop.f32.mrf.mxu0
      %v589 = vadd.f32 0.0, %v588
      %v590 = vpop.f32.mrf.mxu0
      %591 = vmatprep.mubr.bf16.mxu0 0
      %592 = vmatmul.mubr.bf16.gmra.mxu0 %v423
      %v593 = vpop.f32.mrf.mxu0
      %v594 = vadd.f32 0.0, %v593
      %v595 = vpop.f32.mrf.mxu0
      %v596 = vpop.f32.mrf.mxu0
      %v597 = vadd.f32 0.0, %v596
      %v598 = vpop.f32.mrf.mxu0
      %599 = vmatprep.mubr.bf16.mxu0 0
      %600 = vmatmul.mubr.bf16.gmra.mxu0 %v424
      %v601 = vpop.f32.mrf.mxu0
      %v602 = vadd.f32 0.0, %v601
      %v603 = vpop.f32.mrf.mxu0
      %v604 = vpop.f32.mrf.mxu0
      %v605 = vadd.f32 0.0, %v604
      %v606 = vpop.f32.mrf.mxu0
      %607 = vmatprep.mubr.bf16.mxu0 0
      %608 = vmatmul.mubr.bf16.gmra.mxu0 %v425
      %v609 = vpop.f32.mrf.mxu0
      %v610 = vadd.f32 0.0, %v609
      %v611 = vpop.f32.mrf.mxu0
      %v612 = vpop.f32.mrf.mxu0
      %v613 = vadd.f32 0.0, %v612
      %v614 = vpop.f32.mrf.mxu0
      %615 = vmatprep.mubr.bf16.mxu0 0
      %616 = vmatmul.mubr.bf16.gmra.mxu0 %v426
      %v617 = vpop.f32.mrf.mxu0
      %v618 = vadd.f32 0.0, %v617
      %v619 = vpop.f32.mrf.mxu0
      %v620 = vpop.f32.mrf.mxu0
      %v621 = vadd.f32 0.0, %v620
      %v622 = vpop.f32.mrf.mxu0
      %623 = vmatprep.mubr.bf16.mxu0 0
      %624 = vmatmul.mubr.bf16.gmra.mxu0 %v427
      %v625 = vpop.f32.mrf.mxu0
      %v626 = vadd.f32 0.0, %v625
      %v627 = vpop.f32.mrf.mxu0
      %v628 = vpop.f32.mrf.mxu0
      %v629 = vadd.f32 0.0, %v628
      %v630 = vpop.f32.mrf.mxu0
      %631 = vmatprep.mubr.bf16.mxu0 0
      %632 = vmatmul.mubr.bf16.gmra.mxu0 %v428
      %v633 = vpop.f32.mrf.mxu0
      %v634 = vadd.f32 0.0, %v633
      %v635 = vpop.f32.mrf.mxu0
      %v636 = vpop.f32.mrf.mxu0
      %v637 = vadd.f32 0.0, %v636
      %v638 = vpop.f32.mrf.mxu0
      %639 = vmatprep.mubr.bf16.mxu0 0
      %640 = vmatmul.mubr.bf16.gmra.mxu0 %v429
      %v641 = vpop.f32.mrf.mxu0
      %v642 = vadd.f32 0.0, %v641
      %v643 = vpop.f32.mrf.mxu0
      %v644 = vpop.f32.mrf.mxu0
      %v645 = vadd.f32 0.0, %v644
      %v646 = vpop.f32.mrf.mxu0
      %647 = vmatprep.mubr.bf16.mxu0 0
      %648 = vmatmul.mubr.bf16.gmra.mxu0 %v430
      %v649 = vpop.f32.mrf.mxu0
      %v650 = vadd.f32 0.0, %v649
      %v651 = vpop.f32.mrf.mxu0
      %v652 = vpop.f32.mrf.mxu0
      %v653 = vadd.f32 0.0, %v652
      %v654 = vpop.f32.mrf.mxu0
      %655 = vdwg.mxu0
      %vm656 = vcmask 261120
      %v657 = vsel %vm656, %v530, 0.0
      %v658 = vsel %vm656, %v533, 0.0
      %v659 = vadd.f32 %v657, %v658
      %v660 = vsel %vm656, %v538, 0.0
      %v661 = vadd.f32 %v659, %v660
      %v662 = vsel %vm656, %v541, 0.0
      %v663 = vadd.f32 %v661, %v662
      %v664 = vsel %vm656, %v546, 0.0
      %v665 = vadd.f32 %v663, %v664
      %v666 = vsel %vm656, %v549, 0.0
      %v667 = vadd.f32 %v665, %v666
      %v668 = vsel %vm656, %v554, 0.0
      %v669 = vadd.f32 %v667, %v668
      %v670 = vsel %vm656, %v557, 0.0
      %v671 = vadd.f32 %v669, %v670
      %v672 = vsel %vm656, %v562, 0.0
      %v673 = vadd.f32 %v671, %v672
      %v674 = vsel %vm656, %v565, 0.0
      %v675 = vadd.f32 %v673, %v674
      %v676 = vsel %vm656, %v570, 0.0
      %v677 = vadd.f32 %v675, %v676
      %v678 = vsel %vm656, %v573, 0.0
      %v679 = vadd.f32 %v677, %v678
      %v680 = vsel %vm656, %v578, 0.0
      %v681 = vadd.f32 %v679, %v680
      %v682 = vsel %vm656, %v581, 0.0
      %v683 = vadd.f32 %v681, %v682
      %v684 = vsel %vm656, %v586, 0.0
      %v685 = vadd.f32 %v683, %v684
      %v686 = vsel %vm656, %v589, 0.0
      %v687 = vadd.f32 %v685, %v686
      %v688 = vsel %vm656, %v594, 0.0
      %v689 = vadd.f32 %v687, %v688
      %v690 = vsel %vm656, %v597, 0.0
      %v691 = vadd.f32 %v689, %v690
      %v692 = vsel %vm656, %v602, 0.0
      %v693 = vadd.f32 %v691, %v692
      %v694 = vsel %vm656, %v605, 0.0
      %v695 = vadd.f32 %v693, %v694
      %v696 = vsel %vm656, %v610, 0.0
      %v697 = vadd.f32 %v695, %v696
      %v698 = vsel %vm656, %v613, 0.0
      %v699 = vadd.f32 %v697, %v698
      %v700 = vsel %vm656, %v618, 0.0
      %v701 = vadd.f32 %v699, %v700
      %v702 = vsel %vm656, %v621, 0.0
      %v703 = vadd.f32 %v701, %v702
      %v704 = vsel %vm656, %v626, 0.0
      %v705 = vadd.f32 %v703, %v704
      %v706 = vsel %vm656, %v629, 0.0
      %v707 = vadd.f32 %v705, %v706
      %v708 = vsel %vm656, %v634, 0.0
      %v709 = vadd.f32 %v707, %v708
      %v710 = vsel %vm656, %v637, 0.0
      %v711 = vadd.f32 %v709, %v710
      %v712 = vsel %vm656, %v642, 0.0
      %v713 = vadd.f32 %v711, %v712
      %v714 = vsel %vm656, %v645, 0.0
      %v715 = vadd.f32 %v713, %v714
      %v716 = vsel %vm656, %v650, 0.0
      %v717 = vadd.f32 %v715, %v716
      %v718 = vsel %vm656, %v653, 0.0
      %v719 = vadd.f32 %v717, %v718
      %v720 = vrot.slane %v719, 4
      %v721 = vadd.f32 %v719, %v720
      %v722 = vrot.slane %v721, 2
      %v723 = vadd.f32 %v721, %v722
      %v724 = vrot.slane %v723, 1
      %v725 = vadd.f32 %v723, %v724
      %vm726 = vcmask 253952
      %727 = vst.msk [vmem:[%s268] sm:$0x1] %vm726, %v725
      %v728 = vmul.f32 %v530, %v530
      %v729 = vmul.f32 %v533, %v533
      %v730 = vmul.f32 %v538, %v538
      %v731 = vmul.f32 %v541, %v541
      %v732 = vmul.f32 %v546, %v546
      %v733 = vmul.f32 %v549, %v549
      %v734 = vmul.f32 %v554, %v554
      %v735 = vmul.f32 %v557, %v557
      %v736 = vmul.f32 %v562, %v562
      %v737 = vmul.f32 %v565, %v565
      %v738 = vmul.f32 %v570, %v570
      %v739 = vmul.f32 %v573, %v573
      %v740 = vmul.f32 %v578, %v578
      %v741 = vmul.f32 %v581, %v581
      %v742 = vmul.f32 %v586, %v586
      %v743 = vmul.f32 %v589, %v589
      %v744 = vmul.f32 %v594, %v594
      %v745 = vmul.f32 %v597, %v597
      %v746 = vmul.f32 %v602, %v602
      %v747 = vmul.f32 %v605, %v605
      %v748 = vmul.f32 %v610, %v610
      %v749 = vmul.f32 %v613, %v613
      %v750 = vmul.f32 %v618, %v618
      %v751 = vmul.f32 %v621, %v621
      %v752 = vmul.f32 %v626, %v626
      %v753 = vmul.f32 %v629, %v629
      %v754 = vmul.f32 %v634, %v634
      %v755 = vmul.f32 %v637, %v637
      %v756 = vmul.f32 %v642, %v642
      %v757 = vmul.f32 %v645, %v645
      %v758 = vmul.f32 %v650, %v650
      %v759 = vmul.f32 %v653, %v653
      %v760 = vsel %vm656, %v728, 0.0
      %v761 = vsel %vm656, %v729, 0.0
      %v762 = vadd.f32 %v760, %v761
      %v763 = vsel %vm656, %v730, 0.0
      %v764 = vadd.f32 %v762, %v763
      %v765 = vsel %vm656, %v731, 0.0
      %v766 = vadd.f32 %v764, %v765
      %v767 = vsel %vm656, %v732, 0.0
      %v768 = vadd.f32 %v766, %v767
      %v769 = vsel %vm656, %v733, 0.0
      %v770 = vadd.f32 %v768, %v769
      %v771 = vsel %vm656, %v734, 0.0
      %v772 = vadd.f32 %v770, %v771
      %v773 = vsel %vm656, %v735, 0.0
      %v774 = vadd.f32 %v772, %v773
      %v775 = vsel %vm656, %v736, 0.0
      %v776 = vadd.f32 %v774, %v775
      %v777 = vsel %vm656, %v737, 0.0
      %v778 = vadd.f32 %v776, %v777
      %v779 = vsel %vm656, %v738, 0.0
      %v780 = vadd.f32 %v778, %v779
      %v781 = vsel %vm656, %v739, 0.0
      %v782 = vadd.f32 %v780, %v781
      %v783 = vsel %vm656, %v740, 0.0
      %v784 = vadd.f32 %v782, %v783
      %v785 = vsel %vm656, %v741, 0.0
      %v786 = vadd.f32 %v784, %v785
      %v787 = vsel %vm656, %v742, 0.0
      %v788 = vadd.f32 %v786, %v787
      %v789 = vsel %vm656, %v743, 0.0
      %v790 = vadd.f32 %v788, %v789
      %v791 = vsel %vm656, %v744, 0.0
      %v792 = vadd.f32 %v790, %v791
      %v793 = vsel %vm656, %v745, 0.0
      %v794 = vadd.f32 %v792, %v793
      %v795 = vsel %vm656, %v746, 0.0
      %v796 = vadd.f32 %v794, %v795
      %v797 = vsel %vm656, %v747, 0.0
      %v798 = vadd.f32 %v796, %v797
      %v799 = vsel %vm656, %v748, 0.0
      %v800 = vadd.f32 %v798, %v799
      %v801 = vsel %vm656, %v749, 0.0
      %v802 = vadd.f32 %v800, %v801
      %v803 = vsel %vm656, %v750, 0.0
      %v804 = vadd.f32 %v802, %v803
      %v805 = vsel %vm656, %v751, 0.0
      %v806 = vadd.f32 %v804, %v805
      %v807 = vsel %vm656, %v752, 0.0
      %v808 = vadd.f32 %v806, %v807
      %v809 = vsel %vm656, %v753, 0.0
      %v810 = vadd.f32 %v808, %v809
      %v811 = vsel %vm656, %v754, 0.0
      %v812 = vadd.f32 %v810, %v811
      %v813 = vsel %vm656, %v755, 0.0
      %v814 = vadd.f32 %v812, %v813
      %v815 = vsel %vm656, %v756, 0.0
      %v816 = vadd.f32 %v814, %v815
      %v817 = vsel %vm656, %v757, 0.0
      %v818 = vadd.f32 %v816, %v817
      %v819 = vsel %vm656, %v758, 0.0
      %v820 = vadd.f32 %v818, %v819
      %v821 = vsel %vm656, %v759, 0.0
      %v822 = vadd.f32 %v820, %v821
      %v823 = vrot.slane %v822, 4
      %v824 = vadd.f32 %v822, %v823
      %v825 = vrot.slane %v824, 2
      %v826 = vadd.f32 %v824, %v825
      %v827 = vrot.slane %v826, 1
      %v828 = vadd.f32 %v826, %v827
      %829 = vst.msk [vmem:[%s271] sm:$0x1] %vm726, %v828
      %v830 = vpack.c.bf16 %v533, %v530
      %v831 = vpack.c.bf16 %v541, %v538
      %v832 = vpack.c.bf16 %v549, %v546
      %v833 = vpack.c.bf16 %v557, %v554
      %v834 = vpack.c.bf16 %v565, %v562
      %v835 = vpack.c.bf16 %v573, %v570
      %v836 = vpack.c.bf16 %v581, %v578
      %v837 = vpack.c.bf16 %v589, %v586
      %v838 = vpack.c.bf16 %v597, %v594
      %v839 = vpack.c.bf16 %v605, %v602
      %v840 = vpack.c.bf16 %v613, %v610
      %v841 = vpack.c.bf16 %v621, %v618
      %v842 = vpack.c.bf16 %v629, %v626
      %v843 = vpack.c.bf16 %v637, %v634
      %v844 = vpack.c.bf16 %v645, %v642
      %v845 = vpack.c.bf16 %v653, %v650
      %v862 = vunpack.c.l.b16 %v830
      %v863 = vunpack.c.h.b16 %v830
      %v864 = vunpack.c.l.b16 %v831
      %v865 = vunpack.c.h.b16 %v831
      %v866 = vunpack.c.l.b16 %v832
      %v867 = vunpack.c.h.b16 %v832
      %v868 = vunpack.c.l.b16 %v833
      %v869 = vunpack.c.h.b16 %v833
      %v870 = vunpack.c.l.b16 %v834
      %v871 = vunpack.c.h.b16 %v834
      %v872 = vunpack.c.l.b16 %v835
      %v873 = vunpack.c.h.b16 %v835
      %v874 = vunpack.c.l.b16 %v836
      %v875 = vunpack.c.h.b16 %v836
      %v876 = vunpack.c.l.b16 %v837
      %v877 = vunpack.c.h.b16 %v837
      %v878 = vunpack.c.l.b16 %v838
      %v879 = vunpack.c.h.b16 %v838
      %v880 = vunpack.c.l.b16 %v839
      %v881 = vunpack.c.h.b16 %v839
      %v882 = vunpack.c.l.b16 %v840
      %v883 = vunpack.c.h.b16 %v840
      %v884 = vunpack.c.l.b16 %v841
      %v885 = vunpack.c.h.b16 %v841
      %v886 = vunpack.c.l.b16 %v842
      %v887 = vunpack.c.h.b16 %v842
      %v888 = vunpack.c.l.b16 %v843
      %v889 = vunpack.c.h.b16 %v843
      %v890 = vunpack.c.l.b16 %v844
      %v891 = vunpack.c.h.b16 %v844
      %v892 = vunpack.c.l.b16 %v845
      %v893 = vunpack.c.h.b16 %v845
      %v894 = vpack.c.b16 %v862, %v862
      %v895 = vpack.c.b16 %v863, %v863
      %v896 = vpack.c.b16 %v864, %v864
      %v897 = vpack.c.b16 %v865, %v865
      %v898 = vpack.c.b16 %v866, %v866
      %v899 = vpack.c.b16 %v867, %v867
      %v900 = vpack.c.b16 %v868, %v868
      %v901 = vpack.c.b16 %v869, %v869
      %v902 = vpack.c.b16 %v870, %v870
      %v903 = vpack.c.b16 %v871, %v871
      %v904 = vpack.c.b16 %v872, %v872
      %v905 = vpack.c.b16 %v873, %v873
      %v906 = vpack.c.b16 %v874, %v874
      %v907 = vpack.c.b16 %v875, %v875
      %v908 = vpack.c.b16 %v876, %v876
      %v909 = vpack.c.b16 %v877, %v877
      %v910 = vpack.c.b16 %v878, %v878
      %v911 = vpack.c.b16 %v879, %v879
      %v912 = vpack.c.b16 %v880, %v880
      %v913 = vpack.c.b16 %v881, %v881
      %v914 = vpack.c.b16 %v882, %v882
      %v915 = vpack.c.b16 %v883, %v883
      %v916 = vpack.c.b16 %v884, %v884
      %v917 = vpack.c.b16 %v885, %v885
      %v918 = vpack.c.b16 %v886, %v886
      %v919 = vpack.c.b16 %v887, %v887
      %v920 = vpack.c.b16 %v888, %v888
      %v921 = vpack.c.b16 %v889, %v889
      %v922 = vpack.c.b16 %v890, %v890
      %v923 = vpack.c.b16 %v891, %v891
      %v924 = vpack.c.b16 %v892, %v892
      %v925 = vpack.c.b16 %v893, %v893
      %vm958 = vcmask 257024
      %959 = vst.msk [vmem:[%s264] sm:$0xf] %vm958, %v894
      %960 = vst.msk [vmem:[%s264 + $0x4] sm:$0xf] %vm958, %v895
      %961 = vst.msk [vmem:[%s264 + $0x8] sm:$0xf] %vm958, %v896
      %962 = vst.msk [vmem:[%s264 + $0xc] sm:$0xf] %vm958, %v897
      %963 = vst.msk [vmem:[%s264 + $0x10] sm:$0xf] %vm958, %v898
      %964 = vst.msk [vmem:[%s264 + $0x14] sm:$0xf] %vm958, %v899
      %965 = vst.msk [vmem:[%s264 + $0x18] sm:$0xf] %vm958, %v900
      %966 = vst.msk [vmem:[%s264 + $0x1c] sm:$0xf] %vm958, %v901
      %967 = vst.msk [vmem:[%s264 + $0x20] sm:$0xf] %vm958, %v902
      %968 = vst.msk [vmem:[%s264 + $0x24] sm:$0xf] %vm958, %v903
      %969 = vst.msk [vmem:[%s264 + $0x28] sm:$0xf] %vm958, %v904
      %970 = vst.msk [vmem:[%s264 + $0x2c] sm:$0xf] %vm958, %v905
      %971 = vst.msk [vmem:[%s264 + $0x30] sm:$0xf] %vm958, %v906
      %972 = vst.msk [vmem:[%s264 + $0x34] sm:$0xf] %vm958, %v907
      %973 = vst.msk [vmem:[%s264 + $0x38] sm:$0xf] %vm958, %v908
      %974 = vst.msk [vmem:[%s264 + $0x3c] sm:$0xf] %vm958, %v909
      %975 = vst.msk [vmem:[%s264 + $0x40] sm:$0xf] %vm958, %v910
      %976 = vst.msk [vmem:[%s264 + $0x44] sm:$0xf] %vm958, %v911
      %977 = vst.msk [vmem:[%s264 + $0x48] sm:$0xf] %vm958, %v912
      %978 = vst.msk [vmem:[%s264 + $0x4c] sm:$0xf] %vm958, %v913
      %979 = vst.msk [vmem:[%s264 + $0x50] sm:$0xf] %vm958, %v914
      %980 = vst.msk [vmem:[%s264 + $0x54] sm:$0xf] %vm958, %v915
      %981 = vst.msk [vmem:[%s264 + $0x58] sm:$0xf] %vm958, %v916
      %982 = vst.msk [vmem:[%s264 + $0x5c] sm:$0xf] %vm958, %v917
      %983 = vst.msk [vmem:[%s264 + $0x60] sm:$0xf] %vm958, %v918
      %984 = vst.msk [vmem:[%s264 + $0x64] sm:$0xf] %vm958, %v919
      %985 = vst.msk [vmem:[%s264 + $0x68] sm:$0xf] %vm958, %v920
      %986 = vst.msk [vmem:[%s264 + $0x6c] sm:$0xf] %vm958, %v921
      %987 = vst.msk [vmem:[%s264 + $0x70] sm:$0xf] %vm958, %v922
      %988 = vst.msk [vmem:[%s264 + $0x74] sm:$0xf] %vm958, %v923
      %989 = vst.msk [vmem:[%s264 + $0x78] sm:$0xf] %vm958, %v924
      %990 = vst.msk [vmem:[%s264 + $0x7c] sm:$0xf] %vm958, %v925
      %s991 = smul.u32 32, %s18
      %p992 = scmp.lt.s32.totalorder %s991, 127
      %s993 = scalar_select %p992, %s991, 127
      %s994 = smul.addr %s993, 4
      %s995 = scalar_lea.vmem %s4, %s994
      %p996 = scmp.lt.s32.totalorder %s18, 3
      %s997 = scalar_select %p996, %s18, 3
      %s998 = scalar_lea.vmem %s5, %s997
      %p999 = scmp.lt.s32.totalorder %s18, 3
      %s1000 = scalar_select %p999, %s18, 3
      %s1001 = scalar_lea.vmem %s6, %s1000
      // Predicated region
      $region37: #{preact_bottleneck_nchw.5} parent=35 // pred_check
        %p1002 = pneg %p125
      $region38: #{preact_bottleneck_nchw.5} parent=35 // pred_check_branch
        %1004 = sbr.rel (%p1002) target = $region40
      $region39: #{preact_bottleneck_nchw.5} parent=35 // pred_region
        %s1005 = smul.u32 32, %s18
      $region40: #{preact_bottleneck_nchw.5} parent=35 // pred_fallthru
        _
      // Predicated region
      $region41: #{preact_bottleneck_nchw.5} parent=35 // pred_check
        %p1006 = pneg %p151
      $region42: #{preact_bottleneck_nchw.5} parent=35 // pred_check_branch
        %1008 = sbr.rel (%p1006) target = $region44
      $region43: #{preact_bottleneck_nchw.5} parent=35 // pred_region
        _
      $region44: #{preact_bottleneck_nchw.5} parent=35 // pred_fallthru
        _
      // Predicated region
      $region45: #{preact_bottleneck_nchw.5} parent=35 // pred_check
        %p1009 = pneg %p177
      $region46: #{preact_bottleneck_nchw.5} parent=35 // pred_check_branch
        %1011 = sbr.rel (%p1009) target = $region48
      $region47: #{preact_bottleneck_nchw.5} parent=35 // pred_region
        _
      $region48: #{preact_bottleneck_nchw.5} parent=35 // pred_fallthru
        _
    $region36: #{preact_bottleneck_nchw.5} parent=5 // pred_fallthru
      _
    %p1012 = scmp.le.s32.totalorder 2, %s13
    // Predicated region
    $region49: #{preact_bottleneck_nchw.5} parent=5 // pred_check
      %p1013 = pneg %p1012
    $region50: #{preact_bottleneck_nchw.5} parent=5 // pred_check_branch
      %1015 = sbr.rel (%p1013) target = $region52
    $region51: #{preact_bottleneck_nchw.5} parent=5 // pred_region
      %s1016 = ssub.s32 %s13, 2
      // Predicated region
      $region53: #{preact_bottleneck_nchw.5} parent=51 // pred_check
        %p1017 = pneg %p131
      $region54: #{preact_bottleneck_nchw.5} parent=51 // pred_check_branch
        %1019 = sbr.rel (%p1017) target = $region56
      $region55: #{preact_bottleneck_nchw.5} parent=51 // pred_region
        %s1020 = smul.u32 32, %s19
        %p1021 = scmp.lt.s32.totalorder %s1020, 127
        %s1022 = scalar_select %p1021, %s1020, 127
        %s1023 = smul.addr %s1022, 4
        %s1024 = scalar_lea.vmem %s4, %s1023
      $region56: #{preact_bottleneck_nchw.5} parent=51 // pred_fallthru
        _
      // Predicated region
      $region57: #{preact_bottleneck_nchw.5} parent=51 // pred_check
        %p1025 = pneg %p157
      $region58: #{preact_bottleneck_nchw.5} parent=51 // pred_check_branch
        %1027 = sbr.rel (%p1025) target = $region60
      $region59: #{preact_bottleneck_nchw.5} parent=51 // pred_region
        %p1028 = scmp.lt.s32.totalorder %s19, 3
        %s1029 = scalar_select %p1028, %s19, 3
        %s1030 = scalar_lea.vmem %s5, %s1029
      $region60: #{preact_bottleneck_nchw.5} parent=51 // pred_fallthru
        _
      // Predicated region
      $region61: #{preact_bottleneck_nchw.5} parent=51 // pred_check
        %p1031 = pneg %p183
      $region62: #{preact_bottleneck_nchw.5} parent=51 // pred_check_branch
        %1033 = sbr.rel (%p1031) target = $region64
      $region63: #{preact_bottleneck_nchw.5} parent=51 // pred_region
        %p1034 = scmp.lt.s32.totalorder %s19, 3
        %s1035 = scalar_select %p1034, %s19, 3
        %s1036 = scalar_lea.vmem %s6, %s1035
      $region64: #{preact_bottleneck_nchw.5} parent=51 // pred_fallthru
        _
    $region52: #{preact_bottleneck_nchw.5} parent=5 // pred_fallthru
      _
  $region6: #{preact_bottleneck_nchw.5} parent=0 // loop_footer
    %s17 = sadd.s32 1, %s13
  $region7: #{preact_bottleneck_nchw.5} parent=0 // loop_footer_branch
    %12 = sbr.rel target = $region3
  $region8: #{preact_bottleneck_nchw.5} parent=0 // loop_exit
    _

// kernel: preact_bottleneck_nchw.7
$region0: #{preact_bottleneck_nchw.7}
  #allocation0 [shape = 'u32[]', space=smem, size = 0x4, offset = 0x4, fixed_abs, tag = 'smem constant byte address 0x4 - core index']
  #allocation1 [shape = 'u32[144,128]{1,0:T(1,128)}', space=vmem, size = 0x12000, scoped, tag = 'internal scratch']
  %s0 = inlined_call_operand.vmem [shape: f32[1,32], index: 0, kind: input, shape index: {}]
  %s1 = inlined_call_operand.vmem [shape: f32[1,32], index: 1, kind: input, shape index: {}]
  %s2 = inlined_call_operand.vmem [shape: bf16[1024,32], index: 2, kind: input, shape index: {}]
  %s3 = inlined_call_operand.vmem [shape: bf16[32,128], index: 3, kind: input, shape index: {}]
  %s4 = inlined_call_operand.vmem [shape: f32[1024,128], index: 4, kind: input, shape index: {}]
  %s5 = inlined_call_operand.hbm [shape: f32[1024,128], index: 5, kind: output, shape index: {}]
  %s6 = sld [smem:[#allocation0]]
  $region53: #{preact_bottleneck_nchw.7} parent=0
    _
  %s8 = ssub.s32 1, %s6
  %s9 = scalar_select 0, %s8, %s6
  $region1: #{preact_bottleneck_nchw.7} parent=0
    #allocation2 [shape = 'u8[262144]{0}', space=vmem, size = 0x40000, scoped, tag = 'output window, operand 0']
    #allocation3 [shape = 's32[2]{0}', space=sflag, size = 0x8, scoped, tag = 'scoped memory for preact_bottleneck_nchw.7']
    %10 = vsyncpa [#allocation3], 0
    %s11 = scalar_lea.sflag [#allocation3], 1
    %12 = vsyncpa %s11, 0
    loop: start=0, step=1, limit=6
    $region2: #{preact_bottleneck_nchw.7} parent=1 // loop_pre_header
      _
    $region3: #{preact_bottleneck_nchw.7} parent=1 // loop_header
      %s14 = sphi 0, %s18
      %p15 = scmp.ge.s32.totalorder %s14, 6
      %s22 = sphi 0, %s22
      %s24 = sphi 0, %s22
      %s25 = sphi 0, %s24
      %s39 = sphi 0, %s25
      %s43 = sphi 0, %s43
      %s45 = sphi 0, %s43
      %s46 = sphi 0, %s45
      %s60 = sphi 0, %s46
      %s66 = sphi 0, %s68
      %s69 = sphi 0, %s66
      %s70 = sphi 0, %s69
      %s86 = sphi 0, %s70
      %s90 = sphi 0, %s90
      %s92 = sphi 0, %s90
      %s93 = sphi 0, %s92
      %s107 = sphi 0, %s93
      %s113 = sphi 0, %s115
      %s116 = sphi 0, %s113
      %s117 = sphi 0, %s116
      %s133 = sphi 0, %s117
      %s139 = sphi 0, %s141
      %s142 = sphi 0, %s139
      %s143 = sphi 0, %s142
      %s159 = sphi 0, %s143
    $region4: #{preact_bottleneck_nchw.7} parent=1 // loop_header_branch
      %17 = sbr.rel (%p15) target = $region8
    $region5: #{preact_bottleneck_nchw.7} parent=1 // loop_body
      %s19 = ssub.s32 %s14, 1
      %s20 = ssub.s32 %s14, 2
      %s21 = sadd.s32 %s14, 1
      %s23 = sadd.s32 %s22, 1
      %p26 = scmp.eq.s32.totalorder %s14, 3
      %p27 = scmp.ne.s32.totalorder %s22, %s24
      %p28 = scmp.eq.s32.totalorder %s14, 0
      %p29 = por %p27, %p28
      %p30 = scmp.ne.s32.totalorder %s22, %s24
      %p31 = scmp.eq.s32.totalorder %s19, 3
      %p32 = por %p30, %p31
      %p33 = scmp.ne.s32.totalorder %s24, %s25
      %p34 = scmp.eq.s32.totalorder %s19, 0
      %p35 = por %p33, %p34
      %p36 = scmp.ne.s32.totalorder %s24, %s25
      %p37 = scmp.eq.s32.totalorder %s20, 3
      %p38 = por %p36, %p37
      %p40 = scmp.ne.s32.totalorder %s25, %s39
      %p41 = scmp.eq.s32.totalorder %s20, 0
      %p42 = por %p40, %p41
      %s44 = sadd.s32 %s43, 1
      %p47 = scmp.eq.s32.totalorder %s14, 3
      %p48 = scmp.ne.s32.totalorder %s43, %s45
      %p49 = scmp.eq.s32.totalorder %s14, 0
      %p50 = por %p48, %p49
      %p51 = scmp.ne.s32.totalorder %s43, %s45
      %p52 = scmp.eq.s32.totalorder %s19, 3
      %p53 = por %p51, %p52
      %p54 = scmp.ne.s32.totalorder %s45, %s46
      %p55 = scmp.eq.s32.totalorder %s19, 0
      %p56 = por %p54, %p55
      %p57 = scmp.ne.s32.totalorder %s45, %s46
      %p58 = scmp.eq.s32.totalorder %s20, 3
      %p59 = por %p57, %p58
      %p61 = scmp.ne.s32.totalorder %s46, %s60
      %p62 = scmp.eq.s32.totalorder %s20, 0
      %p63 = por %p61, %p62
      %s64 = ssub.s32 %s14, %s21
      %p65 = scmp.eq.s32.totalorder %s64, 0
      %s67 = sadd.s32 %s66, 1
      %s68 = scalar_select %p65, %s66, %s67
      %p71 = pneg %p65
      %p72 = scmp.eq.s32.totalorder %s14, 3
      %p73 = por %p71, %p72
      %p74 = scmp.ne.s32.totalorder %s66, %s69
      %p75 = scmp.eq.s32.totalorder %s14, 0
      %p76 = por %p74, %p75
      %p77 = scmp.ne.s32.totalorder %s66, %s69
      %p78 = scmp.eq.s32.totalorder %s19, 3
      %p79 = por %p77, %p78
      %p80 = scmp.ne.s32.totalorder %s69, %s70
      %p81 = scmp.eq.s32.totalorder %s19, 0
      %p82 = por %p80, %p81
      %p83 = scmp.ne.s32.totalorder %s69, %s70
      %p84 = scmp.eq.s32.totalorder %s20, 3
      %p85 = por %p83, %p84
      %p87 = scmp.ne.s32.totalorder %s70, %s86
      %p88 = scmp.eq.s32.totalorder %s20, 0
      %p89 = por %p87, %p88
      %s91 = sadd.s32 %s90, 1
      %p94 = scmp.eq.s32.totalorder %s14, 3
      %p95 = scmp.ne.s32.totalorder %s90, %s92
      %p96 = scmp.eq.s32.totalorder %s14, 0
      %p97 = por %p95, %p96
      %p98 = scmp.ne.s32.totalorder %s90, %s92
      %p99 = scmp.eq.s32.totalorder %s19, 3
      %p100 = por %p98, %p99
      %p101 = scmp.ne.s32.totalorder %s92, %s93
      %p102 = scmp.eq.s32.totalorder %s19, 0
      %p103 = por %p101, %p102
      %p104 = scmp.ne.s32.totalorder %s92, %s93
      %p105 = scmp.eq.s32.totalorder %s20, 3
      %p106 = por %p104, %p105
      %p108 = scmp.ne.s32.totalorder %s93, %s107
      %p109 = scmp.eq.s32.totalorder %s20, 0
      %p110 = por %p108, %p109
      %s111 = ssub.s32 %s14, %s21
      %p112 = scmp.eq.s32.totalorder %s111, 0
      %s114 = sadd.s32 %s113, 1
      %s115 = scalar_select %p112, %s113, %s114
      %p118 = pneg %p112
      %p119 = scmp.eq.s32.totalorder %s14, 3
      %p120 = por %p118, %p119
      %p121 = scmp.ne.s32.totalorder %s113, %s116
      %p122 = scmp.eq.s32.totalorder %s14, 0
      %p123 = por %p121, %p122
      %p124 = scmp.ne.s32.totalorder %s113, %s116
      %p125 = scmp.eq.s32.totalorder %s19, 3
      %p126 = por %p124, %p125
      %p127 = scmp.ne.s32.totalorder %s116, %s117
      %p128 = scmp.eq.s32.totalorder %s19, 0
      %p129 = por %p127, %p128
      %p130 = scmp.ne.s32.totalorder %s116, %s117
      %p131 = scmp.eq.s32.totalorder %s20, 3
      %p132 = por %p130, %p131
      %p134 = scmp.ne.s32.totalorder %s117, %s133
      %p135 = scmp.eq.s32.totalorder %s20, 0
      %p136 = por %p134, %p135
      %s137 = ssub.s32 %s14, %s21
      %p138 = scmp.eq.s32.totalorder %s137, 0
      %s140 = sadd.s32 %s139, 1
      %s141 = scalar_select %p138, %s139, %s140
      %p144 = pneg %p138
      %p145 = scmp.eq.s32.totalorder %s14, 3
      %p146 = por %p144, %p145
      %p147 = scmp.ne.s32.totalorder %s139, %s142
      %p148 = scmp.eq.s32.totalorder %s14, 0
      %p149 = por %p147, %p148
      %p150 = scmp.ne.s32.totalorder %s139, %s142
      %p151 = scmp.eq.s32.totalorder %s19, 3
      %p152 = por %p150, %p151
      %p153 = scmp.ne.s32.totalorder %s142, %s143
      %p154 = scmp.eq.s32.totalorder %s19, 0
      %p155 = por %p153, %p154
      %p156 = scmp.ne.s32.totalorder %s142, %s143
      %p157 = scmp.eq.s32.totalorder %s20, 3
      %p158 = por %p156, %p157
      %p160 = scmp.ne.s32.totalorder %s143, %s159
      %p161 = scmp.eq.s32.totalorder %s20, 0
      %p162 = por %p160, %p161
      %p163 = scmp.le.s32.totalorder 1, %s14
      %p164 = scmp.lt.s32.totalorder %s14, 5
      %p165 = pnand %p163, %p164
      %p166 = pneg %p165
      // Predicated region
      $region9: #{preact_bottleneck_nchw.7} parent=5 // pred_check
        _
      $region10: #{preact_bottleneck_nchw.7} parent=5 // pred_check_branch
        %168 = sbr.rel (%p165) target = $region12
      $region11: #{preact_bottleneck_nchw.7} parent=5 // pred_region
        %s169 = ssub.s32 %s14, 1
        // Predicated region
        $region13: #{preact_bottleneck_nchw.7} parent=11 // pred_check
          %p170 = pneg %p35
        $region14: #{preact_bottleneck_nchw.7} parent=11 // pred_check_branch
          %172 = sbr.rel (%p170) target = $region16
        $region15: #{preact_bottleneck_nchw.7} parent=11 // pred_region
          _
        $region16: #{preact_bottleneck_nchw.7} parent=11 // pred_fallthru
          _
        // Predicated region
        $region17: #{preact_bottleneck_nchw.7} parent=11 // pred_check
          %p173 = pneg %p56
        $region18: #{preact_bottleneck_nchw.7} parent=11 // pred_check_branch
          %175 = sbr.rel (%p173) target = $region20
        $region19: #{preact_bottleneck_nchw.7} parent=11 // pred_region
          _
        $region20: #{preact_bottleneck_nchw.7} parent=11 // pred_fallthru
          _
        // Predicated region
        $region21: #{preact_bottleneck_nchw.7} parent=11 // pred_check
          %p176 = pneg %p103
        $region22: #{preact_bottleneck_nchw.7} parent=11 // pred_check_branch
          %178 = sbr.rel (%p176) target = $region24
        $region23: #{preact_bottleneck_nchw.7} parent=11 // pred_region
          _
        $region24: #{preact_bottleneck_nchw.7} parent=11 // pred_fallthru
          _
      $region12: #{preact_bottleneck_nchw.7} parent=5 // pred_fallthru
        _
      %p179 = scmp.lt.s32.totalorder %s14, 4
      // Predicated region
      $region25: #{preact_bottleneck_nchw.7} parent=5 // pred_check
        %p180 = pneg %p179
      $region26: #{preact_bottleneck_nchw.7} parent=5 // pred_check_branch
        %182 = sbr.rel (%p180) target = $region28
      $region27: #{preact_bottleneck_nchw.7} parent=5 // pred_region
        // Predicated region
        $region29: #{preact_bottleneck_nchw.7} parent=27 // pred_check
          %p183 = pneg %p76
        $region30: #{preact_bottleneck_nchw.7} parent=27 // pred_check_branch
          %185 = sbr.rel (%p183) target = $region32
        $region31: #{preact_bottleneck_nchw.7} parent=27 // pred_region
          %s186 = smul.u32 32, %s14
          %p187 = scmp.lt.s32.totalorder %s186, 127
          %s188 = scalar_select %p187, %s186, 127
          %s189 = smul.addr %s188, 4
          %s190 = scalar_lea.vmem %s2, %s189
          %s191 = smul.u32 32, %s14
        $region32: #{preact_bottleneck_nchw.7} parent=27 // pred_fallthru
          _
        // Predicated region
        $region33: #{preact_bottleneck_nchw.7} parent=27 // pred_check
          %p192 = pneg %p123
        $region34: #{preact_bottleneck_nchw.7} parent=27 // pred_check_branch
          %194 = sbr.rel (%p192) target = $region36
        $region35: #{preact_bottleneck_nchw.7} parent=27 // pred_region
          %s195 = smul.u32 32, %s14
          %p196 = scmp.lt.s32.totalorder %s195, 127
          %s197 = scalar_select %p196, %s195, 127
          %s198 = smul.addr %s197, 8
          %s199 = scalar_lea.vmem %s4, %s198
          %s200 = smul.u32 32, %s14
        $region36: #{preact_bottleneck_nchw.7} parent=27 // pred_fallthru
          _
      $region28: #{preact_bottleneck_nchw.7} parent=5 // pred_fallthru
        _
      %p201 = scmp.le.s32.totalorder 1, %s14
      %p202 = scmp.lt.s32.totalorder %s14, 5
      %p203 = pnand %p201, %p202
      %p204 = pneg %p203
      // Predicated region
      $region37: #{preact_bottleneck_nchw.7} parent=5 // pred_check
        _
      $region38: #{preact_bottleneck_nchw.7} parent=5 // pred_check_branch
        %206 = sbr.rel (%p203) target = $region40
      $region39: #{preact_bottleneck_nchw.7} parent=5 // pred_region
        %s207 = ssub.s32 %s14, 1
        %p208 = pneg %p35
        %p209 = pneg %p32
        %p210 = pneg %p56
        %p211 = pneg %p53
        %s212 = smul.u32 32, %s19
        %p213 = scmp.lt.s32.totalorder %s212, 127
        %s214 = scalar_select %p213, %s212, 127
        %s215 = smul.addr %s214, 4
        %s216 = scalar_lea.vmem %s2, %s215
        %p217 = pneg %p82
        %p218 = pneg %p79
        %p219 = pneg %p103
        %p220 = pneg %p100
        %s221 = smul.u32 32, %s19
        %p222 = scmp.lt.s32.totalorder %s221, 127
        %s223 = scalar_select %p222, %s221, 127
        %s224 = smul.addr %s223, 8
        %s225 = scalar_lea.vmem %s4, %s224
        %p226 = pneg %p129
        %p227 = pneg %p126
        %p228 = pneg %p155
        %p229 = pneg %p152
        %s230 = sand.u32 %s142, 1
        %s231 = scalar_lea.sflag [#allocation3], %s230
        %s232 = sand.u32 %s142, 1
        %s233 = smul.addr %s232, 256
        %s234 = scalar_lea.vmem [#allocation2], %s233
        %s235 = smul.u32 32, %s19
        %p236 = scmp.lt.s32.totalorder %s235, 127
        %s237 = scalar_select %p236, %s235, 127
        %s238 = smul.addr %s237, 4
        %s239 = scalar_lea.vmem %s2, %s238
        %s240 = smul.u32 32, %s19
        %s241 = smul.u32 32, %s19
        %p242 = scmp.lt.s32.totalorder %s241, 127
        %s243 = scalar_select %p242, %s241, 127
        %s244 = smul.addr %s243, 8
        %s245 = scalar_lea.vmem %s4, %s244
        %s246 = smul.u32 32, %s19
        %s247 = smul.u32 32, %s19
        %v249 = vld [vmem:[%s239] sm:$0xf]
        %v250 = vld [vmem:[%s239 + $0x4] sm:$0xf]
        %v251 = vld [vmem:[%s239 + $0x8] sm:$0xf]
        %v252 = vld [vmem:[%s239 + $0xc] sm:$0xf]
        %v253 = vld [vmem:[%s239 + $0x10] sm:$0xf]
        %v254 = vld [vmem:[%s239 + $0x14] sm:$0xf]
        %v255 = vld [vmem:[%s239 + $0x18] sm:$0xf]
        %v256 = vld [vmem:[%s239 + $0x1c] sm:$0xf]
        %v257 = vld [vmem:[%s239 + $0x20] sm:$0xf]
        %v258 = vld [vmem:[%s239 + $0x24] sm:$0xf]
        %v259 = vld [vmem:[%s239 + $0x28] sm:$0xf]
        %v260 = vld [vmem:[%s239 + $0x2c] sm:$0xf]
        %v261 = vld [vmem:[%s239 + $0x30] sm:$0xf]
        %v262 = vld [vmem:[%s239 + $0x34] sm:$0xf]
        %v263 = vld [vmem:[%s239 + $0x38] sm:$0xf]
        %v264 = vld [vmem:[%s239 + $0x3c] sm:$0xf]
        %v265 = vld [vmem:[%s239 + $0x40] sm:$0xf]
        %v266 = vld [vmem:[%s239 + $0x44] sm:$0xf]
        %v267 = vld [vmem:[%s239 + $0x48] sm:$0xf]
        %v268 = vld [vmem:[%s239 + $0x4c] sm:$0xf]
        %v269 = vld [vmem:[%s239 + $0x50] sm:$0xf]
        %v270 = vld [vmem:[%s239 + $0x54] sm:$0xf]
        %v271 = vld [vmem:[%s239 + $0x58] sm:$0xf]
        %v272 = vld [vmem:[%s239 + $0x5c] sm:$0xf]
        %v273 = vld [vmem:[%s239 + $0x60] sm:$0xf]
        %v274 = vld [vmem:[%s239 + $0x64] sm:$0xf]
        %v275 = vld [vmem:[%s239 + $0x68] sm:$0xf]
        %v276 = vld [vmem:[%s239 + $0x6c] sm:$0xf]
        %v277 = vld [vmem:[%s239 + $0x70] sm:$0xf]
        %v278 = vld [vmem:[%s239 + $0x74] sm:$0xf]
        %v279 = vld [vmem:[%s239 + $0x78] sm:$0xf]
        %v280 = vld [vmem:[%s239 + $0x7c] sm:$0xf]
        %v281 = vunpack.c.l.bf16 %v249
        %v282 = vunpack.c.l.bf16 %v250
        %v283 = vunpack.c.l.bf16 %v251
        %v284 = vunpack.c.l.bf16 %v252
        %v285 = vunpack.c.l.bf16 %v253
        %v286 = vunpack.c.l.bf16 %v254
        %v287 = vunpack.c.l.bf16 %v255
        %v288 = vunpack.c.l.bf16 %v256
        %v289 = vunpack.c.l.bf16 %v257
        %v290 = vunpack.c.l.bf16 %v258
        %v291 = vunpack.c.l.bf16 %v259
        %v292 = vunpack.c.l.bf16 %v260
        %v293 = vunpack.c.l.bf16 %v261
        %v294 = vunpack.c.l.bf16 %v262
        %v295 = vunpack.c.l.bf16 %v263
        %v296 = vunpack.c.l.bf16 %v264
        %v297 = vunpack.c.l.bf16 %v265
        %v298 = vunpack.c.l.bf16 %v266
        %v299 = vunpack.c.l.bf16 %v267
        %v300 = vunpack.c.l.bf16 %v268
        %v301 = vunpack.c.l.bf16 %v269
        %v302 = vunpack.c.l.bf16 %v270
        %v303 = vunpack.c.l.bf16 %v271
        %v304 = vunpack.c.l.bf16 %v272
        %v305 = vunpack.c.l.bf16 %v273
        %v306 = vunpack.c.l.bf16 %v274
        %v307 = vunpack.c.l.bf16 %v275
        %v308 = vunpack.c.l.bf16 %v276
        %v309 = vunpack.c.l.bf16 %v277
        %v310 = vunpack.c.l.bf16 %v278
        %v311 = vunpack.c.l.bf16 %v279
        %v312 = vunpack.c.l.bf16 %v280
        %v313 = vld [vmem:[%s0] sm:$0x1]
        %v315 = vlaneseq
        %v316 = vshrl.u32 %v315, 7
        %v317 = vsub.s32 0, %v316
        %v318 = vrot.slane %v313, %v317
        %v320 = vmul.f32 %v281, %v318
        %v321 = vmul.f32 %v282, %v318
        %v322 = vmul.f32 %v283, %v318
        %v323 = vmul.f32 %v284, %v318
        %v324 = vmul.f32 %v285, %v318
        %v325 = vmul.f32 %v286, %v318
        %v326 = vmul.f32 %v287, %v318
        %v327 = vmul.f32 %v288, %v318
        %v328 = vmul.f32 %v289, %v318
        %v329 = vmul.f32 %v290, %v318
        %v330 = vmul.f32 %v291, %v318
        %v331 = vmul.f32 %v292, %v318
        %v332 = vmul.f32 %v293, %v318
        %v333 = vmul.f32 %v294, %v318
        %v334 = vmul.f32 %v295, %v318
        %v335 = vmul.f32 %v296, %v318
        %v336 = vmul.f32 %v297, %v318
        %v337 = vmul.f32 %v298, %v318
        %v338 = vmul.f32 %v299, %v318
        %v339 = vmul.f32 %v300, %v318
        %v340 = vmul.f32 %v301, %v318
        %v341 = vmul.f32 %v302, %v318
        %v342 = vmul.f32 %v303, %v318
        %v343 = vmul.f32 %v304, %v318
        %v344 = vmul.f32 %v305, %v318
        %v345 = vmul.f32 %v306, %v318
        %v346 = vmul.f32 %v307, %v318
        %v347 = vmul.f32 %v308, %v318
        %v348 = vmul.f32 %v309, %v318
        %v349 = vmul.f32 %v310, %v318
        %v350 = vmul.f32 %v311, %v318
        %v351 = vmul.f32 %v312, %v318
        %v352 = vld [vmem:[%s1] sm:$0x1]
        %v354 = vlaneseq
        %v355 = vshrl.u32 %v354, 7
        %v356 = vsub.s32 0, %v355
        %v357 = vrot.slane %v352, %v356
        %v359 = vadd.f32 %v320, %v357
        %v360 = vadd.f32 %v321, %v357
        %v361 = vadd.f32 %v322, %v357
        %v362 = vadd.f32 %v323, %v357
        %v363 = vadd.f32 %v324, %v357
        %v364 = vadd.f32 %v325, %v357
        %v365 = vadd.f32 %v326, %v357
        %v366 = vadd.f32 %v327, %v357
        %v367 = vadd.f32 %v328, %v357
        %v368 = vadd.f32 %v329, %v357
        %v369 = vadd.f32 %v330, %v357
        %v370 = vadd.f32 %v331, %v357
        %v371 = vadd.f32 %v332, %v357
        %v372 = vadd.f32 %v333, %v357
        %v373 = vadd.f32 %v334, %v357
        %v374 = vadd.f32 %v335, %v357
        %v375 = vadd.f32 %v336, %v357
        %v376 = vadd.f32 %v337, %v357
        %v377 = vadd.f32 %v338, %v357
        %v378 = vadd.f32 %v339, %v357
        %v379 = vadd.f32 %v340, %v357
        %v380 = vadd.f32 %v341, %v357
        %v381 = vadd.f32 %v342, %v357
        %v382 = vadd.f32 %v343, %v357
        %v383 = vadd.f32 %v344, %v357
        %v384 = vadd.f32 %v345, %v357
        %v385 = vadd.f32 %v346, %v357
        %v386 = vadd.f32 %v347, %v357
        %v387 = vadd.f32 %v348, %v357
        %v388 = vadd.f32 %v349, %v357
        %v389 = vadd.f32 %v350, %v357
        %v390 = vadd.f32 %v351, %v357
        %v391 = vmax.f32 %v359, 0.0
        %v392 = vmax.f32 %v360, 0.0
        %v393 = vmax.f32 %v361, 0.0
        %v394 = vmax.f32 %v362, 0.0
        %v395 = vmax.f32 %v363, 0.0
        %v396 = vmax.f32 %v364, 0.0
        %v397 = vmax.f32 %v365, 0.0
        %v398 = vmax.f32 %v366, 0.0
        %v399 = vmax.f32 %v367, 0.0
        %v400 = vmax.f32 %v368, 0.0
        %v401 = vmax.f32 %v369, 0.0
        %v402 = vmax.f32 %v370, 0.0
        %v403 = vmax.f32 %v371, 0.0
        %v404 = vmax.f32 %v372, 0.0
        %v405 = vmax.f32 %v373, 0.0
        %v406 = vmax.f32 %v374, 0.0
        %v407 = vmax.f32 %v375, 0.0
        %v408 = vmax.f32 %v376, 0.0
        %v409 = vmax.f32 %v377, 0.0
        %v410 = vmax.f32 %v378, 0.0
        %v411 = vmax.f32 %v379, 0.0
        %v412 = vmax.f32 %v380, 0.0
        %v413 = vmax.f32 %v381, 0.0
        %v414 = vmax.f32 %v382, 0.0
        %v415 = vmax.f32 %v383, 0.0
        %v416 = vmax.f32 %v384, 0.0
        %v417 = vmax.f32 %v385, 0.0
        %v418 = vmax.f32 %v386, 0.0
        %v419 = vmax.f32 %v387, 0.0
        %v420 = vmax.f32 %v388, 0.0
        %v421 = vmax.f32 %v389, 0.0
        %v422 = vmax.f32 %v390, 0.0
        %v423 = vpack.c.bf16 %v392, %v391
        %v424 = vpack.c.bf16 %v394, %v393
        %v425 = vpack.c.bf16 %v396, %v395
        %v426 = vpack.c.bf16 %v398, %v397
        %v427 = vpack.c.bf16 %v400, %v399
        %v428 = vpack.c.bf16 %v402, %v401
        %v429 = vpack.c.bf16 %v404, %v403
        %v430 = vpack.c.bf16 %v406, %v405
        %v431 = vpack.c.bf16 %v408, %v407
        %v432 = vpack.c.bf16 %v410, %v409
        %v433 = vpack.c.bf16 %v412, %v411
        %v434 = vpack.c.bf16 %v414, %v413
        %v435 = vpack.c.bf16 %v416, %v415
        %v436 = vpack.c.bf16 %v418, %v417
        %v437 = vpack.c.bf16 %v420, %v419
        %v438 = vpack.c.bf16 %v422, %v421
        %v439 = vld [vmem:[%s3] sm:$0xf]
        %v440 = vld [vmem:[%s3 + $0x4] sm:$0xf]
        %v441 = vld [vmem:[%s3 + $0x8] sm:$0xf]
        %v442 = vld [vmem:[%s3 + $0xc] sm:$0xf]
        %v443 = vld [vmem:[%s245] sm:$0xff]
        %v444 = vld [vmem:[%s245 + $0x8] sm:$0xff]
        %v445 = vld [vmem:[%s245 + $0x10] sm:$0xff]
        %v446 = vld [vmem:[%s245 + $0x18] sm:$0xff]
        %v447 = vld [vmem:[%s245 + $0x20] sm:$0xff]
        %v448 = vld [vmem:[%s245 + $0x28] sm:$0xff]
        %v449 = vld [vmem:[%s245 + $0x30] sm:$0xff]
        %v450 = vld [vmem:[%s245 + $0x38] sm:$0xff]
        %v451 = vld [vmem:[%s245 + $0x40] sm:$0xff]
        %v452 = vld [vmem:[%s245 + $0x48] sm:$0xff]
        %v453 = vld [vmem:[%s245 + $0x50] sm:$0xff]
        %v454 = vld [vmem:[%s245 + $0x58] sm:$0xff]
        %v455 = vld [vmem:[%s245 + $0x60] sm:$0xff]
        %v456 = vld [vmem:[%s245 + $0x68] sm:$0xff]
        %v457 = vld [vmem:[%s245 + $0x70] sm:$0xff]
        %v458 = vld [vmem:[%s245 + $0x78] sm:$0xff]
        %v459 = vld [vmem:[%s245 + $0x80] sm:$0xff]
        %v460 = vld [vmem:[%s245 + $0x88] sm:$0xff]
        %v461 = vld [vmem:[%s245 + $0x90] sm:$0xff]
        %v462 = vld [vmem:[%s245 + $0x98] sm:$0xff]
        %v463 = vld [vmem:[%s245 + $0xa0] sm:$0xff]
        %v464 = vld [vmem:[%s245 + $0xa8] sm:$0xff]
        %v465 = vld [vmem:[%s245 + $0xb0] sm:$0xff]
        %v466 = vld [vmem:[%s245 + $0xb8] sm:$0xff]
        %v467 = vld [vmem:[%s245 + $0xc0] sm:$0xff]
        %v468 = vld [vmem:[%s245 + $0xc8] sm:$0xff]
        %v469 = vld [vmem:[%s245 + $0xd0] sm:$0xff]
        %v470 = vld [vmem:[%s245 + $0xd8] sm:$0xff]
        %v471 = vld [vmem:[%s245 + $0xe0] sm:$0xff]
        %v472 = vld [vmem:[%s245 + $0xe8] sm:$0xff]
        %v473 = vld [vmem:[%s245 + $0xf0] sm:$0xff]
        %v474 = vld [vmem:[%s245 + $0xf8] sm:$0xff]
        %v479 = vunpack.c.l.b16 %v439
        %v480 = vunpack.c.l.b16 %v440
        %v481 = vunpack.c.l.b16 %v441
        %v482 = vunpack.c.l.b16 %v442
        %v483 = vpack.c.b16 %v480, %v479
        %v484 = vpack.c.b16 %v482, %v481
        %vm487 = vcmask 261120
        %v489 = vsel %vm487, %v423, 0
        %v492 = vsel %vm487, %v424, 0
        %v495 = vsel %vm487, %v425, 0
        %v498 = vsel %vm487, %v426, 0
        %v501 = vsel %vm487, %v427, 0
        %v504 = vsel %vm487, %v428, 0
        %v507 = vsel %vm487, %v429, 0
        %v510 = vsel %vm487, %v430, 0
        %v513 = vsel %vm487, %v431, 0
        %v516 = vsel %vm487, %v432, 0
        %v519 = vsel %vm487, %v433, 0
        %v522 = vsel %vm487, %v434, 0
        %v525 = vsel %vm487, %v435, 0
        %v528 = vsel %vm487, %v436, 0
        %v531 = vsel %vm487, %v437, 0
        %v534 = vsel %vm487, %v438, 0
        %536 = vmatprep.subr.bf16.mxu0 0
        %537 = vmatpush1.bf16.msra.mxu0 0
        %538 = vmatprep.subr.bf16.mxu0 0
        %539 = vmatpush1.bf16.msra.mxu0 0
        %540 = vmatprep.subr.bf16.mxu0 0
        %541 = vmatpush1.bf16.msra.mxu0 0
        %542 = vmatprep.subr.bf16.mxu0 0
        %543 = vmatpush1.bf16.msra.mxu0 0
        %544 = vmatprep.subr.bf16.mxu0 0
        %545 = vmatpush1.bf16.msra.mxu0 0
        %546 = vmatprep.subr.bf16.mxu0 0
        %547 = vmatpush1.bf16.msra.mxu0 0
        %548 = vmatprep.subr.bf16.mxu0 0
        %549 = vmatpush1.bf16.msra.mxu0 %v484
        %550 = vmatprep.subr.bf16.mxu0 0
        %551 = vmatpush1.bf16.msra.mxu0 %v483
        %552 = vmatprep.subr.bf16.mxu0 0
        %553 = vmatpush2.bf16.msra.mxu0 0
        %554 = vmatprep.subr.bf16.mxu0 0
        %555 = vmatpush2.bf16.msra.mxu0 0
        %556 = vmatprep.subr.bf16.mxu0 0
        %557 = vmatpush2.bf16.msra.mxu0 0
        %558 = vmatprep.subr.bf16.mxu0 0
        %559 = vmatpush2.bf16.msra.mxu0 0
        %560 = vmatprep.subr.bf16.mxu0 0
        %561 = vmatpush2.bf16.msra.mxu0 0
        %562 = vmatprep.subr.bf16.mxu0 0
        %563 = vmatpush2.bf16.msra.mxu0 0
        %564 = vmatprep.subr.bf16.mxu0 0
        %565 = vmatpush2.bf16.msra.mxu0 0
        %566 = vmatprep.subr.bf16.mxu0 0
        %567 = vmatpush2.bf16.msra.mxu0 0
        %568 = vmatprep.mubr.bf16.mxu0 0
        %569 = vmatmul.mubr.bf16.gmra.mxu0 %v489
        %v570 = vpop.f32.mrf.mxu0
        %v571 = vadd.f32 %v443, %v570
        %v572 = vpop.f32.mrf.mxu0
        %v573 = vpop.f32.mrf.mxu0
        %v574 = vadd.f32 %v444, %v573
        %v575 = vpop.f32.mrf.mxu0
        %576 = vmatprep.mubr.bf16.mxu0 0
        %577 = vmatmul.mubr.bf16.gmra.mxu0 %v492
        %v578 = vpop.f32.mrf.mxu0
        %v579 = vadd.f32 %v445, %v578
        %v580 = vpop.f32.mrf.mxu0
        %v581 = vpop.f32.mrf.mxu0
        %v582 = vadd.f32 %v446, %v581
        %v583 = vpop.f32.mrf.mxu0
        %584 = vmatprep.mubr.bf16.mxu0 0
        %585 = vmatmul.mubr.bf16.gmra.mxu0 %v495
        %v586 = vpop.f32.mrf.mxu0
        %v587 = vadd.f32 %v447, %v586
        %v588 = vpop.f32.mrf.mxu0
        %v589 = vpop.f32.mrf.mxu0
        %v590 = vadd.f32 %v448, %v589
        %v591 = vpop.f32.mrf.mxu0
        %592 = vmatprep.mubr.bf16.mxu0 0
        %593 = vmatmul.mubr.bf16.gmra.mxu0 %v498
        %v594 = vpop.f32.mrf.mxu0
        %v595 = vadd.f32 %v449, %v594
        %v596 = vpop.f32.mrf.mxu0
        %v597 = vpop.f32.mrf.mxu0
        %v598 = vadd.f32 %v450, %v597
        %v599 = vpop.f32.mrf.mxu0
        %600 = vmatprep.mubr.bf16.mxu0 0
        %601 = vmatmul.mubr.bf16.gmra.mxu0 %v501
        %v602 = vpop.f32.mrf.mxu0
        %v603 = vadd.f32 %v451, %v602
        %v604 = vpop.f32.mrf.mxu0
        %v605 = vpop.f32.mrf.mxu0
        %v606 = vadd.f32 %v452, %v605
        %v607 = vpop.f32.mrf.mxu0
        %608 = vmatprep.mubr.bf16.mxu0 0
        %609 = vmatmul.mubr.bf16.gmra.mxu0 %v504
        %v610 = vpop.f32.mrf.mxu0
        %v611 = vadd.f32 %v453, %v610
        %v612 = vpop.f32.mrf.mxu0
        %v613 = vpop.f32.mrf.mxu0
        %v614 = vadd.f32 %v454, %v613
        %v615 = vpop.f32.mrf.mxu0
        %616 = vmatprep.mubr.bf16.mxu0 0
        %617 = vmatmul.mubr.bf16.gmra.mxu0 %v507
        %v618 = vpop.f32.mrf.mxu0
        %v619 = vadd.f32 %v455, %v618
        %v620 = vpop.f32.mrf.mxu0
        %v621 = vpop.f32.mrf.mxu0
        %v622 = vadd.f32 %v456, %v621
        %v623 = vpop.f32.mrf.mxu0
        %624 = vmatprep.mubr.bf16.mxu0 0
        %625 = vmatmul.mubr.bf16.gmra.mxu0 %v510
        %v626 = vpop.f32.mrf.mxu0
        %v627 = vadd.f32 %v457, %v626
        %v628 = vpop.f32.mrf.mxu0
        %v629 = vpop.f32.mrf.mxu0
        %v630 = vadd.f32 %v458, %v629
        %v631 = vpop.f32.mrf.mxu0
        %632 = vmatprep.mubr.bf16.mxu0 0
        %633 = vmatmul.mubr.bf16.gmra.mxu0 %v513
        %v634 = vpop.f32.mrf.mxu0
        %v635 = vadd.f32 %v459, %v634
        %v636 = vpop.f32.mrf.mxu0
        %v637 = vpop.f32.mrf.mxu0
        %v638 = vadd.f32 %v460, %v637
        %v639 = vpop.f32.mrf.mxu0
        %640 = vmatprep.mubr.bf16.mxu0 0
        %641 = vmatmul.mubr.bf16.gmra.mxu0 %v516
        %v642 = vpop.f32.mrf.mxu0
        %v643 = vadd.f32 %v461, %v642
        %v644 = vpop.f32.mrf.mxu0
        %v645 = vpop.f32.mrf.mxu0
        %v646 = vadd.f32 %v462, %v645
        %v647 = vpop.f32.mrf.mxu0
        %648 = vmatprep.mubr.bf16.mxu0 0
        %649 = vmatmul.mubr.bf16.gmra.mxu0 %v519
        %v650 = vpop.f32.mrf.mxu0
        %v651 = vadd.f32 %v463, %v650
        %v652 = vpop.f32.mrf.mxu0
        %v653 = vpop.f32.mrf.mxu0
        %v654 = vadd.f32 %v464, %v653
        %v655 = vpop.f32.mrf.mxu0
        %656 = vmatprep.mubr.bf16.mxu0 0
        %657 = vmatmul.mubr.bf16.gmra.mxu0 %v522
        %v658 = vpop.f32.mrf.mxu0
        %v659 = vadd.f32 %v465, %v658
        %v660 = vpop.f32.mrf.mxu0
        %v661 = vpop.f32.mrf.mxu0
        %v662 = vadd.f32 %v466, %v661
        %v663 = vpop.f32.mrf.mxu0
        %664 = vmatprep.mubr.bf16.mxu0 0
        %665 = vmatmul.mubr.bf16.gmra.mxu0 %v525
        %v666 = vpop.f32.mrf.mxu0
        %v667 = vadd.f32 %v467, %v666
        %v668 = vpop.f32.mrf.mxu0
        %v669 = vpop.f32.mrf.mxu0
        %v670 = vadd.f32 %v468, %v669
        %v671 = vpop.f32.mrf.mxu0
        %672 = vmatprep.mubr.bf16.mxu0 0
        %673 = vmatmul.mubr.bf16.gmra.mxu0 %v528
        %v674 = vpop.f32.mrf.mxu0
        %v675 = vadd.f32 %v469, %v674
        %v676 = vpop.f32.mrf.mxu0
        %v677 = vpop.f32.mrf.mxu0
        %v678 = vadd.f32 %v470, %v677
        %v679 = vpop.f32.mrf.mxu0
        %680 = vmatprep.mubr.bf16.mxu0 0
        %681 = vmatmul.mubr.bf16.gmra.mxu0 %v531
        %v682 = vpop.f32.mrf.mxu0
        %v683 = vadd.f32 %v471, %v682
        %v684 = vpop.f32.mrf.mxu0
        %v685 = vpop.f32.mrf.mxu0
        %v686 = vadd.f32 %v472, %v685
        %v687 = vpop.f32.mrf.mxu0
        %688 = vmatprep.mubr.bf16.mxu0 0
        %689 = vmatmul.mubr.bf16.gmra.mxu0 %v534
        %v690 = vpop.f32.mrf.mxu0
        %v691 = vadd.f32 %v473, %v690
        %v692 = vpop.f32.mrf.mxu0
        %v693 = vpop.f32.mrf.mxu0
        %v694 = vadd.f32 %v474, %v693
        %v695 = vpop.f32.mrf.mxu0
        %696 = vdwg.mxu0
        %697 = vst [vmem:[%s234] sm:$0xff] %v571
        %698 = vst [vmem:[%s234 + $0x8] sm:$0xff] %v574
        %699 = vst [vmem:[%s234 + $0x10] sm:$0xff] %v579
        %700 = vst [vmem:[%s234 + $0x18] sm:$0xff] %v582
        %701 = vst [vmem:[%s234 + $0x20] sm:$0xff] %v587
        %702 = vst [vmem:[%s234 + $0x28] sm:$0xff] %v590
        %703 = vst [vmem:[%s234 + $0x30] sm:$0xff] %v595
        %704 = vst [vmem:[%s234 + $0x38] sm:$0xff] %v598
        %705 = vst [vmem:[%s234 + $0x40] sm:$0xff] %v603
        %706 = vst [vmem:[%s234 + $0x48] sm:$0xff] %v606
        %707 = vst [vmem:[%s234 + $0x50] sm:$0xff] %v611
        %708 = vst [vmem:[%s234 + $0x58] sm:$0xff] %v614
        %709 = vst [vmem:[%s234 + $0x60] sm:$0xff] %v619
        %710 = vst [vmem:[%s234 + $0x68] sm:$0xff] %v622
        %711 = vst [vmem:[%s234 + $0x70] sm:$0xff] %v627
        %712 = vst [vmem:[%s234 + $0x78] sm:$0xff] %v630
        %713 = vst [vmem:[%s234 + $0x80] sm:$0xff] %v635
        %714 = vst [vmem:[%s234 + $0x88] sm:$0xff] %v638
        %715 = vst [vmem:[%s234 + $0x90] sm:$0xff] %v643
        %716 = vst [vmem:[%s234 + $0x98] sm:$0xff] %v646
        %717 = vst [vmem:[%s234 + $0xa0] sm:$0xff] %v651
        %718 = vst [vmem:[%s234 + $0xa8] sm:$0xff] %v654
        %719 = vst [vmem:[%s234 + $0xb0] sm:$0xff] %v659
        %720 = vst [vmem:[%s234 + $0xb8] sm:$0xff] %v662
        %721 = vst [vmem:[%s234 + $0xc0] sm:$0xff] %v667
        %722 = vst [vmem:[%s234 + $0xc8] sm:$0xff] %v670
        %723 = vst [vmem:[%s234 + $0xd0] sm:$0xff] %v675
        %724 = vst [vmem:[%s234 + $0xd8] sm:$0xff] %v678
        %725 = vst [vmem:[%s234 + $0xe0] sm:$0xff] %v683
        %726 = vst [vmem:[%s234 + $0xe8] sm:$0xff] %v686
        %727 = vst [vmem:[%s234 + $0xf0] sm:$0xff] %v691
        %728 = vst [vmem:[%s234 + $0xf8] sm:$0xff] %v694
        %s729 = sand.u32 %s142, 1
        %s730 = scalar_lea.sflag [#allocation3], %s729
        %s731 = sand.u32 %s142, 1
        %s732 = smul.addr %s731, 256
        %s733 = scalar_lea.vmem [#allocation2], %s732
        // Predicated region
        $region41: #{preact_bottleneck_nchw.7} parent=39 // pred_check
          %p734 = pneg %p152
        $region42: #{preact_bottleneck_nchw.7} parent=39 // pred_check_branch
          %736 = sbr.rel (%p734) target = $region44
        $region43: #{preact_bottleneck_nchw.7} parent=39 // pred_region
          %s737 = smul.u32 32, %s19
          %s739 = ssub.s32 4096, 4096
          %740 = vsyncadd %s730, %s739
          %s741 = smul.addr %s737, 128
          %s742 = scalar_lea.hbm %s5, %s741
          %s743 = sshll.u32 %s733, 4
          %s744 = int_to_ptr.vmem [resolvable:$true] %s743
          %749 = dma.vmem_to_hbm [thread:$0]  %s744, 4096, %s742, %s730, 128, 128, 8
        $region44: #{preact_bottleneck_nchw.7} parent=39 // pred_fallthru
          _
      $region40: #{preact_bottleneck_nchw.7} parent=5 // pred_fallthru
        _
      %p750 = scmp.le.s32.totalorder 2, %s14
      // Predicated region
      $region45: #{preact_bottleneck_nchw.7} parent=5 // pred_check
        %p751 = pneg %p750
      $region46: #{preact_bottleneck_nchw.7} parent=5 // pred_check_branch
        %753 = sbr.rel (%p751) target = $region48
      $region47: #{preact_bottleneck_nchw.7} parent=5 // pred_region
        %s754 = ssub.s32 %s14, 2
        // Predicated region
        $region49: #{preact_bottleneck_nchw.7} parent=47 // pred_check
          %p755 = pneg %p158
        $region50: #{preact_bottleneck_nchw.7} parent=47 // pred_check_branch
          %757 = sbr.rel (%p755) target = $region52
        $region51: #{preact_bottleneck_nchw.7} parent=47 // pred_region
          %s758 = sand.u32 %s143, 1
          %s759 = scalar_lea.sflag [#allocation3], %s758
          %s760 = sand.u32 %s143, 1
          %s761 = smul.addr %s760, 256
          %s762 = scalar_lea.vmem [#allocation2], %s761
          %763 = dma.done %s759, 4096
        $region52: #{preact_bottleneck_nchw.7} parent=47 // pred_fallthru
          _
      $region48: #{preact_bottleneck_nchw.7} parent=5 // pred_fallthru
        _
    $region6: #{preact_bottleneck_nchw.7} parent=1 // loop_footer
      %s18 = sadd.s32 1, %s14
    $region7: #{preact_bottleneck_nchw.7} parent=1 // loop_footer_branch
      %13 = sbr.rel target = $region3
    $region8: #{preact_bottleneck_nchw.7} parent=1 // loop_exit
      _
    %764 = vsyncpa [#allocation3], 1
    %s765 = scalar_lea.sflag [#allocation3], 1
    %766 = vsyncpa %s765, 1

// kernel: preact_bottleneck_nchw.6
$region0: #{preact_bottleneck_nchw.6}
  #allocation0 [shape = 'u32[]', space=smem, size = 0x4, offset = 0x4, fixed_abs, tag = 'smem constant byte address 0x4 - core index']
  #allocation1 [shape = 'u32[144,128]{1,0:T(1,128)}', space=vmem, size = 0x12000, scoped, tag = 'internal scratch']
  #allocation2 [shape = 'bf16[18,18,32]{2,1,0:T(8,128)(2,1)}', space=vmem, size = 0x1b000, scoped, tag = 'scratch operand']
  %s0 = inlined_call_operand.vmem [shape: f32[1,32], index: 0, kind: input, shape index: {}]
  %s1 = inlined_call_operand.vmem [shape: f32[1,32], index: 1, kind: input, shape index: {}]
  %s2 = inlined_call_operand.vmem [shape: bf16[4,16,16,32], index: 2, kind: input, shape index: {}]
  %s3 = inlined_call_operand.vmem [shape: bf16[288,32], index: 3, kind: input, shape index: {}]
  %s4 = inlined_call_operand.vmem [shape: bf16[4,16,16,32], index: 4, kind: output, shape index: {0}]
  %s5 = inlined_call_operand.vmem [shape: f32[4,1,32], index: 5, kind: output, shape index: {1}]
  %s6 = inlined_call_operand.vmem [shape: f32[4,1,32], index: 6, kind: output, shape index: {2}]
  %7 = xla_tuple %s4, %s5, %s6
  %s8 = sld [smem:[#allocation0]]
  $region65: #{preact_bottleneck_nchw.6} parent=0
    _
  %s10 = ssub.s32 1, %s8
  %s11 = scalar_select 0, %s10, %s8
  loop: start=0, step=1, limit=6
  $region2: #{preact_bottleneck_nchw.6} parent=0 // loop_pre_header
    _
  $region3: #{preact_bottleneck_nchw.6} parent=0 // loop_header
    %s13 = sphi 0, %s17
    %p14 = scmp.ge.s32.totalorder %s13, 6
    %s21 = sphi 0, %s21
    %s23 = sphi 0, %s21
    %s24 = sphi 0, %s23
    %s38 = sphi 0, %s24
    %s42 = sphi 0, %s42
    %s44 = sphi 0, %s42
    %s45 = sphi 0, %s44
    %s59 = sphi 0, %s45
    %s65 = sphi 0, %s67
    %s68 = sphi 0, %s65
    %s69 = sphi 0, %s68
    %s85 = sphi 0, %s69
    %s89 = sphi 0, %s89
    %s91 = sphi 0, %s89
    %s92 = sphi 0, %s91
    %s106 = sphi 0, %s92
    %s112 = sphi 0, %s114
    %s115 = sphi 0, %s112
    %s116 = sphi 0, %s115
    %s132 = sphi 0, %s116
    %s138 = sphi 0, %s140
    %s141 = sphi 0, %s138
    %s142 = sphi 0, %s141
    %s158 = sphi 0, %s142
    %s164 = sphi 0, %s166
    %s167 = sphi 0, %s164
    %s168 = sphi 0, %s167
    %s184 = sphi 0, %s168
  $region4: #{preact_bottleneck_nchw.6} parent=0 // loop_header_branch
    %16 = sbr.rel (%p14) target = $region8
  $region5: #{preact_bottleneck_nchw.6} parent=0 // loop_body
    %s18 = ssub.s32 %s13, 1
    %s19 = ssub.s32 %s13, 2
    %s20 = sadd.s32 %s13, 1
    %s22 = sadd.s32 %s21, 1
    %p25 = scmp.eq.s32.totalorder %s13, 3
    %p26 = scmp.ne.s32.totalorder %s21, %s23
    %p27 = scmp.eq.s32.totalorder %s13, 0
    %p28 = por %p26, %p27
    %p29 = scmp.ne.s32.totalorder %s21, %s23
    %p30 = scmp.eq.s32.totalorder %s18, 3
    %p31 = por %p29, %p30
    %p32 = scmp.ne.s32.totalorder %s23, %s24
    %p33 = scmp.eq.s32.totalorder %s18, 0
    %p34 = por %p32, %p33
    %p35 = scmp.ne.s32.totalorder %s23, %s24
    %p36 = scmp.eq.s32.totalorder %s19, 3
    %p37 = por %p35, %p36
    %p39 = scmp.ne.s32.totalorder %s24, %s38
    %p40 = scmp.eq.s32.totalorder %s19, 0
    %p41 = por %p39, %p40
    %s43 = sadd.s32 %s42, 1
    %p46 = scmp.eq.s32.totalorder %s13, 3
    %p47 = scmp.ne.s32.totalorder %s42, %s44
    %p48 = scmp.eq.s32.totalorder %s13, 0
    %p49 = por %p47, %p48
    %p50 = scmp.ne.s32.totalorder %s42, %s44
    %p51 = scmp.eq.s32.totalorder %s18, 3
    %p52 = por %p50, %p51
    %p53 = scmp.ne.s32.totalorder %s44, %s45
    %p54 = scmp.eq.s32.totalorder %s18, 0
    %p55 = por %p53, %p54
    %p56 = scmp.ne.s32.totalorder %s44, %s45
    %p57 = scmp.eq.s32.totalorder %s19, 3
    %p58 = por %p56, %p57
    %p60 = scmp.ne.s32.totalorder %s45, %s59
    %p61 = scmp.eq.s32.totalorder %s19, 0
    %p62 = por %p60, %p61
    %s63 = ssub.s32 %s13, %s20
    %p64 = scmp.eq.s32.totalorder %s63, 0
    %s66 = sadd.s32 %s65, 1
    %s67 = scalar_select %p64, %s65, %s66
    %p70 = pneg %p64
    %p71 = scmp.eq.s32.totalorder %s13, 3
    %p72 = por %p70, %p71
    %p73 = scmp.ne.s32.totalorder %s65, %s68
    %p74 = scmp.eq.s32.totalorder %s13, 0
    %p75 = por %p73, %p74
    %p76 = scmp.ne.s32.totalorder %s65, %s68
    %p77 = scmp.eq.s32.totalorder %s18, 3
    %p78 = por %p76, %p77
    %p79 = scmp.ne.s32.totalorder %s68, %s69
    %p80 = scmp.eq.s32.totalorder %s18, 0
    %p81 = por %p79, %p80
    %p82 = scmp.ne.s32.totalorder %s68, %s69
    %p83 = scmp.eq.s32.totalorder %s19, 3
    %p84 = por %p82, %p83
    %p86 = scmp.ne.s32.totalorder %s69, %s85
    %p87 = scmp.eq.s32.totalorder %s19, 0
    %p88 = por %p86, %p87
    %s90 = sadd.s32 %s89, 1
    %p93 = scmp.eq.s32.totalorder %s13, 3
    %p94 = scmp.ne.s32.totalorder %s89, %s91
    %p95 = scmp.eq.s32.totalorder %s13, 0
    %p96 = por %p94, %p95
    %p97 = scmp.ne.s32.totalorder %s89, %s91
    %p98 = scmp.eq.s32.totalorder %s18, 3
    %p99 = por %p97, %p98
    %p100 = scmp.ne.s32.totalorder %s91, %s92
    %p101 = scmp.eq.s32.totalorder %s18, 0
    %p102 = por %p100, %p101
    %p103 = scmp.ne.s32.totalorder %s91, %s92
    %p104 = scmp.eq.s32.totalorder %s19, 3
    %p105 = por %p103, %p104
    %p107 = scmp.ne.s32.totalorder %s92, %s106
    %p108 = scmp.eq.s32.totalorder %s19, 0
    %p109 = por %p107, %p108
    %s110 = ssub.s32 %s13, %s20
    %p111 = scmp.eq.s32.totalorder %s110, 0
    %s113 = sadd.s32 %s112, 1
    %s114 = scalar_select %p111, %s112, %s113
    %p117 = pneg %p111
    %p118 = scmp.eq.s32.totalorder %s13, 3
    %p119 = por %p117, %p118
    %p120 = scmp.ne.s32.totalorder %s112, %s115
    %p121 = scmp.eq.s32.totalorder %s13, 0
    %p122 = por %p120, %p121
    %p123 = scmp.ne.s32.totalorder %s112, %s115
    %p124 = scmp.eq.s32.totalorder %s18, 3
    %p125 = por %p123, %p124
    %p126 = scmp.ne.s32.totalorder %s115, %s116
    %p127 = scmp.eq.s32.totalorder %s18, 0
    %p128 = por %p126, %p127
    %p129 = scmp.ne.s32.totalorder %s115, %s116
    %p130 = scmp.eq.s32.totalorder %s19, 3
    %p131 = por %p129, %p130
    %p133 = scmp.ne.s32.totalorder %s116, %s132
    %p134 = scmp.eq.s32.totalorder %s19, 0
    %p135 = por %p133, %p134
    %s136 = ssub.s32 %s13, %s20
    %p137 = scmp.eq.s32.totalorder %s136, 0
    %s139 = sadd.s32 %s138, 1
    %s140 = scalar_select %p137, %s138, %s139
    %p143 = pneg %p137
    %p144 = scmp.eq.s32.totalorder %s13, 3
    %p145 = por %p143, %p144
    %p146 = scmp.ne.s32.totalorder %s138, %s141
    %p147 = scmp.eq.s32.totalorder %s13, 0
    %p148 = por %p146, %p147
    %p149 = scmp.ne.s32.totalorder %s138, %s141
    %p150 = scmp.eq.s32.totalorder %s18, 3
    %p151 = por %p149, %p150
    %p152 = scmp.ne.s32.totalorder %s141, %s142
    %p153 = scmp.eq.s32.totalorder %s18, 0
    %p154 = por %p152, %p153
    %p155 = scmp.ne.s32.totalorder %s141, %s142
    %p156 = scmp.eq.s32.totalorder %s19, 3
    %p157 = por %p155, %p156
    %p159 = scmp.ne.s32.totalorder %s142, %s158
    %p160 = scmp.eq.s32.totalorder %s19, 0
    %p161 = por %p159, %p160
    %s162 = ssub.s32 %s13, %s20
    %p163 = scmp.eq.s32.totalorder %s162, 0
    %s165 = sadd.s32 %s164, 1
    %s166 = scalar_select %p163, %s164, %s165
    %p169 = pneg %p163
    %p170 = scmp.eq.s32.totalorder %s13, 3
    %p171 = por %p169, %p170
    %p172 = scmp.ne.s32.totalorder %s164, %s167
    %p173 = scmp.eq.s32.totalorder %s13, 0
    %p174 = por %p172, %p173
    %p175 = scmp.ne.s32.totalorder %s164, %s167
    %p176 = scmp.eq.s32.totalorder %s18, 3
    %p177 = por %p175, %p176
    %p178 = scmp.ne.s32.totalorder %s167, %s168
    %p179 = scmp.eq.s32.totalorder %s18, 0
    %p180 = por %p178, %p179
    %p181 = scmp.ne.s32.totalorder %s167, %s168
    %p182 = scmp.eq.s32.totalorder %s19, 3
    %p183 = por %p181, %p182
    %p185 = scmp.ne.s32.totalorder %s168, %s184
    %p186 = scmp.eq.s32.totalorder %s19, 0
    %p187 = por %p185, %p186
    %p188 = scmp.le.s32.totalorder 1, %s13
    %p189 = scmp.lt.s32.totalorder %s13, 5
    %p190 = pnand %p188, %p189
    %p191 = pneg %p190
    // Predicated region
    $region9: #{preact_bottleneck_nchw.6} parent=5 // pred_check
      _
    $region10: #{preact_bottleneck_nchw.6} parent=5 // pred_check_branch
      %193 = sbr.rel (%p190) target = $region12
    $region11: #{preact_bottleneck_nchw.6} parent=5 // pred_region
      %s194 = ssub.s32 %s13, 1
      // Predicated region
      $region13: #{preact_bottleneck_nchw.6} parent=11 // pred_check
        %p195 = pneg %p34
      $region14: #{preact_bottleneck_nchw.6} parent=11 // pred_check_branch
        %197 = sbr.rel (%p195) target = $region16
      $region15: #{preact_bottleneck_nchw.6} parent=11 // pred_region
        _
      $region16: #{preact_bottleneck_nchw.6} parent=11 // pred_fallthru
        _
      // Predicated region
      $region17: #{preact_bottleneck_nchw.6} parent=11 // pred_check
        %p198 = pneg %p55
      $region18: #{preact_bottleneck_nchw.6} parent=11 // pred_check_branch
        %200 = sbr.rel (%p198) target = $region20
      $region19: #{preact_bottleneck_nchw.6} parent=11 // pred_region
        _
      $region20: #{preact_bottleneck_nchw.6} parent=11 // pred_fallthru
        _
      // Predicated region
      $region21: #{preact_bottleneck_nchw.6} parent=11 // pred_check
        %p201 = pneg %p102
      $region22: #{preact_bottleneck_nchw.6} parent=11 // pred_check_branch
        %203 = sbr.rel (%p201) target = $region24
      $region23: #{preact_bottleneck_nchw.6} parent=11 // pred_region
        _
      $region24: #{preact_bottleneck_nchw.6} parent=11 // pred_fallthru
        _
    $region12: #{preact_bottleneck_nchw.6} parent=5 // pred_fallthru
      _
    %p204 = scmp.lt.s32.totalorder %s13, 4
    // Predicated region
    $region25: #{preact_bottleneck_nchw.6} parent=5 // pred_check
      %p205 = pneg %p204
    $region26: #{preact_bottleneck_nchw.6} parent=5 // pred_check_branch
      %207 = sbr.rel (%p205) target = $region28
    $region27: #{preact_bottleneck_nchw.6} parent=5 // pred_region
      // Predicated region
      $region29: #{preact_bottleneck_nchw.6} parent=27 // pred_check
        %p208 = pneg %p75
      $region30: #{preact_bottleneck_nchw.6} parent=27 // pred_check_branch
        %210 = sbr.rel (%p208) target = $region32
      $region31: #{preact_bottleneck_nchw.6} parent=27 // pred_region
        %p211 = scmp.lt.s32.totalorder %s13, 3
        %s212 = scalar_select %p211, %s13, 3
        %s213 = smul.addr %s212, 32
        %s214 = smul.addr %s213, 4
        %s215 = scalar_lea.vmem %s2, %s214
      $region32: #{preact_bottleneck_nchw.6} parent=27 // pred_fallthru
        _
    $region28: #{preact_bottleneck_nchw.6} parent=5 // pred_fallthru
      _
    %p216 = scmp.le.s32.totalorder 1, %s13
    %p217 = scmp.lt.s32.totalorder %s13, 5
    %p218 = pnand %p216, %p217
    %p219 = pneg %p218
    // Predicated region
    $region33: #{preact_bottleneck_nchw.6} parent=5 // pred_check
      _
    $region34: #{preact_bottleneck_nchw.6} parent=5 // pred_check_branch
      %221 = sbr.rel (%p218) target = $region36
    $region35: #{preact_bottleneck_nchw.6} parent=5 // pred_region
      %s222 = ssub.s32 %s13, 1
      %p223 = pneg %p34
      %p224 = pneg %p31
      %p225 = pneg %p55
      %p226 = pneg %p52
      %p227 = scmp.lt.s32.totalorder %s18, 3
      %s228 = scalar_select %p227, %s18, 3
      %s229 = smul.addr %s228, 32
      %s230 = smul.addr %s229, 4
      %s231 = scalar_lea.vmem %s2, %s230
      %p232 = pneg %p81
      %p233 = pneg %p78
      %p234 = pneg %p102
      %p235 = pneg %p99
      %p236 = pneg %p128
      %p237 = pneg %p125
      %p238 = scmp.lt.s32.totalorder %s18, 3
      %s239 = scalar_select %p238, %s18, 3
      %s240 = smul.addr %s239, 32
      %s241 = smul.addr %s240, 4
      %s242 = scalar_lea.vmem %s4, %s241
      %p243 = pneg %p154
      %p244 = pneg %p151
      %p245 = scmp.lt.s32.totalorder %s18, 3
      %s246 = scalar_select %p245, %s18, 3
      %s247 = scalar_lea.vmem %s5, %s246
      %p248 = pneg %p180
      %p249 = pneg %p177
      %p250 = scmp.lt.s32.totalorder %s18, 3
      %s251 = scalar_select %p250, %s18, 3
      %s252 = scalar_lea.vmem %s6, %s251
      %p253 = scmp.lt.s32.totalorder %s18, 3
      %s254 = scalar_select %p253, %s18, 3
      %s255 = smul.addr %s254, 32
      %s256 = smul.addr %s255, 4
      %s257 = scalar_lea.vmem %s2, %s256
      %p258 = scmp.lt.s32.totalorder %s18, 3
      %s259 = scalar_select %p258, %s18, 3
      %s260 = smul.addr %s259, 32
      %s261 = smul.addr %s260, 4
      %s262 = scalar_lea.vmem %s4, %s261
      %p263 = scmp.lt.s32.totalorder %s18, 3
      %s264 = scalar_select %p263, %s18, 3
      %s265 = scalar_lea.vmem %s5, %s264
      %p266 = scmp.lt.s32.totalorder %s18, 3
      %s267 = scalar_select %p266, %s18, 3
      %s268 = scalar_lea.vmem %s6, %s267
      %vm270 = vcmask 257024
      %271 = vst.msk [vmem:[#allocation2] sm:$0xf] %vm270, 0
      %272 = vst.msk [vmem:[#allocation2 + $0x4] sm:$0xf] %vm270, 0
      %vm273 = vcmask 253952
      %274 = vst.msk [vmem:[#allocation2 + $0x8] sm:$0x1] %vm273, 0
      %s275 = scalar_lea.vmem [#allocation2], 204
      %276 = vst.msk [vmem:[%s275] sm:$0xf] %vm270, 0
      %277 = vst.msk [vmem:[%s275 + $0x4] sm:$0xf] %vm270, 0
      %278 = vst.msk [vmem:[%s275 + $0x8] sm:$0x1] %vm273, 0
      %vm279 = vcmask 253952
      %vm280 = vsmask.f32 256
      %vm281 = vmand %vm279, %vm280
      %v282 = vld [vmem:[#allocation2] sm:$0x1]
      %v283 = vsel %vm281, 0, %v282
      %284 = vst [vmem:[#allocation2] sm:$0x1] %v283
      %v285 = vld [vmem:[#allocation2 + $0xc] sm:$0x1]
      %v286 = vsel %vm281, 0, %v285
      %287 = vst [vmem:[#allocation2 + $0xc] sm:$0x1] %v286
      %v288 = vld [vmem:[#allocation2 + $0x18] sm:$0x1]
      %v289 = vsel %vm281, 0, %v288
      %290 = vst [vmem:[#allocation2 + $0x18] sm:$0x1] %v289
      %v291 = vld [vmem:[#allocation2 + $0x24] sm:$0x1]
      %v292 = vsel %vm281, 0, %v291
      %293 = vst [vmem:[#allocation2 + $0x24] sm:$0x1] %v292
      %v294 = vld [vmem:[#allocation2 + $0x30] sm:$0x1]
      %v295 = vsel %vm281, 0, %v294
      %296 = vst [vmem:[#allocation2 + $0x30] sm:$0x1] %v295
      %v297 = vld [vmem:[#allocation2 + $0x3c] sm:$0x1]
      %v298 = vsel %vm281, 0, %v297
      %299 = vst [vmem:[#allocation2 + $0x3c] sm:$0x1] %v298
      %v300 = vld [vmem:[#allocation2 + $0x48] sm:$0x1]
      %v301 = vsel %vm281, 0, %v300
      %302 = vst [vmem:[#allocation2 + $0x48] sm:$0x1] %v301
      %v303 = vld [vmem:[#allocation2 + $0x54] sm:$0x1]
      %v304 = vsel %vm281, 0, %v303
      %305 = vst [vmem:[#allocation2 + $0x54] sm:$0x1] %v304
      %v306 = vld [vmem:[#allocation2 + $0x60] sm:$0x1]
      %v307 = vsel %vm281, 0, %v306
      %308 = vst [vmem:[#allocation2 + $0x60] sm:$0x1] %v307
      %v309 = vld [vmem:[#allocation2 + $0x6c] sm:$0x1]
      %v310 = vsel %vm281, 0, %v309
      %311 = vst [vmem:[#allocation2 + $0x6c] sm:$0x1] %v310
      %v312 = vld [vmem:[#allocation2 + $0x78] sm:$0x1]
      %v313 = vsel %vm281, 0, %v312
      %314 = vst [vmem:[#allocation2 + $0x78] sm:$0x1] %v313
      %v315 = vld [vmem:[#allocation2 + $0x84] sm:$0x1]
      %v316 = vsel %vm281, 0, %v315
      %317 = vst [vmem:[#allocation2 + $0x84] sm:$0x1] %v316
      %v318 = vld [vmem:[#allocation2 + $0x90] sm:$0x1]
      %v319 = vsel %vm281, 0, %v318
      %320 = vst [vmem:[#allocation2 + $0x90] sm:$0x1] %v319
      %v321 = vld [vmem:[#allocation2 + $0x9c] sm:$0x1]
      %v322 = vsel %vm281, 0, %v321
      %323 = vst [vmem:[#allocation2 + $0x9c] sm:$0x1] %v322
      %v324 = vld [vmem:[#allocation2 + $0xa8] sm:$0x1]
      %v325 = vsel %vm281, 0, %v324
      %326 = vst [vmem:[#allocation2 + $0xa8] sm:$0x1] %v325
      %v327 = vld [vmem:[#allocation2 + $0xb4] sm:$0x1]
      %v328 = vsel %vm281, 0, %v327
      %329 = vst [vmem:[#allocation2 + $0xb4] sm:$0x1] %v328
      %v330 = vld [vmem:[#allocation2 + $0xc0] sm:$0x1]
      %v331 = vsel %vm281, 0, %v330
      %332 = vst [vmem:[#allocation2 + $0xc0] sm:$0x1] %v331
      %v333 = vld [vmem:[#allocation2 + $0xcc] sm:$0x1]
      %v334 = vsel %vm281, 0, %v333
      %335 = vst [vmem:[#allocation2 + $0xcc] sm:$0x1] %v334
      %vm336 = vsmask.f32 7938
      %vm337 = vmand %vm279, %vm336
      %v338 = vld [vmem:[#allocation2 + $0x8] sm:$0x1]
      %v339 = vsel %vm337, 0, %v338
      %340 = vst [vmem:[#allocation2 + $0x8] sm:$0x1] %v339
      %v341 = vld [vmem:[#allocation2 + $0x14] sm:$0x1]
      %v342 = vsel %vm337, 0, %v341
      %343 = vst [vmem:[#allocation2 + $0x14] sm:$0x1] %v342
      %v344 = vld [vmem:[#allocation2 + $0x20] sm:$0x1]
      %v345 = vsel %vm337, 0, %v344
      %346 = vst [vmem:[#allocation2 + $0x20] sm:$0x1] %v345
      %v347 = vld [vmem:[#allocation2 + $0x2c] sm:$0x1]
      %v348 = vsel %vm337, 0, %v347
      %349 = vst [vmem:[#allocation2 + $0x2c] sm:$0x1] %v348
      %v350 = vld [vmem:[#allocation2 + $0x38] sm:$0x1]
      %v351 = vsel %vm337, 0, %v350
      %352 = vst [vmem:[#allocation2 + $0x38] sm:$0x1] %v351
      %v353 = vld [vmem:[#allocation2 + $0x44] sm:$0x1]
      %v354 = vsel %vm337, 0, %v353
      %355 = vst [vmem:[#allocation2 + $0x44] sm:$0x1] %v354
      %v356 = vld [vmem:[#allocation2 + $0x50] sm:$0x1]
      %v357 = vsel %vm337, 0, %v356
      %358 = vst [vmem:[#allocation2 + $0x50] sm:$0x1] %v357
      %v359 = vld [vmem:[#allocation2 + $0x5c] sm:$0x1]
      %v360 = vsel %vm337, 0, %v359
      %361 = vst [vmem:[#allocation2 + $0x5c] sm:$0x1] %v360
      %v362 = vld [vmem:[#allocation2 + $0x68] sm:$0x1]
      %v363 = vsel %vm337, 0, %v362
      %364 = vst [vmem:[#allocation2 + $0x68] sm:$0x1] %v363
      %v365 = vld [vmem:[#allocation2 + $0x74] sm:$0x1]
      %v366 = vsel %vm337, 0, %v365
      %367 = vst [vmem:[#allocation2 + $0x74] sm:$0x1] %v366
      %v368 = vld [vmem:[#allocation2 + $0x80] sm:$0x1]
      %v369 = vsel %vm337, 0, %v368
      %370 = vst [vmem:[#allocation2 + $0x80] sm:$0x1] %v369
      %v371 = vld [vmem:[#allocation2 + $0x8c] sm:$0x1]
      %v372 = vsel %vm337, 0, %v371
      %373 = vst [vmem:[#allocation2 + $0x8c] sm:$0x1] %v372
      %v374 = vld [vmem:[#allocation2 + $0x98] sm:$0x1]
      %v375 = vsel %vm337, 0, %v374
      %376 = vst [vmem:[#allocation2 + $0x98] sm:$0x1] %v375
      %v377 = vld [vmem:[#allocation2 + $0xa4] sm:$0x1]
      %v378 = vsel %vm337, 0, %v377
      %379 = vst [vmem:[#allocation2 + $0xa4] sm:$0x1] %v378
      %v380 = vld [vmem:[#allocation2 + $0xb0] sm:$0x1]
      %v381 = vsel %vm337, 0, %v380
      %382 = vst [vmem:[#allocation2 + $0xb0] sm:$0x1] %v381
      %v383 = vld [vmem:[#allocation2 + $0xbc] sm:$0x1]
      %v384 = vsel %vm337, 0, %v383
      %385 = vst [vmem:[#allocation2 + $0xbc] sm:$0x1] %v384
      %v386 = vld [vmem:[#allocation2 + $0xc8] sm:$0x1]
      %v387 = vsel %vm337, 0, %v386
      %388 = vst [vmem:[#allocation2 + $0xc8] sm:$0x1] %v387
      %v389 = vld [vmem:[#allocation2 + $0xd4] sm:$0x1]
      %v390 = vsel %vm337, 0, %v389
      %391 = vst [vmem:[#allocation2 + $0xd4] sm:$0x1] %v390
      %v392 = vld [vmem:[%s257] sm:$0xf]
      %v393 = vld [vmem:[%s257 + $0x4] sm:$0xf]
      %v394 = vld [vmem:[%s257 + $0x8] sm:$0xf]
      %v395 = vld [vmem:[%s257 + $0xc] sm:$0xf]
      %v396 = vld [vmem:[%s257 + $0x10] sm:$0xf]
      %v397 = vld [vmem:[%s257 + $0x14] sm:$0xf]
      %v398 = vld [vmem:[%s257 + $0x18] sm:$0xf]
      %v399 = vld [vmem:[%s257 + $0x1c] sm:$0xf]
      %v400 = vld [vmem:[%s257 + $0x20] sm:$0xf]
      %v401 = vld [vmem:[%s257 + $0x24] sm:$0xf]
      %v402 = vld [vmem:[%s257 + $0x28] sm:$0xf]
      %v403 = vld [vmem:[%s257 + $0x2c] sm:$0xf]
      %v404 = vld [vmem:[%s257 + $0x30] sm:$0xf]
      %v405 = vld [vmem:[%s257 + $0x34] sm:$0xf]
      %v406 = vld [vmem:[%s257 + $0x38] sm:$0xf]
      %v407 = vld [vmem:[%s257 + $0x3c] sm:$0xf]
      %v408 = vld [vmem:[%s257 + $0x40] sm:$0xf]
      %v409 = vld [vmem:[%s257 + $0x44] sm:$0xf]
      %v410 = vld [vmem:[%s257 + $0x48] sm:$0xf]
      %v411 = vld [vmem:[%s257 + $0x4c] sm:$0xf]
      %v412 = vld [vmem:[%s257 + $0x50] sm:$0xf]
      %v413 = vld [vmem:[%s257 + $0x54] sm:$0xf]
      %v414 = vld [vmem:[%s257 + $0x58] sm:$0xf]
      %v415 = vld [vmem:[%s257 + $0x5c] sm:$0xf]
      %v416 = vld [vmem:[%s257 + $0x60] sm:$0xf]
      %v417 = vld [vmem:[%s257 + $0x64] sm:$0xf]
      %v418 = vld [vmem:[%s257 + $0x68] sm:$0xf]
      %v419 = vld [vmem:[%s257 + $0x6c] sm:$0xf]
      %v420 = vld [vmem:[%s257 + $0x70] sm:$0xf]
      %v421 = vld [vmem:[%s257 + $0x74] sm:$0xf]
      %v422 = vld [vmem:[%s257 + $0x78] sm:$0xf]
      %v423 = vld [vmem:[%s257 + $0x7c] sm:$0xf]
      %v424 = vunpack.c.l.bf16 %v392
      %v425 = vunpack.c.l.bf16 %v393
      %v426 = vunpack.c.l.bf16 %v394
      %v427 = vunpack.c.l.bf16 %v395
      %v428 = vunpack.c.l.bf16 %v396
      %v429 = vunpack.c.l.bf16 %v397
      %v430 = vunpack.c.l.bf16 %v398
      %v431 = vunpack.c.l.bf16 %v399
      %v432 = vunpack.c.l.bf16 %v400
      %v433 = vunpack.c.l.bf16 %v401
      %v434 = vunpack.c.l.bf16 %v402
      %v435 = vunpack.c.l.bf16 %v403
      %v436 = vunpack.c.l.bf16 %v404
      %v437 = vunpack.c.l.bf16 %v405
      %v438 = vunpack.c.l.bf16 %v406
      %v439 = vunpack.c.l.bf16 %v407
      %v440 = vunpack.c.l.bf16 %v408
      %v441 = vunpack.c.l.bf16 %v409
      %v442 = vunpack.c.l.bf16 %v410
      %v443 = vunpack.c.l.bf16 %v411
      %v444 = vunpack.c.l.bf16 %v412
      %v445 = vunpack.c.l.bf16 %v413
      %v446 = vunpack.c.l.bf16 %v414
      %v447 = vunpack.c.l.bf16 %v415
      %v448 = vunpack.c.l.bf16 %v416
      %v449 = vunpack.c.l.bf16 %v417
      %v450 = vunpack.c.l.bf16 %v418
      %v451 = vunpack.c.l.bf16 %v419
      %v452 = vunpack.c.l.bf16 %v420
      %v453 = vunpack.c.l.bf16 %v421
      %v454 = vunpack.c.l.bf16 %v422
      %v455 = vunpack.c.l.bf16 %v423
      %v456 = vld [vmem:[%s0] sm:$0x1]
      %v458 = vlaneseq
      %v459 = vshrl.u32 %v458, 7
      %v460 = vsub.s32 0, %v459
      %v461 = vrot.slane %v456, %v460
      %v463 = vmul.f32 %v424, %v461
      %v464 = vmul.f32 %v425, %v461
      %v465 = vmul.f32 %v426, %v461
      %v466 = vmul.f32 %v427, %v461
      %v467 = vmul.f32 %v428, %v461
      %v468 = vmul.f32 %v429, %v461
      %v469 = vmul.f32 %v430, %v461
      %v470 = vmul.f32 %v431, %v461
      %v471 = vmul.f32 %v432, %v461
      %v472 = vmul.f32 %v433, %v461
      %v473 = vmul.f32 %v434, %v461
      %v474 = vmul.f32 %v435, %v461
      %v475 = vmul.f32 %v436, %v461
      %v476 = vmul.f32 %v437, %v461
      %v477 = vmul.f32 %v438, %v461
      %v478 = vmul.f32 %v439, %v461
      %v479 = vmul.f32 %v440, %v461
      %v480 = vmul.f32 %v441, %v461
      %v481 = vmul.f32 %v442, %v461
      %v482 = vmul.f32 %v443, %v461
      %v483 = vmul.f32 %v444, %v461
      %v484 = vmul.f32 %v445, %v461
      %v485 = vmul.f32 %v446, %v461
      %v486 = vmul.f32 %v447, %v461
      %v487 = vmul.f32 %v448, %v461
      %v488 = vmul.f32 %v449, %v461
      %v489 = vmul.f32 %v450, %v461
      %v490 = vmul.f32 %v451, %v461
      %v491 = vmul.f32 %v452, %v461
      %v492 = vmul.f32 %v453, %v461
      %v493 = vmul.f32 %v454, %v461
      %v494 = vmul.f32 %v455, %v461
      %v495 = vld [vmem:[%s1] sm:$0x1]
      %v497 = vlaneseq
      %v498 = vshrl.u32 %v497, 7
      %v499 = vsub.s32 0, %v498
      %v500 = vrot.slane %v495, %v499
      %v502 = vadd.f32 %v463, %v500
      %v503 = vadd.f32 %v464, %v500
      %v504 = vadd.f32 %v465, %v500
      %v505 = vadd.f32 %v466, %v500
      %v506 = vadd.f32 %v467, %v500
      %v507 = vadd.f32 %v468, %v500
      %v508 = vadd.f32 %v469, %v500
      %v509 = vadd.f32 %v470, %v500
      %v510 = vadd.f32 %v471, %v500
      %v511 = vadd.f32 %v472, %v500
      %v512 = vadd.f32 %v473, %v500
      %v513 = vadd.f32 %v474, %v500
      %v514 = vadd.f32 %v475, %v500
      %v515 = vadd.f32 %v476, %v500
      %v516 = vadd.f32 %v477, %v500
      %v517 = vadd.f32 %v478, %v500
      %v518 = vadd.f32 %v479, %v500
      %v519 = vadd.f32 %v480, %v500
      %v520 = vadd.f32 %v481, %v500
      %v521 = vadd.f32 %v482, %v500
      %v522 = vadd.f32 %v483, %v500
      %v523 = vadd.f32 %v484, %v500
      %v524 = vadd.f32 %v485, %v500
      %v525 = vadd.f32 %v486, %v500
      %v526 = vadd.f32 %v487, %v500
      %v527 = vadd.f32 %v488, %v500
      %v528 = vadd.f32 %v489, %v500
      %v529 = vadd.f32 %v490, %v500
      %v530 = vadd.f32 %v491, %v500
      %v531 = vadd.f32 %v492, %v500
      %v532 = vadd.f32 %v493, %v500
      %v533 = vadd.f32 %v494, %v500
      %v534 = vmax.f32 %v502, 0.0
      %v535 = vmax.f32 %v503, 0.0
      %v536 = vmax.f32 %v504, 0.0
      %v537 = vmax.f32 %v505, 0.0
      %v538 = vmax.f32 %v506, 0.0
      %v539 = vmax.f32 %v507, 0.0
      %v540 = vmax.f32 %v508, 0.0
      %v541 = vmax.f32 %v509, 0.0
      %v542 = vmax.f32 %v510, 0.0
      %v543 = vmax.f32 %v511, 0.0
      %v544 = vmax.f32 %v512, 0.0
      %v545 = vmax.f32 %v513, 0.0
      %v546 = vmax.f32 %v514, 0.0
      %v547 = vmax.f32 %v515, 0.0
      %v548 = vmax.f32 %v516, 0.0
      %v549 = vmax.f32 %v517, 0.0
      %v550 = vmax.f32 %v518, 0.0
      %v551 = vmax.f32 %v519, 0.0
      %v552 = vmax.f32 %v520, 0.0
      %v553 = vmax.f32 %v521, 0.0
      %v554 = vmax.f32 %v522, 0.0
      %v555 = vmax.f32 %v523, 0.0
      %v556 = vmax.f32 %v524, 0.0
      %v557 = vmax.f32 %v525, 0.0
      %v558 = vmax.f32 %v526, 0.0
      %v559 = vmax.f32 %v527, 0.0
      %v560 = vmax.f32 %v528, 0.0
      %v561 = vmax.f32 %v529, 0.0
      %v562 = vmax.f32 %v530, 0.0
      %v563 = vmax.f32 %v531, 0.0
      %v564 = vmax.f32 %v532, 0.0
      %v565 = vmax.f32 %v533, 0.0
      %v566 = vpack.c.bf16 %v535, %v534
      %v567 = vpack.c.bf16 %v537, %v536
      %v568 = vpack.c.bf16 %v539, %v538
      %v569 = vpack.c.bf16 %v541, %v540
      %v570 = vpack.c.bf16 %v543, %v542
      %v571 = vpack.c.bf16 %v545, %v544
      %v572 = vpack.c.bf16 %v547, %v546
      %v573 = vpack.c.bf16 %v549, %v548
      %v574 = vpack.c.bf16 %v551, %v550
      %v575 = vpack.c.bf16 %v553, %v552
      %v576 = vpack.c.bf16 %v555, %v554
      %v577 = vpack.c.bf16 %v557, %v556
      %v578 = vpack.c.bf16 %v559, %v558
      %v579 = vpack.c.bf16 %v561, %v560
      %v580 = vpack.c.bf16 %v563, %v562
      %v581 = vpack.c.bf16 %v565, %v564
      %v598 = vunpack.c.l.b16 %v566
      %v599 = vunpack.c.h.b16 %v566
      %v600 = vunpack.c.l.b16 %v567
      %v601 = vunpack.c.h.b16 %v567
      %v602 = vunpack.c.l.b16 %v568
      %v603 = vunpack.c.h.b16 %v568
      %v604 = vunpack.c.l.b16 %v569
      %v605 = vunpack.c.h.b16 %v569
      %v606 = vunpack.c.l.b16 %v570
      %v607 = vunpack.c.h.b16 %v570
      %v608 = vunpack.c.l.b16 %v571
      %v609 = vunpack.c.h.b16 %v571
      %v610 = vunpack.c.l.b16 %v572
      %v611 = vunpack.c.h.b16 %v572
      %v612 = vunpack.c.l.b16 %v573
      %v613 = vunpack.c.h.b16 %v573
      %v614 = vunpack.c.l.b16 %v574
      %v615 = vunpack.c.h.b16 %v574
      %v616 = vunpack.c.l.b16 %v575
      %v617 = vunpack.c.h.b16 %v575
      %v618 = vunpack.c.l.b16 %v576
      %v619 = vunpack.c.h.b16 %v576
      %v620 = vunpack.c.l.b16 %v577
      %v621 = vunpack.c.h.b16 %v577
      %v622 = vunpack.c.l.b16 %v578
      %v623 = vunpack.c.h.b16 %v578
      %v624 = vunpack.c.l.b16 %v579
      %v625 = vunpack.c.h.b16 %v579
      %v626 = vunpack.c.l.b16 %v580
      %v627 = vunpack.c.h.b16 %v580
      %v628 = vunpack.c.l.b16 %v581
      %v629 = vunpack.c.h.b16 %v581
      %v630 = vpack.c.b16 %v598, %v598
      %v631 = vpack.c.b16 %v599, %v599
      %v632 = vpack.c.b16 %v600, %v600
      %v633 = vpack.c.b16 %v601, %v601
      %v634 = vpack.c.b16 %v602, %v602
      %v635 = vpack.c.b16 %v603, %v603
      %v636 = vpack.c.b16 %v604, %v604
      %v637 = vpack.c.b16 %v605, %v605
      %v638 = vpack.c.b16 %v606, %v606
      %v639 = vpack.c.b16 %v607, %v607
      %v640 = vpack.c.b16 %v608, %v608
      %v641 = vpack.c.b16 %v609, %v609
      %v642 = vpack.c.b16 %v610, %v610
      %v643 = vpack.c.b16 %v611, %v611
      %v644 = vpack.c.b16 %v612, %v612
      %v645 = vpack.c.b16 %v613, %v613
      %v646 = vpack.c.b16 %v614, %v614
      %v647 = vpack.c.b16 %v615, %v615
      %v648 = vpack.c.b16 %v616, %v616
      %v649 = vpack.c.b16 %v617, %v617
      %v650 = vpack.c.b16 %v618, %v618
      %v651 = vpack.c.b16 %v619, %v619
      %v652 = vpack.c.b16 %v620, %v620
      %v653 = vpack.c.b16 %v621, %v621
      %v654 = vpack.c.b16 %v622, %v622
      %v655 = vpack.c.b16 %v623, %v623
      %v656 = vpack.c.b16 %v624, %v624
      %v657 = vpack.c.b16 %v625, %v625
      %v658 = vpack.c.b16 %v626, %v626
      %v659 = vpack.c.b16 %v627, %v627
      %v660 = vpack.c.b16 %v628, %v628
      %v661 = vpack.c.b16 %v629, %v629
      %vm662 = vsmask.f32 4368
      %vm663 = vmor %vm280, %vm662
      %v665 = vshrl.u32 %v630, 16
      %v667 = vrot.slane %v665, 7
      %v668 = vshll.u32 %v630, 16
      %v670 = vor.u32 %v667, %v668
      %v671 = vrot.slane %v667, 4
      %v673 = vshrl.u32 %v631, 16
      %v675 = vrot.slane %v673, 7
      %v676 = vshll.u32 %v631, 16
      %v678 = vor.u32 %v675, %v676
      %v679 = vsel %vm663, %v671, %v678
      %v680 = vrot.slane %v675, 4
      %v682 = vshrl.u32 %v632, 16
      %v684 = vrot.slane %v682, 7
      %v685 = vshll.u32 %v632, 16
      %v687 = vor.u32 %v684, %v685
      %v688 = vrot.slane %v684, 4
      %v690 = vshrl.u32 %v633, 16
      %v692 = vrot.slane %v690, 7
      %v693 = vshll.u32 %v633, 16
      %v695 = vor.u32 %v692, %v693
      %v696 = vsel %vm663, %v688, %v695
      %v697 = vrot.slane %v692, 4
      %v699 = vshrl.u32 %v634, 16
      %v701 = vrot.slane %v699, 7
      %v702 = vshll.u32 %v634, 16
      %v704 = vor.u32 %v701, %v702
      %v705 = vrot.slane %v701, 4
      %v707 = vshrl.u32 %v635, 16
      %v709 = vrot.slane %v707, 7
      %v710 = vshll.u32 %v635, 16
      %v712 = vor.u32 %v709, %v710
      %v713 = vsel %vm663, %v705, %v712
      %v714 = vrot.slane %v709, 4
      %v716 = vshrl.u32 %v636, 16
      %v718 = vrot.slane %v716, 7
      %v719 = vshll.u32 %v636, 16
      %v721 = vor.u32 %v718, %v719
      %v722 = vrot.slane %v718, 4
      %v724 = vshrl.u32 %v637, 16
      %v726 = vrot.slane %v724, 7
      %v727 = vshll.u32 %v637, 16
      %v729 = vor.u32 %v726, %v727
      %v730 = vsel %vm663, %v722, %v729
      %v731 = vrot.slane %v726, 4
      %v733 = vshrl.u32 %v638, 16
      %v735 = vrot.slane %v733, 7
      %v736 = vshll.u32 %v638, 16
      %v738 = vor.u32 %v735, %v736
      %v739 = vrot.slane %v735, 4
      %v741 = vshrl.u32 %v639, 16
      %v743 = vrot.slane %v741, 7
      %v744 = vshll.u32 %v639, 16
      %v746 = vor.u32 %v743, %v744
      %v747 = vsel %vm663, %v739, %v746
      %v748 = vrot.slane %v743, 4
      %v750 = vshrl.u32 %v640, 16
      %v752 = vrot.slane %v750, 7
      %v753 = vshll.u32 %v640, 16
      %v755 = vor.u32 %v752, %v753
      %v756 = vrot.slane %v752, 4
      %v758 = vshrl.u32 %v641, 16
      %v760 = vrot.slane %v758, 7
      %v761 = vshll.u32 %v641, 16
      %v763 = vor.u32 %v760, %v761
      %v764 = vsel %vm663, %v756, %v763
      %v765 = vrot.slane %v760, 4
      %v767 = vshrl.u32 %v642, 16
      %v769 = vrot.slane %v767, 7
      %v770 = vshll.u32 %v642, 16
      %v772 = vor.u32 %v769, %v770
      %v773 = vrot.slane %v769, 4
      %v775 = vshrl.u32 %v643, 16
      %v777 = vrot.slane %v775, 7
      %v778 = vshll.u32 %v643, 16
      %v780 = vor.u32 %v777, %v778
      %v781 = vsel %vm663, %v773, %v780
      %v782 = vrot.slane %v777, 4
      %v784 = vshrl.u32 %v644, 16
      %v786 = vrot.slane %v784, 7
      %v787 = vshll.u32 %v644, 16
      %v789 = vor.u32 %v786, %v787
      %v790 = vrot.slane %v786, 4
      %v792 = vshrl.u32 %v645, 16
      %v794 = vrot.slane %v792, 7
      %v795 = vshll.u32 %v645, 16
      %v797 = vor.u32 %v794, %v795
      %v798 = vsel %vm663, %v790, %v797
      %v799 = vrot.slane %v794, 4
      %v801 = vshrl.u32 %v646, 16
      %v803 = vrot.slane %v801, 7
      %v804 = vshll.u32 %v646, 16
      %v806 = vor.u32 %v803, %v804
      %v807 = vrot.slane %v803, 4
      %v809 = vshrl.u32 %v647, 16
      %v811 = vrot.slane %v809, 7
      %v812 = vshll.u32 %v647, 16
      %v814 = vor.u32 %v811, %v812
      %v815 = vsel %vm663, %v807, %v814
      %v816 = vrot.slane %v811, 4
      %v818 = vshrl.u32 %v648, 16
      %v820 = vrot.slane %v818, 7
      %v821 = vshll.u32 %v648, 16
      %v823 = vor.u32 %v820, %v821
      %v824 = vrot.slane %v820, 4
      %v826 = vshrl.u32 %v649, 16
      %v828 = vrot.slane %v826, 7
      %v829 = vshll.u32 %v649, 16
      %v831 = vor.u32 %v828, %v829
      %v832 = vsel %vm663, %v824, %v831
      %v833 = vrot.slane %v828, 4
      %v835 = vshrl.u32 %v650, 16
      %v837 = vrot.slane %v835, 7
      %v838 = vshll.u32 %v650, 16
      %v840 = vor.u32 %v837, %v838
      %v841 = vrot.slane %v837, 4
      %v843 = vshrl.u32 %v651, 16
      %v845 = vrot.slane %v843, 7
      %v846 = vshll.u32 %v651, 16
      %v848 = vor.u32 %v845, %v846
      %v849 = vsel %vm663, %v841, %v848
      %v850 = vrot.slane %v845, 4
      %v852 = vshrl.u32 %v652, 16
      %v854 = vrot.slane %v852, 7
      %v855 = vshll.u32 %v652, 16
      %v857 = vor.u32 %v854, %v855
      %v858 = vrot.slane %v854, 4
      %v860 = vshrl.u32 %v653, 16
      %v862 = vrot.slane %v860, 7
      %v863 = vshll.u32 %v653, 16
      %v865 = vor.u32 %v862, %v863
      %v866 = vsel %vm663, %v858, %v865
      %v867 = vrot.slane %v862, 4
      %v869 = vshrl.u32 %v654, 16
      %v871 = vrot.slane %v869, 7
      %v872 = vshll.u32 %v654, 16
      %v874 = vor.u32 %v871, %v872
      %v875 = vrot.slane %v871, 4
      %v877 = vshrl.u32 %v655, 16
      %v879 = vrot.slane %v877, 7
      %v880 = vshll.u32 %v655, 16
      %v882 = vor.u32 %v879, %v880
      %v883 = vsel %vm663, %v875, %v882
      %v884 = vrot.slane %v879, 4
      %v886 = vshrl.u32 %v656, 16
      %v888 = vrot.slane %v886, 7
      %v889 = vshll.u32 %v656, 16
      %v891 = vor.u32 %v888, %v889
      %v892 = vrot.slane %v888, 4
      %v894 = vshrl.u32 %v657, 16
      %v896 = vrot.slane %v894, 7
      %v897 = vshll.u32 %v657, 16
      %v899 = vor.u32 %v896, %v897
      %v900 = vsel %vm663, %v892, %v899
      %v901 = vrot.slane %v896, 4
      %v903 = vshrl.u32 %v658, 16
      %v905 = vrot.slane %v903, 7
      %v906 = vshll.u32 %v658, 16
      %v908 = vor.u32 %v905, %v906
      %v909 = vrot.slane %v905, 4
      %v911 = vshrl.u32 %v659, 16
      %v913 = vrot.slane %v911, 7
      %v914 = vshll.u32 %v659, 16
      %v916 = vor.u32 %v913, %v914
      %v917 = vsel %vm663, %v909, %v916
      %v918 = vrot.slane %v913, 4
      %v920 = vshrl.u32 %v660, 16
      %v922 = vrot.slane %v920, 7
      %v923 = vshll.u32 %v660, 16
      %v925 = vor.u32 %v922, %v923
      %v926 = vrot.slane %v922, 4
      %v928 = vshrl.u32 %v661, 16
      %v930 = vrot.slane %v928, 7
      %v931 = vshll.u32 %v661, 16
      %v933 = vor.u32 %v930, %v931
      %v934 = vsel %vm663, %v926, %v933
      %v935 = vrot.slane %v930, 4
      %s984 = scalar_lea.vmem [#allocation2], 12
      %vm985 = vcmask 257024
      %vm986 = vmand %vm985, %vm336
      %v987 = vld [vmem:[%s984] sm:$0xf]
      %v988 = vsel %vm986, %v670, %v987
      %989 = vst [vmem:[%s984] sm:$0xf] %v988
      %990 = vst.msk [vmem:[%s984 + $0x4] sm:$0xf] %vm270, %v679
      %v991 = vld [vmem:[%s984 + $0x8] sm:$0x1]
      %v992 = vsel %vm281, %v680, %v991
      %993 = vst [vmem:[%s984 + $0x8] sm:$0x1] %v992
      %v994 = vld [vmem:[%s984 + $0xc] sm:$0xf]
      %v995 = vsel %vm986, %v687, %v994
      %996 = vst [vmem:[%s984 + $0xc] sm:$0xf] %v995
      %997 = vst.msk [vmem:[%s984 + $0x10] sm:$0xf] %vm270, %v696
      %v998 = vld [vmem:[%s984 + $0x14] sm:$0x1]
      %v999 = vsel %vm281, %v697, %v998
      %1000 = vst [vmem:[%s984 + $0x14] sm:$0x1] %v999
      %v1001 = vld [vmem:[%s984 + $0x18] sm:$0xf]
      %v1002 = vsel %vm986, %v704, %v1001
      %1003 = vst [vmem:[%s984 + $0x18] sm:$0xf] %v1002
      %1004 = vst.msk [vmem:[%s984 + $0x1c] sm:$0xf] %vm270, %v713
      %v1005 = vld [vmem:[%s984 + $0x20] sm:$0x1]
      %v1006 = vsel %vm281, %v714, %v1005
      %1007 = vst [vmem:[%s984 + $0x20] sm:$0x1] %v1006
      %v1008 = vld [vmem:[%s984 + $0x24] sm:$0xf]
      %v1009 = vsel %vm986, %v721, %v1008
      %1010 = vst [vmem:[%s984 + $0x24] sm:$0xf] %v1009
      %1011 = vst.msk [vmem:[%s984 + $0x28] sm:$0xf] %vm270, %v730
      %v1012 = vld [vmem:[%s984 + $0x2c] sm:$0x1]
      %v1013 = vsel %vm281, %v731, %v1012
      %1014 = vst [vmem:[%s984 + $0x2c] sm:$0x1] %v1013
      %v1015 = vld [vmem:[%s984 + $0x30] sm:$0xf]
      %v1016 = vsel %vm986, %v738, %v1015
      %1017 = vst [vmem:[%s984 + $0x30] sm:$0xf] %v1016
      %1018 = vst.msk [vmem:[%s984 + $0x34] sm:$0xf] %vm270, %v747
      %v1019 = vld [vmem:[%s984 + $0x38] sm:$0x1]
      %v1020 = vsel %vm281, %v748, %v1019
      %1021 = vst [vmem:[%s984 + $0x38] sm:$0x1] %v1020
      %v1022 = vld [vmem:[%s984 + $0x3c] sm:$0xf]
      %v1023 = vsel %vm986, %v755, %v1022
      %1024 = vst [vmem:[%s984 + $0x3c] sm:$0xf] %v1023
      %1025 = vst.msk [vmem:[%s984 + $0x40] sm:$0xf] %vm270, %v764
      %v1026 = vld [vmem:[%s984 + $0x44] sm:$0x1]
      %v1027 = vsel %vm281, %v765, %v1026
      %1028 = vst [vmem:[%s984 + $0x44] sm:$0x1] %v1027
      %v1029 = vld [vmem:[%s984 + $0x48] sm:$0xf]
      %v1030 = vsel %vm986, %v772, %v1029
      %1031 = vst [vmem:[%s984 + $0x48] sm:$0xf] %v1030
      %1032 = vst.msk [vmem:[%s984 + $0x4c] sm:$0xf] %vm270, %v781
      %v1033 = vld [vmem:[%s984 + $0x50] sm:$0x1]
      %v1034 = vsel %vm281, %v782, %v1033
      %1035 = vst [vmem:[%s984 + $0x50] sm:$0x1] %v1034
      %v1036 = vld [vmem:[%s984 + $0x54] sm:$0xf]
      %v1037 = vsel %vm986, %v789, %v1036
      %1038 = vst [vmem:[%s984 + $0x54] sm:$0xf] %v1037
      %1039 = vst.msk [vmem:[%s984 + $0x58] sm:$0xf] %vm270, %v798
      %v1040 = vld [vmem:[%s984 + $0x5c] sm:$0x1]
      %v1041 = vsel %vm281, %v799, %v1040
      %1042 = vst [vmem:[%s984 + $0x5c] sm:$0x1] %v1041
      %v1043 = vld [vmem:[%s984 + $0x60] sm:$0xf]
      %v1044 = vsel %vm986, %v806, %v1043
      %1045 = vst [vmem:[%s984 + $0x60] sm:$0xf] %v1044
      %1046 = vst.msk [vmem:[%s984 + $0x64] sm:$0xf] %vm270, %v815
      %v1047 = vld [vmem:[%s984 + $0x68] sm:$0x1]
      %v1048 = vsel %vm281, %v816, %v1047
      %1049 = vst [vmem:[%s984 + $0x68] sm:$0x1] %v1048
      %v1050 = vld [vmem:[%s984 + $0x6c] sm:$0xf]
      %v1051 = vsel %vm986, %v823, %v1050
      %1052 = vst [vmem:[%s984 + $0x6c] sm:$0xf] %v1051
      %1053 = vst.msk [vmem:[%s984 + $0x70] sm:$0xf] %vm270, %v832
      %v1054 = vld [vmem:[%s984 + $0x74] sm:$0x1]
      %v1055 = vsel %vm281, %v833, %v1054
      %1056 = vst [vmem:[%s984 + $0x74] sm:$0x1] %v1055
      %v1057 = vld [vmem:[%s984 + $0x78] sm:$0xf]
      %v1058 = vsel %vm986, %v840, %v1057
      %1059 = vst [vmem:[%s984 + $0x78] sm:$0xf] %v1058
      %1060 = vst.msk [vmem:[%s984 + $0x7c] sm:$0xf] %vm270, %v849
      %v1061 = vld [vmem:[%s984 + $0x80] sm:$0x1]
      %v1062 = vsel %vm281, %v850, %v1061
      %1063 = vst [vmem:[%s984 + $0x80] sm:$0x1] %v1062
      %v1064 = vld [vmem:[%s984 + $0x84] sm:$0xf]
      %v1065 = vsel %vm986, %v857, %v1064
      %1066 = vst [vmem:[%s984 + $0x84] sm:$0xf] %v1065
      %1067 = vst.msk [vmem:[%s984 + $0x88] sm:$0xf] %vm270, %v866
      %v1068 = vld [vmem:[%s984 + $0x8c] sm:$0x1]
      %v1069 = vsel %vm281, %v867, %v1068
      %1070 = vst [vmem:[%s984 + $0x8c] sm:$0x1] %v1069
      %v1071 = vld [vmem:[%s984 + $0x90] sm:$0xf]
      %v1072 = vsel %vm986, %v874, %v1071
      %1073 = vst [vmem:[%s984 + $0x90] sm:$0xf] %v1072
      %1074 = vst.msk [vmem:[%s984 + $0x94] sm:$0xf] %vm270, %v883
      %v1075 = vld [vmem:[%s984 + $0x98] sm:$0x1]
      %v1076 = vsel %vm281, %v884, %v1075
      %1077 = vst [vmem:[%s984 + $0x98] sm:$0x1] %v1076
      %v1078 = vld [vmem:[%s984 + $0x9c] sm:$0xf]
      %v1079 = vsel %vm986, %v891, %v1078
      %1080 = vst [vmem:[%s984 + $0x9c] sm:$0xf] %v1079
      %1081 = vst.msk [vmem:[%s984 + $0xa0] sm:$0xf] %vm270, %v900
      %v1082 = vld [vmem:[%s984 + $0xa4] sm:$0x1]
      %v1083 = vsel %vm281, %v901, %v1082
      %1084 = vst [vmem:[%s984 + $0xa4] sm:$0x1] %v1083
      %v1085 = vld [vmem:[%s984 + $0xa8] sm:$0xf]
      %v1086 = vsel %vm986, %v908, %v1085
      %1087 = vst [vmem:[%s984 + $0xa8] sm:$0xf] %v1086
      %1088 = vst.msk [vmem:[%s984 + $0xac] sm:$0xf] %vm270, %v917
      %v1089 = vld [vmem:[%s984 + $0xb0] sm:$0x1]
      %v1090 = vsel %vm281, %v918, %v1089
      %1091 = vst [vmem:[%s984 + $0xb0] sm:$0x1] %v1090
      %v1092 = vld [vmem:[%s984 + $0xb4] sm:$0xf]
      %v1093 = vsel %vm986, %v925, %v1092
      %1094 = vst [vmem:[%s984 + $0xb4] sm:$0xf] %v1093
      %1095 = vst.msk [vmem:[%s984 + $0xb8] sm:$0xf] %vm270, %v934
      %v1096 = vld [vmem:[%s984 + $0xbc] sm:$0x1]
      %v1097 = vsel %vm281, %v935, %v1096
      %1098 = vst [vmem:[%s984 + $0xbc] sm:$0x1] %v1097
      %v1099 = vld [vmem:[#allocation2] sm:$0xf]
      %v1100 = vld [vmem:[#allocation2 + $0x4] sm:$0xf]
      %v1101 = vld [vmem:[#allocation2 + $0xc] sm:$0xf]
      %v1102 = vld [vmem:[#allocation2 + $0x10] sm:$0xf]
      %v1103 = vld [vmem:[#allocation2 + $0x18] sm:$0xf]
      %v1104 = vld [vmem:[#allocation2 + $0x1c] sm:$0xf]
      %v1105 = vld [vmem:[#allocation2 + $0x24] sm:$0xf]
      %v1106 = vld [vmem:[#allocation2 + $0x28] sm:$0xf]
      %v1107 = vld [vmem:[#allocation2 + $0x30] sm:$0xf]
      %v1108 = vld [vmem:[#allocation2 + $0x34] sm:$0xf]
      %v1109 = vld [vmem:[#allocation2 + $0x3c] sm:$0xf]
      %v1110 = vld [vmem:[#allocation2 + $0x40] sm:$0xf]
      %v1111 = vld [vmem:[#allocation2 + $0x48] sm:$0xf]
      %v1112 = vld [vmem:[#allocation2 + $0x4c] sm:$0xf]
      %v1113 = vld [vmem:[#allocation2 + $0x54] sm:$0xf]
      %v1114 = vld [vmem:[#allocation2 + $0x58] sm:$0xf]
      %v1115 = vld [vmem:[#allocation2 + $0x60] sm:$0xf]
      %v1116 = vld [vmem:[#allocation2 + $0x64] sm:$0xf]
      %v1117 = vld [vmem:[#allocation2 + $0x6c] sm:$0xf]
      %v1118 = vld [vmem:[#allocation2 + $0x70] sm:$0xf]
      %v1119 = vld [vmem:[#allocation2 + $0x78] sm:$0xf]
      %v1120 = vld [vmem:[#allocation2 + $0x7c] sm:$0xf]
      %v1121 = vld [vmem:[#allocation2 + $0x84] sm:$0xf]
      %v1122 = vld [vmem:[#allocation2 + $0x88] sm:$0xf]
      %v1123 = vld [vmem:[#allocation2 + $0x90] sm:$0xf]
      %v1124 = vld [vmem:[#allocation2 + $0x94] sm:$0xf]
      %v1125 = vld [vmem:[#allocation2 + $0x9c] sm:$0xf]
      %v1126 = vld [vmem:[#allocation2 + $0xa0] sm:$0xf]
      %v1127 = vld [vmem:[#allocation2 + $0xa8] sm:$0xf]
      %v1128 = vld [vmem:[#allocation2 + $0xac] sm:$0xf]
      %v1129 = vld [vmem:[#allocation2 + $0xb4] sm:$0xf]
      %v1130 = vld [vmem:[#allocation2 + $0xb8] sm:$0xf]
      %v1131 = vld [vmem:[#allocation2 + $0x8] sm:$0x1]
      %v1132 = vld [vmem:[#allocation2 + $0x14] sm:$0x1]
      %v1133 = vld [vmem:[#allocation2 + $0x20] sm:$0x1]
      %v1134 = vld [vmem:[#allocation2 + $0x2c] sm:$0x1]
      %v1135 = vld [vmem:[#allocation2 + $0x38] sm:$0x1]
      %v1136 = vld [vmem:[#allocation2 + $0x44] sm:$0x1]
      %v1137 = vld [vmem:[#allocation2 + $0x50] sm:$0x1]
      %v1138 = vld [vmem:[#allocation2 + $0x5c] sm:$0x1]
      %v1139 = vld [vmem:[#allocation2 + $0x68] sm:$0x1]
      %v1140 = vld [vmem:[#allocation2 + $0x74] sm:$0x1]
      %v1141 = vld [vmem:[#allocation2 + $0x80] sm:$0x1]
      %v1142 = vld [vmem:[#allocation2 + $0x8c] sm:$0x1]
      %v1143 = vld [vmem:[#allocation2 + $0x98] sm:$0x1]
      %v1144 = vld [vmem:[#allocation2 + $0xa4] sm:$0x1]
      %v1145 = vld [vmem:[#allocation2 + $0xb0] sm:$0x1]
      %v1146 = vld [vmem:[#allocation2 + $0xbc] sm:$0x1]
      %v1147 = vld [vmem:[#allocation2] sm:$0xe]
      %v1148 = vld [vmem:[#allocation2 + $0xc] sm:$0xe]
      %v1149 = vld [vmem:[#allocation2 + $0x18] sm:$0xe]
      %v1150 = vld [vmem:[#allocation2 + $0x24] sm:$0xe]
      %v1151 = vld [vmem:[#allocation2 + $0x30] sm:$0xe]
      %v1152 = vld [vmem:[#allocation2 + $0x3c] sm:$0xe]
      %v1153 = vld [vmem:[#allocation2 + $0x48] sm:$0xe]
      %v1154 = vld [vmem:[#allocation2 + $0x54] sm:$0xe]
      %v1155 = vld [vmem:[#allocation2 + $0x60] sm:$0xe]
      %v1156 = vld [vmem:[#allocation2 + $0x6c] sm:$0xe]
      %v1157 = vld [vmem:[#allocation2 + $0x78] sm:$0xe]
      %v1158 = vld [vmem:[#allocation2 + $0x84] sm:$0xe]
      %v1159 = vld [vmem:[#allocation2 + $0x90] sm:$0xe]
      %v1160 = vld [vmem:[#allocation2 + $0x9c] sm:$0xe]
      %v1161 = vld [vmem:[#allocation2 + $0xa8] sm:$0xe]
      %v1162 = vld [vmem:[#allocation2 + $0xb4] sm:$0xe]
      %v1163 = vld [vmem:[%s984] sm:$0xf]
      %v1164 = vld [vmem:[%s984 + $0x4] sm:$0xf]
      %v1165 = vld [vmem:[%s984 + $0xc] sm:$0xf]
      %v1166 = vld [vmem:[%s984 + $0x10] sm:$0xf]
      %v1167 = vld [vmem:[%s984 + $0x18] sm:$0xf]
      %v1168 = vld [vmem:[%s984 + $0x1c] sm:$0xf]
      %v1169 = vld [vmem:[%s984 + $0x24] sm:$0xf]
      %v1170 = vld [vmem:[%s984 + $0x28] sm:$0xf]
      %v1171 = vld [vmem:[%s984 + $0x30] sm:$0xf]
      %v1172 = vld [vmem:[%s984 + $0x34] sm:$0xf]
      %v1173 = vld [vmem:[%s984 + $0x3c] sm:$0xf]
      %v1174 = vld [vmem:[%s984 + $0x40] sm:$0xf]
      %v1175 = vld [vmem:[%s984 + $0x48] sm:$0xf]
      %v1176 = vld [vmem:[%s984 + $0x4c] sm:$0xf]
      %v1177 = vld [vmem:[%s984 + $0x54] sm:$0xf]
      %v1178 = vld [vmem:[%s984 + $0x58] sm:$0xf]
      %v1179 = vld [vmem:[%s984 + $0x60] sm:$0xf]
      %v1180 = vld [vmem:[%s984 + $0x64] sm:$0xf]
      %v1181 = vld [vmem:[%s984 + $0x6c] sm:$0xf]
      %v1182 = vld [vmem:[%s984 + $0x70] sm:$0xf]
      %v1183 = vld [vmem:[%s984 + $0x78] sm:$0xf]
      %v1184 = vld [vmem:[%s984 + $0x7c] sm:$0xf]
      %v1185 = vld [vmem:[%s984 + $0x84] sm:$0xf]
      %v1186 = vld [vmem:[%s984 + $0x88] sm:$0xf]
      %v1187 = vld [vmem:[%s984 + $0x90] sm:$0xf]
      %v1188 = vld [vmem:[%s984 + $0x94] sm:$0xf]
      %v1189 = vld [vmem:[%s984 + $0x9c] sm:$0xf]
      %v1190 = vld [vmem:[%s984 + $0xa0] sm:$0xf]
      %v1191 = vld [vmem:[%s984 + $0xa8] sm:$0xf]
      %v1192 = vld [vmem:[%s984 + $0xac] sm:$0xf]
      %v1193 = vld [vmem:[%s984 + $0xb4] sm:$0xf]
      %v1194 = vld [vmem:[%s984 + $0xb8] sm:$0xf]
      %v1195 = vld [vmem:[%s984 + $0x8] sm:$0x1]
      %v1196 = vld [vmem:[%s984 + $0x14] sm:$0x1]
      %v1197 = vld [vmem:[%s984 + $0x20] sm:$0x1]
      %v1198 = vld [vmem:[%s984 + $0x2c] sm:$0x1]
      %v1199 = vld [vmem:[%s984 + $0x38] sm:$0x1]
      %v1200 = vld [vmem:[%s984 + $0x44] sm:$0x1]
      %v1201 = vld [vmem:[%s984 + $0x50] sm:$0x1]
      %v1202 = vld [vmem:[%s984 + $0x5c] sm:$0x1]
      %v1203 = vld [vmem:[%s984 + $0x68] sm:$0x1]
      %v1204 = vld [vmem:[%s984 + $0x74] sm:$0x1]
      %v1205 = vld [vmem:[%s984 + $0x80] sm:$0x1]
      %v1206 = vld [vmem:[%s984 + $0x8c] sm:$0x1]
      %v1207 = vld [vmem:[%s984 + $0x98] sm:$0x1]
      %v1208 = vld [vmem:[%s984 + $0xa4] sm:$0x1]
      %v1209 = vld [vmem:[%s984 + $0xb0] sm:$0x1]
      %v1210 = vld [vmem:[%s984 + $0xbc] sm:$0x1]
      %v1211 = vld [vmem:[%s984] sm:$0xe]
      %v1212 = vld [vmem:[%s984 + $0xc] sm:$0xe]
      %v1213 = vld [vmem:[%s984 + $0x18] sm:$0xe]
      %v1214 = vld [vmem:[%s984 + $0x24] sm:$0xe]
      %v1215 = vld [vmem:[%s984 + $0x30] sm:$0xe]
      %v1216 = vld [vmem:[%s984 + $0x3c] sm:$0xe]
      %v1217 = vld [vmem:[%s984 + $0x48] sm:$0xe]
      %v1218 = vld [vmem:[%s984 + $0x54] sm:$0xe]
      %v1219 = vld [vmem:[%s984 + $0x60] sm:$0xe]
      %v1220 = vld [vmem:[%s984 + $0x6c] sm:$0xe]
      %v1221 = vld [vmem:[%s984 + $0x78] sm:$0xe]
      %v1222 = vld [vmem:[%s984 + $0x84] sm:$0xe]
      %v1223 = vld [vmem:[%s984 + $0x90] sm:$0xe]
      %v1224 = vld [vmem:[%s984 + $0x9c] sm:$0xe]
      %v1225 = vld [vmem:[%s984 + $0xa8] sm:$0xe]
      %v1226 = vld [vmem:[%s984 + $0xb4] sm:$0xe]
      %s1227 = scalar_lea.vmem [#allocation2], 24
      %v1228 = vld [vmem:[%s1227] sm:$0xf]
      %v1229 = vld [vmem:[%s1227 + $0x4] sm:$0xf]
      %v1230 = vld [vmem:[%s1227 + $0xc] sm:$0xf]
      %v1231 = vld [vmem:[%s1227 + $0x10] sm:$0xf]
      %v1232 = vld [vmem:[%s1227 + $0x18] sm:$0xf]
      %v1233 = vld [vmem:[%s1227 + $0x1c] sm:$0xf]
      %v1234 = vld [vmem:[%s1227 + $0x24] sm:$0xf]
      %v1235 = vld [vmem:[%s1227 + $0x28] sm:$0xf]
      %v1236 = vld [vmem:[%s1227 + $0x30] sm:$0xf]
      %v1237 = vld [vmem:[%s1227 + $0x34] sm:$0xf]
      %v1238 = vld [vmem:[%s1227 + $0x3c] sm:$0xf]
      %v1239 = vld [vmem:[%s1227 + $0x40] sm:$0xf]
      %v1240 = vld [vmem:[%s1227 + $0x48] sm:$0xf]
      %v1241 = vld [vmem:[%s1227 + $0x4c] sm:$0xf]
      %v1242 = vld [vmem:[%s1227 + $0x54] sm:$0xf]
      %v1243 = vld [vmem:[%s1227 + $0x58] sm:$0xf]
      %v1244 = vld [vmem:[%s1227 + $0x60] sm:$0xf]
      %v1245 = vld [vmem:[%s1227 + $0x64] sm:$0xf]
      %v1246 = vld [vmem:[%s1227 + $0x6c] sm:$0xf]
      %v1247 = vld [vmem:[%s1227 + $0x70] sm:$0xf]
      %v1248 = vld [vmem:[%s1227 + $0x78] sm:$0xf]
      %v1249 = vld [vmem:[%s1227 + $0x7c] sm:$0xf]
      %v1250 = vld [vmem:[%s1227 + $0x84] sm:$0xf]
      %v1251 = vld [vmem:[%s1227 + $0x88] sm:$0xf]
      %v1252 = vld [vmem:[%s1227 + $0x90] sm:$0xf]
      %v1253 = vld [vmem:[%s1227 + $0x94] sm:$0xf]
      %v1254 = vld [vmem:[%s1227 + $0x9c] sm:$0xf]
      %v1255 = vld [vmem:[%s1227 + $0xa0] sm:$0xf]
      %v1256 = vld [vmem:[%s1227 + $0xa8] sm:$0xf]
      %v1257 = vld [vmem:[%s1227 + $0xac] sm:$0xf]
      %v1258 = vld [vmem:[%s1227 + $0xb4] sm:$0xf]
      %v1259 = vld [vmem:[%s1227 + $0xb8] sm:$0xf]
      %v1260 = vld [vmem:[%s1227 + $0x8] sm:$0x1]
      %v1261 = vld [vmem:[%s1227 + $0x14] sm:$0x1]
      %v1262 = vld [vmem:[%s1227 + $0x20] sm:$0x1]
      %v1263 = vld [vmem:[%s1227 + $0x2c] sm:$0x1]
      %v1264 = vld [vmem:[%s1227 + $0x38] sm:$0x1]
      %v1265 = vld [vmem:[%s1227 + $0x44] sm:$0x1]
      %v1266 = vld [vmem:[%s1227 + $0x50] sm:$0x1]
      %v1267 = vld [vmem:[%s1227 + $0x5c] sm:$0x1]
      %v1268 = vld [vmem:[%s1227 + $0x68] sm:$0x1]
      %v1269 = vld [vmem:[%s1227 + $0x74] sm:$0x1]
      %v1270 = vld [vmem:[%s1227 + $0x80] sm:$0x1]
      %v1271 = vld [vmem:[%s1227 + $0x8c] sm:$0x1]
      %v1272 = vld [vmem:[%s1227 + $0x98] sm:$0x1]
      %v1273 = vld [vmem:[%s1227 + $0xa4] sm:$0x1]
      %v1274 = vld [vmem:[%s1227 + $0xb0] sm:$0x1]
      %v1275 = vld [vmem:[%s1227 + $0xbc] sm:$0x1]
      %v1276 = vld [vmem:[%s1227] sm:$0xe]
      %v1277 = vld [vmem:[%s1227 + $0xc] sm:$0xe]
      %v1278 = vld [vmem:[%s1227 + $0x18] sm:$0xe]
      %v1279 = vld [vmem:[%s1227 + $0x24] sm:$0xe]
      %v1280 = vld [vmem:[%s1227 + $0x30] sm:$0xe]
      %v1281 = vld [vmem:[%s1227 + $0x3c] sm:$0xe]
      %v1282 = vld [vmem:[%s1227 + $0x48] sm:$0xe]
      %v1283 = vld [vmem:[%s1227 + $0x54] sm:$0xe]
      %v1284 = vld [vmem:[%s1227 + $0x60] sm:$0xe]
      %v1285 = vld [vmem:[%s1227 + $0x6c] sm:$0xe]
      %v1286 = vld [vmem:[%s1227 + $0x78] sm:$0xe]
      %v1287 = vld [vmem:[%s1227 + $0x84] sm:$0xe]
      %v1288 = vld [vmem:[%s1227 + $0x90] sm:$0xe]
      %v1289 = vld [vmem:[%s1227 + $0x9c] sm:$0xe]
      %v1290 = vld [vmem:[%s1227 + $0xa8] sm:$0xe]
      %v1291 = vld [vmem:[%s1227 + $0xb4] sm:$0xe]
      %v1324 = vunpack.c.l.b16 %v1099
      %v1325 = vunpack.c.l.b16 %v1100
      %v1326 = vunpack.c.l.b16 %v1101
      %v1327 = vunpack.c.l.b16 %v1102
      %v1328 = vunpack.c.l.b16 %v1103
      %v1329 = vunpack.c.l.b16 %v1104
      %v1330 = vunpack.c.l.b16 %v1105
      %v1331 = vunpack.c.l.b16 %v1106
      %v1332 = vunpack.c.l.b16 %v1107
      %v1333 = vunpack.c.l.b16 %v1108
      %v1334 = vunpack.c.l.b16 %v1109
      %v1335 = vunpack.c.l.b16 %v1110
      %v1336 = vunpack.c.l.b16 %v1111
      %v1337 = vunpack.c.l.b16 %v1112
      %v1338 = vunpack.c.l.b16 %v1113
      %v1339 = vunpack.c.l.b16 %v1114
      %v1340 = vunpack.c.l.b16 %v1115
      %v1341 = vunpack.c.l.b16 %v1116
      %v1342 = vunpack.c.l.b16 %v1117
      %v1343 = vunpack.c.l.b16 %v1118
      %v1344 = vunpack.c.l.b16 %v1119
      %v1345 = vunpack.c.l.b16 %v1120
      %v1346 = vunpack.c.l.b16 %v1121
      %v1347 = vunpack.c.l.b16 %v1122
      %v1348 = vunpack.c.l.b16 %v1123
      %v1349 = vunpack.c.l.b16 %v1124
      %v1350 = vunpack.c.l.b16 %v1125
      %v1351 = vunpack.c.l.b16 %v1126
      %v1352 = vunpack.c.l.b16 %v1127
      %v1353 = vunpack.c.l.b16 %v1128
      %v1354 = vunpack.c.l.b16 %v1129
      %v1355 = vunpack.c.l.b16 %v1130
      %v1356 = vpack.c.b16 %v1325, %v1324
      %v1357 = vpack.c.b16 %v1327, %v1326
      %v1358 = vpack.c.b16 %v1329, %v1328
      %v1359 = vpack.c.b16 %v1331, %v1330
      %v1360 = vpack.c.b16 %v1333, %v1332
      %v1361 = vpack.c.b16 %v1335, %v1334
      %v1362 = vpack.c.b16 %v1337, %v1336
      %v1363 = vpack.c.b16 %v1339, %v1338
      %v1364 = vpack.c.b16 %v1341, %v1340
      %v1365 = vpack.c.b16 %v1343, %v1342
      %v1366 = vpack.c.b16 %v1345, %v1344
      %v1367 = vpack.c.b16 %v1347, %v1346
      %v1368 = vpack.c.b16 %v1349, %v1348
      %v1369 = vpack.c.b16 %v1351, %v1350
      %v1370 = vpack.c.b16 %v1353, %v1352
      %v1371 = vpack.c.b16 %v1355, %v1354
      %v1388 = vunpack.c.l.b16 %v1131
      %v1389 = vunpack.c.l.b16 %v1132
      %v1390 = vunpack.c.l.b16 %v1133
      %v1391 = vunpack.c.l.b16 %v1134
      %v1392 = vunpack.c.l.b16 %v1135
      %v1393 = vunpack.c.l.b16 %v1136
      %v1394 = vunpack.c.l.b16 %v1137
      %v1395 = vunpack.c.l.b16 %v1138
      %v1396 = vunpack.c.l.b16 %v1139
      %v1397 = vunpack.c.l.b16 %v1140
      %v1398 = vunpack.c.l.b16 %v1141
      %v1399 = vunpack.c.l.b16 %v1142
      %v1400 = vunpack.c.l.b16 %v1143
      %v1401 = vunpack.c.l.b16 %v1144
      %v1402 = vunpack.c.l.b16 %v1145
      %v1403 = vunpack.c.l.b16 %v1146
      %v1404 = vpack.c.b16 %v1388, %v1388
      %v1405 = vpack.c.b16 %v1389, %v1389
      %v1406 = vpack.c.b16 %v1390, %v1390
      %v1407 = vpack.c.b16 %v1391, %v1391
      %v1408 = vpack.c.b16 %v1392, %v1392
      %v1409 = vpack.c.b16 %v1393, %v1393
      %v1410 = vpack.c.b16 %v1394, %v1394
      %v1411 = vpack.c.b16 %v1395, %v1395
      %v1412 = vpack.c.b16 %v1396, %v1396
      %v1413 = vpack.c.b16 %v1397, %v1397
      %v1414 = vpack.c.b16 %v1398, %v1398
      %v1415 = vpack.c.b16 %v1399, %v1399
      %v1416 = vpack.c.b16 %v1400, %v1400
      %v1417 = vpack.c.b16 %v1401, %v1401
      %v1418 = vpack.c.b16 %v1402, %v1402
      %v1419 = vpack.c.b16 %v1403, %v1403
      %vm1420 = vsmask.f32 7424
      %v1422 = vshrl.u32 %v1356, 16
      %v1424 = vshll.u32 %v1356, 16
      %v1426 = vrot.slane %v1424, 1
      %v1427 = vor.u32 %v1422, %v1426
      %v1429 = vshll.u32 %v1404, 16
      %v1431 = vrot.slane %v1429, 1
      %v1432 = vsel %vm1420, %v1427, %v1431
      %v1434 = vshrl.u32 %v1357, 16
      %v1436 = vshll.u32 %v1357, 16
      %v1438 = vrot.slane %v1436, 1
      %v1439 = vor.u32 %v1434, %v1438
      %v1441 = vshll.u32 %v1405, 16
      %v1443 = vrot.slane %v1441, 1
      %v1444 = vsel %vm1420, %v1439, %v1443
      %v1446 = vshrl.u32 %v1358, 16
      %v1448 = vshll.u32 %v1358, 16
      %v1450 = vrot.slane %v1448, 1
      %v1451 = vor.u32 %v1446, %v1450
      %v1453 = vshll.u32 %v1406, 16
      %v1455 = vrot.slane %v1453, 1
      %v1456 = vsel %vm1420, %v1451, %v1455
      %v1458 = vshrl.u32 %v1359, 16
      %v1460 = vshll.u32 %v1359, 16
      %v1462 = vrot.slane %v1460, 1
      %v1463 = vor.u32 %v1458, %v1462
      %v1465 = vshll.u32 %v1407, 16
      %v1467 = vrot.slane %v1465, 1
      %v1468 = vsel %vm1420, %v1463, %v1467
      %v1470 = vshrl.u32 %v1360, 16
      %v1472 = vshll.u32 %v1360, 16
      %v1474 = vrot.slane %v1472, 1
      %v1475 = vor.u32 %v1470, %v1474
      %v1477 = vshll.u32 %v1408, 16
      %v1479 = vrot.slane %v1477, 1
      %v1480 = vsel %vm1420, %v1475, %v1479
      %v1482 = vshrl.u32 %v1361, 16
      %v1484 = vshll.u32 %v1361, 16
      %v1486 = vrot.slane %v1484, 1
      %v1487 = vor.u32 %v1482, %v1486
      %v1489 = vshll.u32 %v1409, 16
      %v1491 = vrot.slane %v1489, 1
      %v1492 = vsel %vm1420, %v1487, %v1491
      %v1494 = vshrl.u32 %v1362, 16
      %v1496 = vshll.u32 %v1362, 16
      %v1498 = vrot.slane %v1496, 1
      %v1499 = vor.u32 %v1494, %v1498
      %v1501 = vshll.u32 %v1410, 16
      %v1503 = vrot.slane %v1501, 1
      %v1504 = vsel %vm1420, %v1499, %v1503
      %v1506 = vshrl.u32 %v1363, 16
      %v1508 = vshll.u32 %v1363, 16
      %v1510 = vrot.slane %v1508, 1
      %v1511 = vor.u32 %v1506, %v1510
      %v1513 = vshll.u32 %v1411, 16
      %v1515 = vrot.slane %v1513, 1
      %v1516 = vsel %vm1420, %v1511, %v1515
      %v1518 = vshrl.u32 %v1364, 16
      %v1520 = vshll.u32 %v1364, 16
      %v1522 = vrot.slane %v1520, 1
      %v1523 = vor.u32 %v1518, %v1522
      %v1525 = vshll.u32 %v1412, 16
      %v1527 = vrot.slane %v1525, 1
      %v1528 = vsel %vm1420, %v1523, %v1527
      %v1530 = vshrl.u32 %v1365, 16
      %v1532 = vshll.u32 %v1365, 16
      %v1534 = vrot.slane %v1532, 1
      %v1535 = vor.u32 %v1530, %v1534
      %v1537 = vshll.u32 %v1413, 16
      %v1539 = vrot.slane %v1537, 1
      %v1540 = vsel %vm1420, %v1535, %v1539
      %v1542 = vshrl.u32 %v1366, 16
      %v1544 = vshll.u32 %v1366, 16
      %v1546 = vrot.slane %v1544, 1
      %v1547 = vor.u32 %v1542, %v1546
      %v1549 = vshll.u32 %v1414, 16
      %v1551 = vrot.slane %v1549, 1
      %v1552 = vsel %vm1420, %v1547, %v1551
      %v1554 = vshrl.u32 %v1367, 16
      %v1556 = vshll.u32 %v1367, 16
      %v1558 = vrot.slane %v1556, 1
      %v1559 = vor.u32 %v1554, %v1558
      %v1561 = vshll.u32 %v1415, 16
      %v1563 = vrot.slane %v1561, 1
      %v1564 = vsel %vm1420, %v1559, %v1563
      %v1566 = vshrl.u32 %v1368, 16
      %v1568 = vshll.u32 %v1368, 16
      %v1570 = vrot.slane %v1568, 1
      %v1571 = vor.u32 %v1566, %v1570
      %v1573 = vshll.u32 %v1416, 16
      %v1575 = vrot.slane %v1573, 1
      %v1576 = vsel %vm1420, %v1571, %v1575
      %v1578 = vshrl.u32 %v1369, 16
      %v1580 = vshll.u32 %v1369, 16
      %v1582 = vrot.slane %v1580, 1
      %v1583 = vor.u32 %v1578, %v1582
      %v1585 = vshll.u32 %v1417, 16
      %v1587 = vrot.slane %v1585, 1
      %v1588 = vsel %vm1420, %v1583, %v1587
      %v1590 = vshrl.u32 %v1370, 16
      %v1592 = vshll.u32 %v1370, 16
      %v1594 = vrot.slane %v1592, 1
      %v1595 = vor.u32 %v1590, %v1594
      %v1597 = vshll.u32 %v1418, 16
      %v1599 = vrot.slane %v1597, 1
      %v1600 = vsel %vm1420, %v1595, %v1599
      %v1602 = vshrl.u32 %v1371, 16
      %v1604 = vshll.u32 %v1371, 16
      %v1606 = vrot.slane %v1604, 1
      %v1607 = vor.u32 %v1602, %v1606
      %v1609 = vshll.u32 %v1419, 16
      %v1611 = vrot.slane %v1609, 1
      %v1612 = vsel %vm1420, %v1607, %v1611
      %1613 = vrot.lane.b32.xlu0 %v1432, 32
      %v1614 = vpop.permute.xlu0 %1613
      %1615 = vrot.lane.b32.xlu0 %v1444, 32
      %v1616 = vpop.permute.xlu0 %1615
      %1617 = vrot.lane.b32.xlu0 %v1456, 32
      %v1618 = vpop.permute.xlu0 %1617
      %1619 = vrot.lane.b32.xlu0 %v1468, 32
      %v1620 = vpop.permute.xlu0 %1619
      %1621 = vrot.lane.b32.xlu0 %v1480, 32
      %v1622 = vpop.permute.xlu0 %1621
      %1623 = vrot.lane.b32.xlu0 %v1492, 32
      %v1624 = vpop.permute.xlu0 %1623
      %1625 = vrot.lane.b32.xlu0 %v1504, 32
      %v1626 = vpop.permute.xlu0 %1625
      %1627 = vrot.lane.b32.xlu0 %v1516, 32
      %v1628 = vpop.permute.xlu0 %1627
      %1629 = vrot.lane.b32.xlu0 %v1528, 32
      %v1630 = vpop.permute.xlu0 %1629
      %1631 = vrot.lane.b32.xlu0 %v1540, 32
      %v1632 = vpop.permute.xlu0 %1631
      %1633 = vrot.lane.b32.xlu0 %v1552, 32
      %v1634 = vpop.permute.xlu0 %1633
      %1635 = vrot.lane.b32.xlu0 %v1564, 32
      %v1636 = vpop.permute.xlu0 %1635
      %1637 = vrot.lane.b32.xlu0 %v1576, 32
      %v1638 = vpop.permute.xlu0 %1637
      %1639 = vrot.lane.b32.xlu0 %v1588, 32
      %v1640 = vpop.permute.xlu0 %1639
      %1641 = vrot.lane.b32.xlu0 %v1600, 32
      %v1642 = vpop.permute.xlu0 %1641
      %1643 = vrot.lane.b32.xlu0 %v1612, 32
      %v1644 = vpop.permute.xlu0 %1643
      %v1661 = vunpack.c.l.b16 %v1147
      %v1662 = vunpack.c.l.b16 %v1148
      %v1663 = vunpack.c.l.b16 %v1149
      %v1664 = vunpack.c.l.b16 %v1150
      %v1665 = vunpack.c.l.b16 %v1151
      %v1666 = vunpack.c.l.b16 %v1152
      %v1667 = vunpack.c.l.b16 %v1153
      %v1668 = vunpack.c.l.b16 %v1154
      %v1669 = vunpack.c.l.b16 %v1155
      %v1670 = vunpack.c.l.b16 %v1156
      %v1671 = vunpack.c.l.b16 %v1157
      %v1672 = vunpack.c.l.b16 %v1158
      %v1673 = vunpack.c.l.b16 %v1159
      %v1674 = vunpack.c.l.b16 %v1160
      %v1675 = vunpack.c.l.b16 %v1161
      %v1676 = vunpack.c.l.b16 %v1162
      %v1677 = vpack.c.b16 %v1325, %v1661
      %v1678 = vpack.c.b16 %v1327, %v1662
      %v1679 = vpack.c.b16 %v1329, %v1663
      %v1680 = vpack.c.b16 %v1331, %v1664
      %v1681 = vpack.c.b16 %v1333, %v1665
      %v1682 = vpack.c.b16 %v1335, %v1666
      %v1683 = vpack.c.b16 %v1337, %v1667
      %v1684 = vpack.c.b16 %v1339, %v1668
      %v1685 = vpack.c.b16 %v1341, %v1669
      %v1686 = vpack.c.b16 %v1343, %v1670
      %v1687 = vpack.c.b16 %v1345, %v1671
      %v1688 = vpack.c.b16 %v1347, %v1672
      %v1689 = vpack.c.b16 %v1349, %v1673
      %v1690 = vpack.c.b16 %v1351, %v1674
      %v1691 = vpack.c.b16 %v1353, %v1675
      %v1692 = vpack.c.b16 %v1355, %v1676
      %vm1693 = vcmask 1046528
      %v1694 = vrot.slane %v1677, 1
      %v1695 = vrot.slane %v1404, 1
      %v1696 = vsel %vm1693, %v1694, %v1695
      %v1697 = vrot.slane %v1678, 1
      %v1698 = vrot.slane %v1405, 1
      %v1699 = vsel %vm1693, %v1697, %v1698
      %v1700 = vrot.slane %v1679, 1
      %v1701 = vrot.slane %v1406, 1
      %v1702 = vsel %vm1693, %v1700, %v1701
      %v1703 = vrot.slane %v1680, 1
      %v1704 = vrot.slane %v1407, 1
      %v1705 = vsel %vm1693, %v1703, %v1704
      %v1706 = vrot.slane %v1681, 1
      %v1707 = vrot.slane %v1408, 1
      %v1708 = vsel %vm1693, %v1706, %v1707
      %v1709 = vrot.slane %v1682, 1
      %v1710 = vrot.slane %v1409, 1
      %v1711 = vsel %vm1693, %v1709, %v1710
      %v1712 = vrot.slane %v1683, 1
      %v1713 = vrot.slane %v1410, 1
      %v1714 = vsel %vm1693, %v1712, %v1713
      %v1715 = vrot.slane %v1684, 1
      %v1716 = vrot.slane %v1411, 1
      %v1717 = vsel %vm1693, %v1715, %v1716
      %v1718 = vrot.slane %v1685, 1
      %v1719 = vrot.slane %v1412, 1
      %v1720 = vsel %vm1693, %v1718, %v1719
      %v1721 = vrot.slane %v1686, 1
      %v1722 = vrot.slane %v1413, 1
      %v1723 = vsel %vm1693, %v1721, %v1722
      %v1724 = vrot.slane %v1687, 1
      %v1725 = vrot.slane %v1414, 1
      %v1726 = vsel %vm1693, %v1724, %v1725
      %v1727 = vrot.slane %v1688, 1
      %v1728 = vrot.slane %v1415, 1
      %v1729 = vsel %vm1693, %v1727, %v1728
      %v1730 = vrot.slane %v1689, 1
      %v1731 = vrot.slane %v1416, 1
      %v1732 = vsel %vm1693, %v1730, %v1731
      %v1733 = vrot.slane %v1690, 1
      %v1734 = vrot.slane %v1417, 1
      %v1735 = vsel %vm1693, %v1733, %v1734
      %v1736 = vrot.slane %v1691, 1
      %v1737 = vrot.slane %v1418, 1
      %v1738 = vsel %vm1693, %v1736, %v1737
      %v1739 = vrot.slane %v1692, 1
      %v1740 = vrot.slane %v1419, 1
      %v1741 = vsel %vm1693, %v1739, %v1740
      %1742 = vrot.lane.b32.xlu0 %v1696, 64
      %v1743 = vpop.permute.xlu0 %1742
      %1744 = vrot.lane.b32.xlu0 %v1699, 64
      %v1745 = vpop.permute.xlu0 %1744
      %1746 = vrot.lane.b32.xlu0 %v1702, 64
      %v1747 = vpop.permute.xlu0 %1746
      %1748 = vrot.lane.b32.xlu0 %v1705, 64
      %v1749 = vpop.permute.xlu0 %1748
      %1750 = vrot.lane.b32.xlu0 %v1708, 64
      %v1751 = vpop.permute.xlu0 %1750
      %1752 = vrot.lane.b32.xlu0 %v1711, 64
      %v1753 = vpop.permute.xlu0 %1752
      %1754 = vrot.lane.b32.xlu0 %v1714, 64
      %v1755 = vpop.permute.xlu0 %1754
      %1756 = vrot.lane.b32.xlu0 %v1717, 64
      %v1757 = vpop.permute.xlu0 %1756
      %1758 = vrot.lane.b32.xlu0 %v1720, 64
      %v1759 = vpop.permute.xlu0 %1758
      %1760 = vrot.lane.b32.xlu0 %v1723, 64
      %v1761 = vpop.permute.xlu0 %1760
      %1762 = vrot.lane.b32.xlu0 %v1726, 64
      %v1763 = vpop.permute.xlu0 %1762
      %1764 = vrot.lane.b32.xlu0 %v1729, 64
      %v1765 = vpop.permute.xlu0 %1764
      %1766 = vrot.lane.b32.xlu0 %v1732, 64
      %v1767 = vpop.permute.xlu0 %1766
      %1768 = vrot.lane.b32.xlu0 %v1735, 64
      %v1769 = vpop.permute.xlu0 %1768
      %1770 = vrot.lane.b32.xlu0 %v1738, 64
      %v1771 = vpop.permute.xlu0 %1770
      %1772 = vrot.lane.b32.xlu0 %v1741, 64
      %v1773 = vpop.permute.xlu0 %1772
      %v1806 = vunpack.c.l.b16 %v1163
      %v1807 = vunpack.c.l.b16 %v1164
      %v1808 = vunpack.c.l.b16 %v1165
      %v1809 = vunpack.c.l.b16 %v1166
      %v1810 = vunpack.c.l.b16 %v1167
      %v1811 = vunpack.c.l.b16 %v1168
      %v1812 = vunpack.c.l.b16 %v1169
      %v1813 = vunpack.c.l.b16 %v1170
      %v1814 = vunpack.c.l.b16 %v1171
      %v1815 = vunpack.c.l.b16 %v1172
      %v1816 = vunpack.c.l.b16 %v1173
      %v1817 = vunpack.c.l.b16 %v1174
      %v1818 = vunpack.c.l.b16 %v1175
      %v1819 = vunpack.c.l.b16 %v1176
      %v1820 = vunpack.c.l.b16 %v1177
      %v1821 = vunpack.c.l.b16 %v1178
      %v1822 = vunpack.c.l.b16 %v1179
      %v1823 = vunpack.c.l.b16 %v1180
      %v1824 = vunpack.c.l.b16 %v1181
      %v1825 = vunpack.c.l.b16 %v1182
      %v1826 = vunpack.c.l.b16 %v1183
      %v1827 = vunpack.c.l.b16 %v1184
      %v1828 = vunpack.c.l.b16 %v1185
      %v1829 = vunpack.c.l.b16 %v1186
      %v1830 = vunpack.c.l.b16 %v1187
      %v1831 = vunpack.c.l.b16 %v1188
      %v1832 = vunpack.c.l.b16 %v1189
      %v1833 = vunpack.c.l.b16 %v1190
      %v1834 = vunpack.c.l.b16 %v1191
      %v1835 = vunpack.c.l.b16 %v1192
      %v1836 = vunpack.c.l.b16 %v1193
      %v1837 = vunpack.c.l.b16 %v1194
      %v1838 = vpack.c.b16 %v1807, %v1806
      %v1839 = vpack.c.b16 %v1809, %v1808
      %v1840 = vpack.c.b16 %v1811, %v1810
      %v1841 = vpack.c.b16 %v1813, %v1812
      %v1842 = vpack.c.b16 %v1815, %v1814
      %v1843 = vpack.c.b16 %v1817, %v1816
      %v1844 = vpack.c.b16 %v1819, %v1818
      %v1845 = vpack.c.b16 %v1821, %v1820
      %v1846 = vpack.c.b16 %v1823, %v1822
      %v1847 = vpack.c.b16 %v1825, %v1824
      %v1848 = vpack.c.b16 %v1827, %v1826
      %v1849 = vpack.c.b16 %v1829, %v1828
      %v1850 = vpack.c.b16 %v1831, %v1830
      %v1851 = vpack.c.b16 %v1833, %v1832
      %v1852 = vpack.c.b16 %v1835, %v1834
      %v1853 = vpack.c.b16 %v1837, %v1836
      %1854 = vrot.lane.b32.xlu0 %v1838, 96
      %v1855 = vpop.permute.xlu0 %1854
      %1856 = vrot.lane.b32.xlu0 %v1839, 96
      %v1857 = vpop.permute.xlu0 %1856
      %1858 = vrot.lane.b32.xlu0 %v1840, 96
      %v1859 = vpop.permute.xlu0 %1858
      %1860 = vrot.lane.b32.xlu0 %v1841, 96
      %v1861 = vpop.permute.xlu0 %1860
      %1862 = vrot.lane.b32.xlu0 %v1842, 96
      %v1863 = vpop.permute.xlu0 %1862
      %1864 = vrot.lane.b32.xlu0 %v1843, 96
      %v1865 = vpop.permute.xlu0 %1864
      %1866 = vrot.lane.b32.xlu0 %v1844, 96
      %v1867 = vpop.permute.xlu0 %1866
      %1868 = vrot.lane.b32.xlu0 %v1845, 96
      %v1869 = vpop.permute.xlu0 %1868
      %1870 = vrot.lane.b32.xlu0 %v1846, 96
      %v1871 = vpop.permute.xlu0 %1870
      %1872 = vrot.lane.b32.xlu0 %v1847, 96
      %v1873 = vpop.permute.xlu0 %1872
      %1874 = vrot.lane.b32.xlu0 %v1848, 96
      %v1875 = vpop.permute.xlu0 %1874
      %1876 = vrot.lane.b32.xlu0 %v1849, 96
      %v1877 = vpop.permute.xlu0 %1876
      %1878 = vrot.lane.b32.xlu0 %v1850, 96
      %v1879 = vpop.permute.xlu0 %1878
      %1880 = vrot.lane.b32.xlu0 %v1851, 96
      %v1881 = vpop.permute.xlu0 %1880
      %1882 = vrot.lane.b32.xlu0 %v1852, 96
      %v1883 = vpop.permute.xlu0 %1882
      %1884 = vrot.lane.b32.xlu0 %v1853, 96
      %v1885 = vpop.permute.xlu0 %1884
      %v1902 = vunpack.c.l.b16 %v1195
      %v1903 = vunpack.c.l.b16 %v1196
      %v1904 = vunpack.c.l.b16 %v1197
      %v1905 = vunpack.c.l.b16 %v1198
      %v1906 = vunpack.c.l.b16 %v1199
      %v1907 = vunpack.c.l.b16 %v1200
      %v1908 = vunpack.c.l.b16 %v1201
      %v1909 = vunpack.c.l.b16 %v1202
      %v1910 = vunpack.c.l.b16 %v1203
      %v1911 = vunpack.c.l.b16 %v1204
      %v1912 = vunpack.c.l.b16 %v1205
      %v1913 = vunpack.c.l.b16 %v1206
      %v1914 = vunpack.c.l.b16 %v1207
      %v1915 = vunpack.c.l.b16 %v1208
      %v1916 = vunpack.c.l.b16 %v1209
      %v1917 = vunpack.c.l.b16 %v1210
      %v1918 = vpack.c.b16 %v1902, %v1902
      %v1919 = vpack.c.b16 %v1903, %v1903
      %v1920 = vpack.c.b16 %v1904, %v1904
      %v1921 = vpack.c.b16 %v1905, %v1905
      %v1922 = vpack.c.b16 %v1906, %v1906
      %v1923 = vpack.c.b16 %v1907, %v1907
      %v1924 = vpack.c.b16 %v1908, %v1908
      %v1925 = vpack.c.b16 %v1909, %v1909
      %v1926 = vpack.c.b16 %v1910, %v1910
      %v1927 = vpack.c.b16 %v1911, %v1911
      %v1928 = vpack.c.b16 %v1912, %v1912
      %v1929 = vpack.c.b16 %v1913, %v1913
      %v1930 = vpack.c.b16 %v1914, %v1914
      %v1931 = vpack.c.b16 %v1915, %v1915
      %v1932 = vpack.c.b16 %v1916, %v1916
      %v1933 = vpack.c.b16 %v1917, %v1917
      %v1935 = vshrl.u32 %v1838, 16
      %v1937 = vshll.u32 %v1838, 16
      %v1939 = vrot.slane %v1937, 1
      %v1940 = vor.u32 %v1935, %v1939
      %v1942 = vshll.u32 %v1918, 16
      %v1944 = vrot.slane %v1942, 1
      %v1945 = vsel %vm1420, %v1940, %v1944
      %v1947 = vshrl.u32 %v1839, 16
      %v1949 = vshll.u32 %v1839, 16
      %v1951 = vrot.slane %v1949, 1
      %v1952 = vor.u32 %v1947, %v1951
      %v1954 = vshll.u32 %v1919, 16
      %v1956 = vrot.slane %v1954, 1
      %v1957 = vsel %vm1420, %v1952, %v1956
      %v1959 = vshrl.u32 %v1840, 16
      %v1961 = vshll.u32 %v1840, 16
      %v1963 = vrot.slane %v1961, 1
      %v1964 = vor.u32 %v1959, %v1963
      %v1966 = vshll.u32 %v1920, 16
      %v1968 = vrot.slane %v1966, 1
      %v1969 = vsel %vm1420, %v1964, %v1968
      %v1971 = vshrl.u32 %v1841, 16
      %v1973 = vshll.u32 %v1841, 16
      %v1975 = vrot.slane %v1973, 1
      %v1976 = vor.u32 %v1971, %v1975
      %v1978 = vshll.u32 %v1921, 16
      %v1980 = vrot.slane %v1978, 1
      %v1981 = vsel %vm1420, %v1976, %v1980
      %v1983 = vshrl.u32 %v1842, 16
      %v1985 = vshll.u32 %v1842, 16
      %v1987 = vrot.slane %v1985, 1
      %v1988 = vor.u32 %v1983, %v1987
      %v1990 = vshll.u32 %v1922, 16
      %v1992 = vrot.slane %v1990, 1
      %v1993 = vsel %vm1420, %v1988, %v1992
      %v1995 = vshrl.u32 %v1843, 16
      %v1997 = vshll.u32 %v1843, 16
      %v1999 = vrot.slane %v1997, 1
      %v2000 = vor.u32 %v1995, %v1999
      %v2002 = vshll.u32 %v1923, 16
      %v2004 = vrot.slane %v2002, 1
      %v2005 = vsel %vm1420, %v2000, %v2004
      %v2007 = vshrl.u32 %v1844, 16
      %v2009 = vshll.u32 %v1844, 16
      %v2011 = vrot.slane %v2009, 1
      %v2012 = vor.u32 %v2007, %v2011
      %v2014 = vshll.u32 %v1924, 16
      %v2016 = vrot.slane %v2014, 1
      %v2017 = vsel %vm1420, %v2012, %v2016
      %v2019 = vshrl.u32 %v1845, 16
      %v2021 = vshll.u32 %v1845, 16
      %v2023 = vrot.slane %v2021, 1
      %v2024 = vor.u32 %v2019, %v2023
      %v2026 = vshll.u32 %v1925, 16
      %v2028 = vrot.slane %v2026, 1
      %v2029 = vsel %vm1420, %v2024, %v2028
      %v2031 = vshrl.u32 %v1846, 16
      %v2033 = vshll.u32 %v1846, 16
      %v2035 = vrot.slane %v2033, 1
      %v2036 = vor.u32 %v2031, %v2035
      %v2038 = vshll.u32 %v1926, 16
      %v2040 = vrot.slane %v2038, 1
      %v2041 = vsel %vm1420, %v2036, %v2040
      %v2043 = vshrl.u32 %v1847, 16
      %v2045 = vshll.u32 %v1847, 16
      %v2047 = vrot.slane %v2045, 1
      %v2048 = vor.u32 %v2043, %v2047
      %v2050 = vshll.u32 %v1927, 16
      %v2052 = vrot.slane %v2050, 1
      %v2053 = vsel %vm1420, %v2048, %v2052
      %v2055 = vshrl.u32 %v1848, 16
      %v2057 = vshll.u32 %v1848, 16
      %v2059 = vrot.slane %v2057, 1
      %v2060 = vor.u32 %v2055, %v2059
      %v2062 = vshll.u32 %v1928, 16
      %v2064 = vrot.slane %v2062, 1
      %v2065 = vsel %vm1420, %v2060, %v2064
      %v2067 = vshrl.u32 %v1849, 16
      %v2069 = vshll.u32 %v1849, 16
      %v2071 = vrot.slane %v2069, 1
      %v2072 = vor.u32 %v2067, %v2071
      %v2074 = vshll.u32 %v1929, 16
      %v2076 = vrot.slane %v2074, 1
      %v2077 = vsel %vm1420, %v2072, %v2076
      %v2079 = vshrl.u32 %v1850, 16
      %v2081 = vshll.u32 %v1850, 16
      %v2083 = vrot.slane %v2081, 1
      %v2084 = vor.u32 %v2079, %v2083
      %v2086 = vshll.u32 %v1930, 16
      %v2088 = vrot.slane %v2086, 1
      %v2089 = vsel %vm1420, %v2084, %v2088
      %v2091 = vshrl.u32 %v1851, 16
      %v2093 = vshll.u32 %v1851, 16
      %v2095 = vrot.slane %v2093, 1
      %v2096 = vor.u32 %v2091, %v2095
      %v2098 = vshll.u32 %v1931, 16
      %v2100 = vrot.slane %v2098, 1
      %v2101 = vsel %vm1420, %v2096, %v2100
      %v2103 = vshrl.u32 %v1852, 16
      %v2105 = vshll.u32 %v1852, 16
      %v2107 = vrot.slane %v2105, 1
      %v2108 = vor.u32 %v2103, %v2107
      %v2110 = vshll.u32 %v1932, 16
      %v2112 = vrot.slane %v2110, 1
      %v2113 = vsel %vm1420, %v2108, %v2112
      %v2115 = vshrl.u32 %v1853, 16
      %v2117 = vshll.u32 %v1853, 16
      %v2119 = vrot.slane %v2117, 1
      %v2120 = vor.u32 %v2115, %v2119
      %v2122 = vshll.u32 %v1933, 16
      %v2124 = vrot.slane %v2122, 1
      %v2125 = vsel %vm1420, %v2120, %v2124
      %v2142 = vunpack.c.l.b16 %v1211
      %v2143 = vunpack.c.l.b16 %v1212
      %v2144 = vunpack.c.l.b16 %v1213
      %v2145 = vunpack.c.l.b16 %v1214
      %v2146 = vunpack.c.l.b16 %v1215
      %v2147 = vunpack.c.l.b16 %v1216
      %v2148 = vunpack.c.l.b16 %v1217
      %v2149 = vunpack.c.l.b16 %v1218
      %v2150 = vunpack.c.l.b16 %v1219
      %v2151 = vunpack.c.l.b16 %v1220
      %v2152 = vunpack.c.l.b16 %v1221
      %v2153 = vunpack.c.l.b16 %v1222
      %v2154 = vunpack.c.l.b16 %v1223
      %v2155 = vunpack.c.l.b16 %v1224
      %v2156 = vunpack.c.l.b16 %v1225
      %v2157 = vunpack.c.l.b16 %v1226
      %v2158 = vpack.c.b16 %v1807, %v2142
      %v2159 = vpack.c.b16 %v1809, %v2143
      %v2160 = vpack.c.b16 %v1811, %v2144
      %v2161 = vpack.c.b16 %v1813, %v2145
      %v2162 = vpack.c.b16 %v1815, %v2146
      %v2163 = vpack.c.b16 %v1817, %v2147
      %v2164 = vpack.c.b16 %v1819, %v2148
      %v2165 = vpack.c.b16 %v1821, %v2149
      %v2166 = vpack.c.b16 %v1823, %v2150
      %v2167 = vpack.c.b16 %v1825, %v2151
      %v2168 = vpack.c.b16 %v1827, %v2152
      %v2169 = vpack.c.b16 %v1829, %v2153
      %v2170 = vpack.c.b16 %v1831, %v2154
      %v2171 = vpack.c.b16 %v1833, %v2155
      %v2172 = vpack.c.b16 %v1835, %v2156
      %v2173 = vpack.c.b16 %v1837, %v2157
      %v2174 = vrot.slane %v2158, 1
      %v2175 = vrot.slane %v1918, 1
      %v2176 = vsel %vm1693, %v2174, %v2175
      %v2177 = vrot.slane %v2159, 1
      %v2178 = vrot.slane %v1919, 1
      %v2179 = vsel %vm1693, %v2177, %v2178
      %v2180 = vrot.slane %v2160, 1
      %v2181 = vrot.slane %v1920, 1
      %v2182 = vsel %vm1693, %v2180, %v2181
      %v2183 = vrot.slane %v2161, 1
      %v2184 = vrot.slane %v1921, 1
      %v2185 = vsel %vm1693, %v2183, %v2184
      %v2186 = vrot.slane %v2162, 1
      %v2187 = vrot.slane %v1922, 1
      %v2188 = vsel %vm1693, %v2186, %v2187
      %v2189 = vrot.slane %v2163, 1
      %v2190 = vrot.slane %v1923, 1
      %v2191 = vsel %vm1693, %v2189, %v2190
      %v2192 = vrot.slane %v2164, 1
      %v2193 = vrot.slane %v1924, 1
      %v2194 = vsel %vm1693, %v2192, %v2193
      %v2195 = vrot.slane %v2165, 1
      %v2196 = vrot.slane %v1925, 1
      %v2197 = vsel %vm1693, %v2195, %v2196
      %v2198 = vrot.slane %v2166, 1
      %v2199 = vrot.slane %v1926, 1
      %v2200 = vsel %vm1693, %v2198, %v2199
      %v2201 = vrot.slane %v2167, 1
      %v2202 = vrot.slane %v1927, 1
      %v2203 = vsel %vm1693, %v2201, %v2202
      %v2204 = vrot.slane %v2168, 1
      %v2205 = vrot.slane %v1928, 1
      %v2206 = vsel %vm1693, %v2204, %v2205
      %v2207 = vrot.slane %v2169, 1
      %v2208 = vrot.slane %v1929, 1
      %v2209 = vsel %vm1693, %v2207, %v2208
      %v2210 = vrot.slane %v2170, 1
      %v2211 = vrot.slane %v1930, 1
      %v2212 = vsel %vm1693, %v2210, %v2211
      %v2213 = vrot.slane %v2171, 1
      %v2214 = vrot.slane %v1931, 1
      %v2215 = vsel %vm1693, %v2213, %v2214
      %v2216 = vrot.slane %v2172, 1
      %v2217 = vrot.slane %v1932, 1
      %v2218 = vsel %vm1693, %v2216, %v2217
      %v2219 = vrot.slane %v2173, 1
      %v2220 = vrot.slane %v1933, 1
      %v2221 = vsel %vm1693, %v2219, %v2220
      %2222 = vrot.lane.b32.xlu0 %v2176, 32
      %v2223 = vpop.permute.xlu0 %2222
      %2224 = vrot.lane.b32.xlu0 %v2179, 32
      %v2225 = vpop.permute.xlu0 %2224
      %2226 = vrot.lane.b32.xlu0 %v2182, 32
      %v2227 = vpop.permute.xlu0 %2226
      %2228 = vrot.lane.b32.xlu0 %v2185, 32
      %v2229 = vpop.permute.xlu0 %2228
      %2230 = vrot.lane.b32.xlu0 %v2188, 32
      %v2231 = vpop.permute.xlu0 %2230
      %2232 = vrot.lane.b32.xlu0 %v2191, 32
      %v2233 = vpop.permute.xlu0 %2232
      %2234 = vrot.lane.b32.xlu0 %v2194, 32
      %v2235 = vpop.permute.xlu0 %2234
      %2236 = vrot.lane.b32.xlu0 %v2197, 32
      %v2237 = vpop.permute.xlu0 %2236
      %2238 = vrot.lane.b32.xlu0 %v2200, 32
      %v2239 = vpop.permute.xlu0 %2238
      %2240 = vrot.lane.b32.xlu0 %v2203, 32
      %v2241 = vpop.permute.xlu0 %2240
      %2242 = vrot.lane.b32.xlu0 %v2206, 32
      %v2243 = vpop.permute.xlu0 %2242
      %2244 = vrot.lane.b32.xlu0 %v2209, 32
      %v2245 = vpop.permute.xlu0 %2244
      %2246 = vrot.lane.b32.xlu0 %v2212, 32
      %v2247 = vpop.permute.xlu0 %2246
      %2248 = vrot.lane.b32.xlu0 %v2215, 32
      %v2249 = vpop.permute.xlu0 %2248
      %2250 = vrot.lane.b32.xlu0 %v2218, 32
      %v2251 = vpop.permute.xlu0 %2250
      %2252 = vrot.lane.b32.xlu0 %v2221, 32
      %v2253 = vpop.permute.xlu0 %2252
      %v2286 = vunpack.c.l.b16 %v1228
      %v2287 = vunpack.c.l.b16 %v1229
      %v2288 = vunpack.c.l.b16 %v1230
      %v2289 = vunpack.c.l.b16 %v1231
      %v2290 = vunpack.c.l.b16 %v1232
      %v2291 = vunpack.c.l.b16 %v1233
      %v2292 = vunpack.c.l.b16 %v1234
      %v2293 = vunpack.c.l.b16 %v1235
      %v2294 = vunpack.c.l.b16 %v1236
      %v2295 = vunpack.c.l.b16 %v1237
      %v2296 = vunpack.c.l.b16 %v1238
      %v2297 = vunpack.c.l.b16 %v1239
      %v2298 = vunpack.c.l.b16 %v1240
      %v2299 = vunpack.c.l.b16 %v1241
      %v2300 = vunpack.c.l.b16 %v1242
      %v2301 = vunpack.c.l.b16 %v1243
      %v2302 = vunpack.c.l.b16 %v1244
      %v2303 = vunpack.c.l.b16 %v1245
      %v2304 = vunpack.c.l.b16 %v1246
      %v2305 = vunpack.c.l.b16 %v1247
      %v2306 = vunpack.c.l.b16 %v1248
      %v2307 = vunpack.c.l.b16 %v1249
      %v2308 = vunpack.c.l.b16 %v1250
      %v2309 = vunpack.c.l.b16 %v1251
      %v2310 = vunpack.c.l.b16 %v1252
      %v2311 = vunpack.c.l.b16 %v1253
      %v2312 = vunpack.c.l.b16 %v1254
      %v2313 = vunpack.c.l.b16 %v1255
      %v2314 = vunpack.c.l.b16 %v1256
      %v2315 = vunpack.c.l.b16 %v1257
      %v2316 = vunpack.c.l.b16 %v1258
      %v2317 = vunpack.c.l.b16 %v1259
      %v2318 = vpack.c.b16 %v2287, %v2286
      %v2319 = vpack.c.b16 %v2289, %v2288
      %v2320 = vpack.c.b16 %v2291, %v2290
      %v2321 = vpack.c.b16 %v2293, %v2292
      %v2322 = vpack.c.b16 %v2295, %v2294
      %v2323 = vpack.c.b16 %v2297, %v2296
      %v2324 = vpack.c.b16 %v2299, %v2298
      %v2325 = vpack.c.b16 %v2301, %v2300
      %v2326 = vpack.c.b16 %v2303, %v2302
      %v2327 = vpack.c.b16 %v2305, %v2304
      %v2328 = vpack.c.b16 %v2307, %v2306
      %v2329 = vpack.c.b16 %v2309, %v2308
      %v2330 = vpack.c.b16 %v2311, %v2310
      %v2331 = vpack.c.b16 %v2313, %v2312
      %v2332 = vpack.c.b16 %v2315, %v2314
      %v2333 = vpack.c.b16 %v2317, %v2316
      %2334 = vrot.lane.b32.xlu0 %v2318, 64
      %v2335 = vpop.permute.xlu0 %2334
      %2336 = vrot.lane.b32.xlu0 %v2319, 64
      %v2337 = vpop.permute.xlu0 %2336
      %2338 = vrot.lane.b32.xlu0 %v2320, 64
      %v2339 = vpop.permute.xlu0 %2338
      %2340 = vrot.lane.b32.xlu0 %v2321, 64
      %v2341 = vpop.permute.xlu0 %2340
      %2342 = vrot.lane.b32.xlu0 %v2322, 64
      %v2343 = vpop.permute.xlu0 %2342
      %2344 = vrot.lane.b32.xlu0 %v2323, 64
      %v2345 = vpop.permute.xlu0 %2344
      %2346 = vrot.lane.b32.xlu0 %v2324, 64
      %v2347 = vpop.permute.xlu0 %2346
      %2348 = vrot.lane.b32.xlu0 %v2325, 64
      %v2349 = vpop.permute.xlu0 %2348
      %2350 = vrot.lane.b32.xlu0 %v2326, 64
      %v2351 = vpop.permute.xlu0 %2350
      %2352 = vrot.lane.b32.xlu0 %v2327, 64
      %v2353 = vpop.permute.xlu0 %2352
      %2354 = vrot.lane.b32.xlu0 %v2328, 64
      %v2355 = vpop.permute.xlu0 %2354
      %2356 = vrot.lane.b32.xlu0 %v2329, 64
      %v2357 = vpop.permute.xlu0 %2356
      %2358 = vrot.lane.b32.xlu0 %v2330, 64
      %v2359 = vpop.permute.xlu0 %2358
      %2360 = vrot.lane.b32.xlu0 %v2331, 64
      %v2361 = vpop.permute.xlu0 %2360
      %2362 = vrot.lane.b32.xlu0 %v2332, 64
      %v2363 = vpop.permute.xlu0 %2362
      %2364 = vrot.lane.b32.xlu0 %v2333, 64
      %v2365 = vpop.permute.xlu0 %2364
      %v2382 = vunpack.c.l.b16 %v1260
      %v2383 = vunpack.c.l.b16 %v1261
      %v2384 = vunpack.c.l.b16 %v1262
      %v2385 = vunpack.c.l.b16 %v1263
      %v2386 = vunpack.c.l.b16 %v1264
      %v2387 = vunpack.c.l.b16 %v1265
      %v2388 = vunpack.c.l.b16 %v1266
      %v2389 = vunpack.c.l.b16 %v1267
      %v2390 = vunpack.c.l.b16 %v1268
      %v2391 = vunpack.c.l.b16 %v1269
      %v2392 = vunpack.c.l.b16 %v1270
      %v2393 = vunpack.c.l.b16 %v1271
      %v2394 = vunpack.c.l.b16 %v1272
      %v2395 = vunpack.c.l.b16 %v1273
      %v2396 = vunpack.c.l.b16 %v1274
      %v2397 = vunpack.c.l.b16 %v1275
      %v2398 = vpack.c.b16 %v2382, %v2382
      %v2399 = vpack.c.b16 %v2383, %v2383
      %v2400 = vpack.c.b16 %v2384, %v2384
      %v2401 = vpack.c.b16 %v2385, %v2385
      %v2402 = vpack.c.b16 %v2386, %v2386
      %v2403 = vpack.c.b16 %v2387, %v2387
      %v2404 = vpack.c.b16 %v2388, %v2388
      %v2405 = vpack.c.b16 %v2389, %v2389
      %v2406 = vpack.c.b16 %v2390, %v2390
      %v2407 = vpack.c.b16 %v2391, %v2391
      %v2408 = vpack.c.b16 %v2392, %v2392
      %v2409 = vpack.c.b16 %v2393, %v2393
      %v2410 = vpack.c.b16 %v2394, %v2394
      %v2411 = vpack.c.b16 %v2395, %v2395
      %v2412 = vpack.c.b16 %v2396, %v2396
      %v2413 = vpack.c.b16 %v2397, %v2397
      %v2415 = vshrl.u32 %v2318, 16
      %v2417 = vshll.u32 %v2318, 16
      %v2419 = vrot.slane %v2417, 1
      %v2420 = vor.u32 %v2415, %v2419
      %v2422 = vshll.u32 %v2398, 16
      %v2424 = vrot.slane %v2422, 1
      %v2425 = vsel %vm1420, %v2420, %v2424
      %v2427 = vshrl.u32 %v2319, 16
      %v2429 = vshll.u32 %v2319, 16
      %v2431 = vrot.slane %v2429, 1
      %v2432 = vor.u32 %v2427, %v2431
      %v2434 = vshll.u32 %v2399, 16
      %v2436 = vrot.slane %v2434, 1
      %v2437 = vsel %vm1420, %v2432, %v2436
      %v2439 = vshrl.u32 %v2320, 16
      %v2441 = vshll.u32 %v2320, 16
      %v2443 = vrot.slane %v2441, 1
      %v2444 = vor.u32 %v2439, %v2443
      %v2446 = vshll.u32 %v2400, 16
      %v2448 = vrot.slane %v2446, 1
      %v2449 = vsel %vm1420, %v2444, %v2448
      %v2451 = vshrl.u32 %v2321, 16
      %v2453 = vshll.u32 %v2321, 16
      %v2455 = vrot.slane %v2453, 1
      %v2456 = vor.u32 %v2451, %v2455
      %v2458 = vshll.u32 %v2401, 16
      %v2460 = vrot.slane %v2458, 1
      %v2461 = vsel %vm1420, %v2456, %v2460
      %v2463 = vshrl.u32 %v2322, 16
      %v2465 = vshll.u32 %v2322, 16
      %v2467 = vrot.slane %v2465, 1
      %v2468 = vor.u32 %v2463, %v2467
      %v2470 = vshll.u32 %v2402, 16
      %v2472 = vrot.slane %v2470, 1
      %v2473 = vsel %vm1420, %v2468, %v2472
      %v2475 = vshrl.u32 %v2323, 16
      %v2477 = vshll.u32 %v2323, 16
      %v2479 = vrot.slane %v2477, 1
      %v2480 = vor.u32 %v2475, %v2479
      %v2482 = vshll.u32 %v2403, 16
      %v2484 = vrot.slane %v2482, 1
      %v2485 = vsel %vm1420, %v2480, %v2484
      %v2487 = vshrl.u32 %v2324, 16
      %v2489 = vshll.u32 %v2324, 16
      %v2491 = vrot.slane %v2489, 1
      %v2492 = vor.u32 %v2487, %v2491
      %v2494 = vshll.u32 %v2404, 16
      %v2496 = vrot.slane %v2494, 1
      %v2497 = vsel %vm1420, %v2492, %v2496
      %v2499 = vshrl.u32 %v2325, 16
      %v2501 = vshll.u32 %v2325, 16
      %v2503 = vrot.slane %v2501, 1
      %v2504 = vor.u32 %v2499, %v2503
      %v2506 = vshll.u32 %v2405, 16
      %v2508 = vrot.slane %v2506, 1
      %v2509 = vsel %vm1420, %v2504, %v2508
      %v2511 = vshrl.u32 %v2326, 16
      %v2513 = vshll.u32 %v2326, 16
      %v2515 = vrot.slane %v2513, 1
      %v2516 = vor.u32 %v2511, %v2515
      %v2518 = vshll.u32 %v2406, 16
      %v2520 = vrot.slane %v2518, 1
      %v2521 = vsel %vm1420, %v2516, %v2520
      %v2523 = vshrl.u32 %v2327, 16
      %v2525 = vshll.u32 %v2327, 16
      %v2527 = vrot.slane %v2525, 1
      %v2528 = vor.u32 %v2523, %v2527
      %v2530 = vshll.u32 %v2407, 16
      %v2532 = vrot.slane %v2530, 1
      %v2533 = vsel %vm1420, %v2528, %v2532
      %v2535 = vshrl.u32 %v2328, 16
      %v2537 = vshll.u32 %v2328, 16
      %v2539 = vrot.slane %v2537, 1
      %v2540 = vor.u32 %v2535, %v2539
      %v2542 = vshll.u32 %v2408, 16
      %v2544 = vrot.slane %v2542, 1
      %v2545 = vsel %vm1420, %v2540, %v2544
      %v2547 = vshrl.u32 %v2329, 16
      %v2549 = vshll.u32 %v2329, 16
      %v2551 = vrot.slane %v2549, 1
      %v2552 = vor.u32 %v2547, %v2551
      %v2554 = vshll.u32 %v2409, 16
      %v2556 = vrot.slane %v2554, 1
      %v2557 = vsel %vm1420, %v2552, %v2556
      %v2559 = vshrl.u32 %v2330, 16
      %v2561 = vshll.u32 %v2330, 16
      %v2563 = vrot.slane %v2561, 1
      %v2564 = vor.u32 %v2559, %v2563
      %v2566 = vshll.u32 %v2410, 16
      %v2568 = vrot.slane %v2566, 1
      %v2569 = vsel %vm1420, %v2564, %v2568
      %v2571 = vshrl.u32 %v2331, 16
      %v2573 = vshll.u32 %v2331, 16
      %v2575 = vrot.slane %v2573, 1
      %v2576 = vor.u32 %v2571, %v2575
      %v2578 = vshll.u32 %v2411, 16
      %v2580 = vrot.slane %v2578, 1
      %v2581 = vsel %vm1420, %v2576, %v2580
      %v2583 = vshrl.u32 %v2332, 16
      %v2585 = vshll.u32 %v2332, 16
      %v2587 = vrot.slane %v2585, 1
      %v2588 = vor.u32 %v2583, %v2587
      %v2590 = vshll.u32 %v2412, 16
      %v2592 = vrot.slane %v2590, 1
      %v2593 = vsel %vm1420, %v2588, %v2592
      %v2595 = vshrl.u32 %v2333, 16
      %v2597 = vshll.u32 %v2333, 16
      %v2599 = vrot.slane %v2597, 1
      %v2600 = vor.u32 %v2595, %v2599
      %v2602 = vshll.u32 %v2413, 16
      %v2604 = vrot.slane %v2602, 1
      %v2605 = vsel %vm1420, %v2600, %v2604
      %2606 = vrot.lane.b32.xlu0 %v2425, 96
      %v2607 = vpop.permute.xlu0 %2606
      %2608 = vrot.lane.b32.xlu0 %v2437, 96
      %v2609 = vpop.permute.xlu0 %2608
      %2610 = vrot.lane.b32.xlu0 %v2449, 96
      %v2611 = vpop.permute.xlu0 %2610
      %2612 = vrot.lane.b32.xlu0 %v2461, 96
      %v2613 = vpop.permute.xlu0 %2612
      %2614 = vrot.lane.b32.xlu0 %v2473, 96
      %v2615 = vpop.permute.xlu0 %2614
      %2616 = vrot.lane.b32.xlu0 %v2485, 96
      %v2617 = vpop.permute.xlu0 %2616
      %2618 = vrot.lane.b32.xlu0 %v2497, 96
      %v2619 = vpop.permute.xlu0 %2618
      %2620 = vrot.lane.b32.xlu0 %v2509, 96
      %v2621 = vpop.permute.xlu0 %2620
      %2622 = vrot.lane.b32.xlu0 %v2521, 96
      %v2623 = vpop.permute.xlu0 %2622
      %2624 = vrot.lane.b32.xlu0 %v2533, 96
      %v2625 = vpop.permute.xlu0 %2624
      %2626 = vrot.lane.b32.xlu0 %v2545, 96
      %v2627 = vpop.permute.xlu0 %2626
      %2628 = vrot.lane.b32.xlu0 %v2557, 96
      %v2629 = vpop.permute.xlu0 %2628
      %2630 = vrot.lane.b32.xlu0 %v2569, 96
      %v2631 = vpop.permute.xlu0 %2630
      %2632 = vrot.lane.b32.xlu0 %v2581, 96
      %v2633 = vpop.permute.xlu0 %2632
      %2634 = vrot.lane.b32.xlu0 %v2593, 96
      %v2635 = vpop.permute.xlu0 %2634
      %2636 = vrot.lane.b32.xlu0 %v2605, 96
      %v2637 = vpop.permute.xlu0 %2636
      %v2654 = vunpack.c.l.b16 %v1276
      %v2655 = vunpack.c.l.b16 %v1277
      %v2656 = vunpack.c.l.b16 %v1278
      %v2657 = vunpack.c.l.b16 %v1279
      %v2658 = vunpack.c.l.b16 %v1280
      %v2659 = vunpack.c.l.b16 %v1281
      %v2660 = vunpack.c.l.b16 %v1282
      %v2661 = vunpack.c.l.b16 %v1283
      %v2662 = vunpack.c.l.b16 %v1284
      %v2663 = vunpack.c.l.b16 %v1285
      %v2664 = vunpack.c.l.b16 %v1286
      %v2665 = vunpack.c.l.b16 %v1287
      %v2666 = vunpack.c.l.b16 %v1288
      %v2667 = vunpack.c.l.b16 %v1289
      %v2668 = vunpack.c.l.b16 %v1290
      %v2669 = vunpack.c.l.b16 %v1291
      %v2670 = vpack.c.b16 %v2287, %v2654
      %v2671 = vpack.c.b16 %v2289, %v2655
      %v2672 = vpack.c.b16 %v2291, %v2656
      %v2673 = vpack.c.b16 %v2293, %v2657
      %v2674 = vpack.c.b16 %v2295, %v2658
      %v2675 = vpack.c.b16 %v2297, %v2659
      %v2676 = vpack.c.b16 %v2299, %v2660
      %v2677 = vpack.c.b16 %v2301, %v2661
      %v2678 = vpack.c.b16 %v2303, %v2662
      %v2679 = vpack.c.b16 %v2305, %v2663
      %v2680 = vpack.c.b16 %v2307, %v2664
      %v2681 = vpack.c.b16 %v2309, %v2665
      %v2682 = vpack.c.b16 %v2311, %v2666
      %v2683 = vpack.c.b16 %v2313, %v2667
      %v2684 = vpack.c.b16 %v2315, %v2668
      %v2685 = vpack.c.b16 %v2317, %v2669
      %v2686 = vrot.slane %v2670, 1
      %v2687 = vrot.slane %v2398, 1
      %v2688 = vsel %vm1693, %v2686, %v2687
      %v2689 = vrot.slane %v2671, 1
      %v2690 = vrot.slane %v2399, 1
      %v2691 = vsel %vm1693, %v2689, %v2690
      %v2692 = vrot.slane %v2672, 1
      %v2693 = vrot.slane %v2400, 1
      %v2694 = vsel %vm1693, %v2692, %v2693
      %v2695 = vrot.slane %v2673, 1
      %v2696 = vrot.slane %v2401, 1
      %v2697 = vsel %vm1693, %v2695, %v2696
      %v2698 = vrot.slane %v2674, 1
      %v2699 = vrot.slane %v2402, 1
      %v2700 = vsel %vm1693, %v2698, %v2699
      %v2701 = vrot.slane %v2675, 1
      %v2702 = vrot.slane %v2403, 1
      %v2703 = vsel %vm1693, %v2701, %v2702
      %v2704 = vrot.slane %v2676, 1
      %v2705 = vrot.slane %v2404, 1
      %v2706 = vsel %vm1693, %v2704, %v2705
      %v2707 = vrot.slane %v2677, 1
      %v2708 = vrot.slane %v2405, 1
      %v2709 = vsel %vm1693, %v2707, %v2708
      %v2710 = vrot.slane %v2678, 1
      %v2711 = vrot.slane %v2406, 1
      %v2712 = vsel %vm1693, %v2710, %v2711
      %v2713 = vrot.slane %v2679, 1
      %v2714 = vrot.slane %v2407, 1
      %v2715 = vsel %vm1693, %v2713, %v2714
      %v2716 = vrot.slane %v2680, 1
      %v2717 = vrot.slane %v2408, 1
      %v2718 = vsel %vm1693, %v2716, %v2717
      %v2719 = vrot.slane %v2681, 1
      %v2720 = vrot.slane %v2409, 1
      %v2721 = vsel %vm1693, %v2719, %v2720
      %v2722 = vrot.slane %v2682, 1
      %v2723 = vrot.slane %v2410, 1
      %v2724 = vsel %vm1693, %v2722, %v2723
      %v2725 = vrot.slane %v2683, 1
      %v2726 = vrot.slane %v2411, 1
      %v2727 = vsel %vm1693, %v2725, %v2726
      %v2728 = vrot.slane %v2684, 1
      %v2729 = vrot.slane %v2412, 1
      %v2730 = vsel %vm1693, %v2728, %v2729
      %v2731 = vrot.slane %v2685, 1
      %v2732 = vrot.slane %v2413, 1
      %v2733 = vsel %vm1693, %v2731, %v2732
      %vm2734 = vcmask 261120
      %v2736 = vsel %vm2734, %v1356, %v1614
      %v2738 = vsel %vm2734, %v1357, %v1616
      %v2740 = vsel %vm2734, %v1358, %v1618
      %v2742 = vsel %vm2734, %v1359, %v1620
      %v2744 = vsel %vm2734, %v1360, %v1622
      %v2746 = vsel %vm2734, %v1361, %v1624
      %v2748 = vsel %vm2734, %v1362, %v1626
      %v2750 = vsel %vm2734, %v1363, %v1628
      %v2752 = vsel %vm2734, %v1364, %v1630
      %v2754 = vsel %vm2734, %v1365, %v1632
      %v2756 = vsel %vm2734, %v1366, %v1634
      %v2758 = vsel %vm2734, %v1367, %v1636
      %v2760 = vsel %vm2734, %v1368, %v1638
      %v2762 = vsel %vm2734, %v1369, %v1640
      %v2764 = vsel %vm2734, %v1370, %v1642
      %v2766 = vsel %vm2734, %v1371, %v1644
      %vm2767 = vcmask 523264
      %v2769 = vsel %vm2767, %v2736, %v1743
      %v2771 = vsel %vm2767, %v2738, %v1745
      %v2773 = vsel %vm2767, %v2740, %v1747
      %v2775 = vsel %vm2767, %v2742, %v1749
      %v2777 = vsel %vm2767, %v2744, %v1751
      %v2779 = vsel %vm2767, %v2746, %v1753
      %v2781 = vsel %vm2767, %v2748, %v1755
      %v2783 = vsel %vm2767, %v2750, %v1757
      %v2785 = vsel %vm2767, %v2752, %v1759
      %v2787 = vsel %vm2767, %v2754, %v1761
      %v2789 = vsel %vm2767, %v2756, %v1763
      %v2791 = vsel %vm2767, %v2758, %v1765
      %v2793 = vsel %vm2767, %v2760, %v1767
      %v2795 = vsel %vm2767, %v2762, %v1769
      %v2797 = vsel %vm2767, %v2764, %v1771
      %v2799 = vsel %vm2767, %v2766, %v1773
      %vm2800 = vcmask 785408
      %v2802 = vsel %vm2800, %v2769, %v1855
      %v2805 = vsel %vm2800, %v2771, %v1857
      %v2808 = vsel %vm2800, %v2773, %v1859
      %v2811 = vsel %vm2800, %v2775, %v1861
      %v2814 = vsel %vm2800, %v2777, %v1863
      %v2817 = vsel %vm2800, %v2779, %v1865
      %v2820 = vsel %vm2800, %v2781, %v1867
      %v2823 = vsel %vm2800, %v2783, %v1869
      %v2826 = vsel %vm2800, %v2785, %v1871
      %v2829 = vsel %vm2800, %v2787, %v1873
      %v2832 = vsel %vm2800, %v2789, %v1875
      %v2835 = vsel %vm2800, %v2791, %v1877
      %v2838 = vsel %vm2800, %v2793, %v1879
      %v2841 = vsel %vm2800, %v2795, %v1881
      %v2844 = vsel %vm2800, %v2797, %v1883
      %v2847 = vsel %vm2800, %v2799, %v1885
      %v2851 = vsel %vm2734, %v1945, %v2223
      %v2854 = vsel %vm2734, %v1957, %v2225
      %v2857 = vsel %vm2734, %v1969, %v2227
      %v2860 = vsel %vm2734, %v1981, %v2229
      %v2863 = vsel %vm2734, %v1993, %v2231
      %v2866 = vsel %vm2734, %v2005, %v2233
      %v2869 = vsel %vm2734, %v2017, %v2235
      %v2872 = vsel %vm2734, %v2029, %v2237
      %v2875 = vsel %vm2734, %v2041, %v2239
      %v2878 = vsel %vm2734, %v2053, %v2241
      %v2881 = vsel %vm2734, %v2065, %v2243
      %v2884 = vsel %vm2734, %v2077, %v2245
      %v2887 = vsel %vm2734, %v2089, %v2247
      %v2890 = vsel %vm2734, %v2101, %v2249
      %v2893 = vsel %vm2734, %v2113, %v2251
      %v2896 = vsel %vm2734, %v2125, %v2253
      %v2898 = vsel %vm2767, %v2851, %v2335
      %v2900 = vsel %vm2767, %v2854, %v2337
      %v2902 = vsel %vm2767, %v2857, %v2339
      %v2904 = vsel %vm2767, %v2860, %v2341
      %v2906 = vsel %vm2767, %v2863, %v2343
      %v2908 = vsel %vm2767, %v2866, %v2345
      %v2910 = vsel %vm2767, %v2869, %v2347
      %v2912 = vsel %vm2767, %v2872, %v2349
      %v2914 = vsel %vm2767, %v2875, %v2351
      %v2916 = vsel %vm2767, %v2878, %v2353
      %v2918 = vsel %vm2767, %v2881, %v2355
      %v2920 = vsel %vm2767, %v2884, %v2357
      %v2922 = vsel %vm2767, %v2887, %v2359
      %v2924 = vsel %vm2767, %v2890, %v2361
      %v2926 = vsel %vm2767, %v2893, %v2363
      %v2928 = vsel %vm2767, %v2896, %v2365
      %v2930 = vsel %vm2800, %v2898, %v2607
      %v2933 = vsel %vm2800, %v2900, %v2609
      %v2936 = vsel %vm2800, %v2902, %v2611
      %v2939 = vsel %vm2800, %v2904, %v2613
      %v2942 = vsel %vm2800, %v2906, %v2615
      %v2945 = vsel %vm2800, %v2908, %v2617
      %v2948 = vsel %vm2800, %v2910, %v2619
      %v2951 = vsel %vm2800, %v2912, %v2621
      %v2954 = vsel %vm2800, %v2914, %v2623
      %v2957 = vsel %vm2800, %v2916, %v2625
      %v2960 = vsel %vm2800, %v2918, %v2627
      %v2963 = vsel %vm2800, %v2920, %v2629
      %v2966 = vsel %vm2800, %v2922, %v2631
      %v2969 = vsel %vm2800, %v2924, %v2633
      %v2972 = vsel %vm2800, %v2926, %v2635
      %v2975 = vsel %vm2800, %v2928, %v2637
      %v2977 = vld [vmem:[%s3] sm:$0xf]
      %v2978 = vld [vmem:[%s3 + $0x4] sm:$0xf]
      %v2979 = vld [vmem:[%s3 + $0x8] sm:$0xf]
      %v2980 = vld [vmem:[%s3 + $0xc] sm:$0xf]
      %v2981 = vld [vmem:[%s3 + $0x10] sm:$0xf]
      %v2982 = vld [vmem:[%s3 + $0x14] sm:$0xf]
      %v2983 = vld [vmem:[%s3 + $0x18] sm:$0xf]
      %v2984 = vld [vmem:[%s3 + $0x1c] sm:$0xf]
      %v2985 = vld [vmem:[%s3 + $0x20] sm:$0xf]
      %v2986 = vld [vmem:[%s3 + $0x24] sm:$0xf]
      %v2987 = vld [vmem:[%s3 + $0x28] sm:$0xf]
      %v2988 = vld [vmem:[%s3 + $0x2c] sm:$0xf]
      %v2989 = vld [vmem:[%s3 + $0x30] sm:$0xf]
      %v2990 = vld [vmem:[%s3 + $0x34] sm:$0xf]
      %v2991 = vld [vmem:[%s3 + $0x38] sm:$0xf]
      %v2992 = vld [vmem:[%s3 + $0x3c] sm:$0xf]
      %v2993 = vld [vmem:[%s3 + $0x40] sm:$0xf]
      %v2994 = vld [vmem:[%s3 + $0x44] sm:$0xf]
      %v2995 = vld [vmem:[%s3 + $0x48] sm:$0xf]
      %v2996 = vld [vmem:[%s3 + $0x4c] sm:$0xf]
      %v2997 = vld [vmem:[%s3 + $0x50] sm:$0xf]
      %v2998 = vld [vmem:[%s3 + $0x54] sm:$0xf]
      %v2999 = vld [vmem:[%s3 + $0x58] sm:$0xf]
      %v3000 = vld [vmem:[%s3 + $0x5c] sm:$0xf]
      %v3001 = vld [vmem:[%s3 + $0x60] sm:$0xf]
      %v3002 = vld [vmem:[%s3 + $0x64] sm:$0xf]
      %v3003 = vld [vmem:[%s3 + $0x68] sm:$0xf]
      %v3004 = vld [vmem:[%s3 + $0x6c] sm:$0xf]
      %v3005 = vld [vmem:[%s3 + $0x70] sm:$0xf]
      %v3006 = vld [vmem:[%s3 + $0x74] sm:$0xf]
      %v3007 = vld [vmem:[%s3 + $0x78] sm:$0xf]
      %v3008 = vld [vmem:[%s3 + $0x7c] sm:$0xf]
      %v3009 = vld [vmem:[%s3 + $0x80] sm:$0xf]
      %v3010 = vld [vmem:[%s3 + $0x84] sm:$0xf]
      %v3011 = vld [vmem:[%s3 + $0x88] sm:$0xf]
      %v3012 = vld [vmem:[%s3 + $0x8c] sm:$0xf]
      %v3049 = vunpack.c.l.b16 %v2977
      %v3050 = vunpack.c.l.b16 %v2978
      %v3051 = vunpack.c.l.b16 %v2979
      %v3052 = vunpack.c.l.b16 %v2980
      %v3053 = vunpack.c.l.b16 %v2981
      %v3054 = vunpack.c.l.b16 %v2982
      %v3055 = vunpack.c.l.b16 %v2983
      %v3056 = vunpack.c.l.b16 %v2984
      %v3057 = vunpack.c.l.b16 %v2985
      %v3058 = vunpack.c.l.b16 %v2986
      %v3059 = vunpack.c.l.b16 %v2987
      %v3060 = vunpack.c.l.b16 %v2988
      %v3061 = vunpack.c.l.b16 %v2989
      %v3062 = vunpack.c.l.b16 %v2990
      %v3063 = vunpack.c.l.b16 %v2991
      %v3064 = vunpack.c.l.b16 %v2992
      %v3065 = vunpack.c.l.b16 %v2993
      %v3066 = vunpack.c.l.b16 %v2994
      %v3067 = vunpack.c.l.b16 %v2995
      %v3068 = vunpack.c.l.b16 %v2996
      %v3069 = vunpack.c.l.b16 %v2997
      %v3070 = vunpack.c.l.b16 %v2998
      %v3071 = vunpack.c.l.b16 %v2999
      %v3072 = vunpack.c.l.b16 %v3000
      %v3073 = vunpack.c.l.b16 %v3001
      %v3074 = vunpack.c.l.b16 %v3002
      %v3075 = vunpack.c.l.b16 %v3003
      %v3076 = vunpack.c.l.b16 %v3004
      %v3077 = vunpack.c.l.b16 %v3005
      %v3078 = vunpack.c.l.b16 %v3006
      %v3079 = vunpack.c.l.b16 %v3007
      %v3080 = vunpack.c.l.b16 %v3008
      %v3081 = vunpack.c.l.b16 %v3009
      %v3082 = vunpack.c.l.b16 %v3010
      %v3083 = vunpack.c.l.b16 %v3011
      %v3084 = vunpack.c.l.b16 %v3012
      %v3085 = vpack.c.b16 %v3050, %v3049
      %v3086 = vpack.c.b16 %v3052, %v3051
      %v3087 = vpack.c.b16 %v3054, %v3053
      %v3088 = vpack.c.b16 %v3056, %v3055
      %v3089 = vpack.c.b16 %v3058, %v3057
      %v3090 = vpack.c.b16 %v3060, %v3059
      %v3091 = vpack.c.b16 %v3062, %v3061
      %v3092 = vpack.c.b16 %v3064, %v3063
      %v3093 = vpack.c.b16 %v3066, %v3065
      %v3094 = vpack.c.b16 %v3068, %v3067
      %v3095 = vpack.c.b16 %v3070, %v3069
      %v3096 = vpack.c.b16 %v3072, %v3071
      %v3097 = vpack.c.b16 %v3074, %v3073
      %v3098 = vpack.c.b16 %v3076, %v3075
      %v3099 = vpack.c.b16 %v3078, %v3077
      %v3100 = vpack.c.b16 %v3080, %v3079
      %v3101 = vpack.c.b16 %v3082, %v3081
      %v3102 = vpack.c.b16 %v3084, %v3083
      %v3122 = vsel %vm2734, %v2688, 0
      %v3125 = vsel %vm2734, %v2691, 0
      %v3128 = vsel %vm2734, %v2694, 0
      %v3131 = vsel %vm2734, %v2697, 0
      %v3134 = vsel %vm2734, %v2700, 0
      %v3137 = vsel %vm2734, %v2703, 0
      %v3140 = vsel %vm2734, %v2706, 0
      %v3143 = vsel %vm2734, %v2709, 0
      %v3146 = vsel %vm2734, %v2712, 0
      %v3149 = vsel %vm2734, %v2715, 0
      %v3152 = vsel %vm2734, %v2718, 0
      %v3155 = vsel %vm2734, %v2721, 0
      %v3158 = vsel %vm2734, %v2724, 0
      %v3161 = vsel %vm2734, %v2727, 0
      %v3164 = vsel %vm2734, %v2730, 0
      %v3167 = vsel %vm2734, %v2733, 0
      %3169 = vmatprep.subr.bf16.mxu0 0
      %3170 = vmatpush1.bf16.msra.mxu0 %v3092
      %3171 = vmatprep.subr.bf16.mxu0 0
      %3172 = vmatpush1.bf16.msra.mxu0 %v3091
      %3173 = vmatprep.subr.bf16.mxu0 0
      %3174 = vmatpush1.bf16.msra.mxu0 %v3090
      %3175 = vmatprep.subr.bf16.mxu0 0
      %3176 = vmatpush1.bf16.msra.mxu0 %v3089
      %3177 = vmatprep.subr.bf16.mxu0 0
      %3178 = vmatpush1.bf16.msra.mxu0 %v3088
      %3179 = vmatprep.subr.bf16.mxu0 0
      %3180 = vmatpush1.bf16.msra.mxu0 %v3087
      %3181 = vmatprep.subr.bf16.mxu0 0
      %3182 = vmatpush1.bf16.msra.mxu0 %v3086
      %3183 = vmatprep.subr.bf16.mxu0 0
      %3184 = vmatpush1.bf16.msra.mxu0 %v3085
      %3185 = vmatprep.subr.bf16.mxu0 0
      %3186 = vmatpush2.bf16.msra.mxu0 %v3100
      %3187 = vmatprep.subr.bf16.mxu0 0
      %3188 = vmatpush2.bf16.msra.mxu0 %v3099
      %3189 = vmatprep.subr.bf16.mxu0 0
      %3190 = vmatpush2.bf16.msra.mxu0 %v3098
      %3191 = vmatprep.subr.bf16.mxu0 0
      %3192 = vmatpush2.bf16.msra.mxu0 %v3097
      %3193 = vmatprep.subr.bf16.mxu0 0
      %3194 = vmatpush2.bf16.msra.mxu0 %v3096
      %3195 = vmatprep.subr.bf16.mxu0 0
      %3196 = vmatpush2.bf16.msra.mxu0 %v3095
      %3197 = vmatprep.subr.bf16.mxu0 0
      %3198 = vmatpush2.bf16.msra.mxu0 %v3094
      %3199 = vmatprep.subr.bf16.mxu0 0
      %3200 = vmatpush2.bf16.msra.mxu0 %v3093
      %3201 = vmatprep.mubr.bf16.mxu0 %v2930
      %3202 = vmatmul.mubr.bf16.gmra.mxu0 %v2802
      %v3203 = vpop.f32.mrf.mxu0
      %v3204 = vadd.f32 0.0, %v3203
      %v3205 = vpop.f32.mrf.mxu0
      %v3206 = vpop.f32.mrf.mxu0
      %v3207 = vadd.f32 0.0, %v3206
      %v3208 = vpop.f32.mrf.mxu0
      %3209 = vmatprep.mubr.bf16.mxu0 %v2933
      %3210 = vmatmul.mubr.bf16.gmra.mxu0 %v2805
      %v3211 = vpop.f32.mrf.mxu0
      %v3212 = vadd.f32 0.0, %v3211
      %v3213 = vpop.f32.mrf.mxu0
      %v3214 = vpop.f32.mrf.mxu0
      %v3215 = vadd.f32 0.0, %v3214
      %v3216 = vpop.f32.mrf.mxu0
      %3217 = vmatprep.mubr.bf16.mxu0 %v2936
      %3218 = vmatmul.mubr.bf16.gmra.mxu0 %v2808
      %v3219 = vpop.f32.mrf.mxu0
      %v3220 = vadd.f32 0.0, %v3219
      %v3221 = vpop.f32.mrf.mxu0
      %v3222 = vpop.f32.mrf.mxu0
      %v3223 = vadd.f32 0.0, %v3222
      %v3224 = vpop.f32.mrf.mxu0
      %3225 = vmatprep.mubr.bf16.mxu0 %v2939
      %3226 = vmatmul.mubr.bf16.gmra.mxu0 %v2811
      %v3227 = vpop.f32.mrf.mxu0
      %v3228 = vadd.f32 0.0, %v3227
      %v3229 = vpop.f32.mrf.mxu0
      %v3230 = vpop.f32.mrf.mxu0
      %v3231 = vadd.f32 0.0, %v3230
      %v3232 = vpop.f32.mrf.mxu0
      %3233 = vmatprep.mubr.bf16.mxu0 %v2942
      %3234 = vmatmul.mubr.bf16.gmra.mxu0 %v2814
      %v3235 = vpop.f32.mrf.mxu0
      %v3236 = vadd.f32 0.0, %v3235
      %v3237 = vpop.f32.mrf.mxu0
      %v3238 = vpop.f32.mrf.mxu0
      %v3239 = vadd.f32 0.0, %v3238
      %v3240 = vpop.f32.mrf.mxu0
      %3241 = vmatprep.mubr.bf16.mxu0 %v2945
      %3242 = vmatmul.mubr.bf16.gmra.mxu0 %v2817
      %v3243 = vpop.f32.mrf.mxu0
      %v3244 = vadd.f32 0.0, %v3243
      %v3245 = vpop.f32.mrf.mxu0
      %v3246 = vpop.f32.mrf.mxu0
      %v3247 = vadd.f32 0.0, %v3246
      %v3248 = vpop.f32.mrf.mxu0
      %3249 = vmatprep.mubr.bf16.mxu0 %v2948
      %3250 = vmatmul.mubr.bf16.gmra.mxu0 %v2820
      %v3251 = vpop.f32.mrf.mxu0
      %v3252 = vadd.f32 0.0, %v3251
      %v3253 = vpop.f32.mrf.mxu0
      %v3254 = vpop.f32.mrf.mxu0
      %v3255 = vadd.f32 0.0, %v3254
      %v3256 = vpop.f32.mrf.mxu0
      %3257 = vmatprep.mubr.bf16.mxu0 %v2951
      %3258 = vmatmul.mubr.bf16.gmra.mxu0 %v2823
      %v3259 = vpop.f32.mrf.mxu0
      %v3260 = vadd.f32 0.0, %v3259
      %v3261 = vpop.f32.mrf.mxu0
      %v3262 = vpop.f32.mrf.mxu0
      %v3263 = vadd.f32 0.0, %v3262
      %v3264 = vpop.f32.mrf.mxu0
      %3265 = vmatprep.mubr.bf16.mxu0 %v2954
      %3266 = vmatmul.mubr.bf16.gmra.mxu0 %v2826
      %v3267 = vpop.f32.mrf.mxu0
      %v3268 = vadd.f32 0.0, %v3267
      %v3269 = vpop.f32.mrf.mxu0
      %v3270 = vpop.f32.mrf.mxu0
      %v3271 = vadd.f32 0.0, %v3270
      %v3272 = vpop.f32.mrf.mxu0
      %3273 = vmatprep.mubr.bf16.mxu0 %v2957
      %3274 = vmatmul.mubr.bf16.gmra.mxu0 %v2829
      %v3275 = vpop.f32.mrf.mxu0
      %v3276 = vadd.f32 0.0, %v3275
      %v3277 = vpop.f32.mrf.mxu0
      %v3278 = vpop.f32.mrf.mxu0
      %v3279 = vadd.f32 0.0, %v3278
      %v3280 = vpop.f32.mrf.mxu0
      %3281 = vmatprep.mubr.bf16.mxu0 %v2960
      %3282 = vmatmul.mubr.bf16.gmra.mxu0 %v2832
      %v3283 = vpop.f32.mrf.mxu0
      %v3284 = vadd.f32 0.0, %v3283
      %v3285 = vpop.f32.mrf.mxu0
      %v3286 = vpop.f32.mrf.mxu0
      %v3287 = vadd.f32 0.0, %v3286
      %v3288 = vpop.f32.mrf.mxu0
      %3289 = vmatprep.mubr.bf16.mxu0 %v2963
      %3290 = vmatmul.mubr.bf16.gmra.mxu0 %v2835
      %v3291 = vpop.f32.mrf.mxu0
      %v3292 = vadd.f32 0.0, %v3291
      %v3293 = vpop.f32.mrf.mxu0
      %v3294 = vpop.f32.mrf.mxu0
      %v3295 = vadd.f32 0.0, %v3294
      %v3296 = vpop.f32.mrf.mxu0
      %3297 = vmatprep.mubr.bf16.mxu0 %v2966
      %3298 = vmatmul.mubr.bf16.gmra.mxu0 %v2838
      %v3299 = vpop.f32.mrf.mxu0
      %v3300 = vadd.f32 0.0, %v3299
      %v3301 = vpop.f32.mrf.mxu0
      %v3302 = vpop.f32.mrf.mxu0
      %v3303 = vadd.f32 0.0, %v3302
      %v3304 = vpop.f32.mrf.mxu0
      %3305 = vmatprep.mubr.bf16.mxu0 %v2969
      %3306 = vmatmul.mubr.bf16.gmra.mxu0 %v2841
      %v3307 = vpop.f32.mrf.mxu0
      %v3308 = vadd.f32 0.0, %v3307
      %v3309 = vpop.f32.mrf.mxu0
      %v3310 = vpop.f32.mrf.mxu0
      %v3311 = vadd.f32 0.0, %v3310
      %v3312 = vpop.f32.mrf.mxu0
      %3313 = vmatprep.mubr.bf16.mxu0 %v2972
      %3314 = vmatmul.mubr.bf16.gmra.mxu0 %v2844
      %v3315 = vpop.f32.mrf.mxu0
      %v3316 = vadd.f32 0.0, %v3315
      %v3317 = vpop.f32.mrf.mxu0
      %v3318 = vpop.f32.mrf.mxu0
      %v3319 = vadd.f32 0.0, %v3318
      %v3320 = vpop.f32.mrf.mxu0
      %3321 = vmatprep.mubr.bf16.mxu0 %v2975
      %3322 = vmatmul.mubr.bf16.gmra.mxu0 %v2847
      %v3323 = vpop.f32.mrf.mxu0
      %v3324 = vadd.f32 0.0, %v3323
      %v3325 = vpop.f32.mrf.mxu0
      %v3326 = vpop.f32.mrf.mxu0
      %v3327 = vadd.f32 0.0, %v3326
      %v3328 = vpop.f32.mrf.mxu0
      %3329 = vdwg.mxu0
      %3330 = vmatprep.subr.bf16.mxu0 0
      %3331 = vmatpush1.bf16.msra.mxu0 0
      %3332 = vmatprep.subr.bf16.mxu0 0
      %3333 = vmatpush1.bf16.msra.mxu0 0
      %3334 = vmatprep.subr.bf16.mxu0 0
      %3335 = vmatpush1.bf16.msra.mxu0 0
      %3336 = vmatprep.subr.bf16.mxu0 0
      %3337 = vmatpush1.bf16.msra.mxu0 0
      %3338 = vmatprep.subr.bf16.mxu0 0
      %3339 = vmatpush1.bf16.msra.mxu0 0
      %3340 = vmatprep.subr.bf16.mxu0 0
      %3341 = vmatpush1.bf16.msra.mxu0 0
      %3342 = vmatprep.subr.bf16.mxu0 0
      %3343 = vmatpush1.bf16.msra.mxu0 %v3102
      %3344 = vmatprep.subr.bf16.mxu0 0
      %3345 = vmatpush1.bf16.msra.mxu0 %v3101
      %3346 = vmatprep.subr.bf16.mxu0 0
      %3347 = vmatpush2.bf16.msra.mxu0 0
      %3348 = vmatprep.subr.bf16.mxu0 0
      %3349 = vmatpush2.bf16.msra.mxu0 0
      %3350 = vmatprep.subr.bf16.mxu0 0
      %3351 = vmatpush2.bf16.msra.mxu0 0
      %3352 = vmatprep.subr.bf16.mxu0 0
      %3353 = vmatpush2.bf16.msra.mxu0 0
      %3354 = vmatprep.subr.bf16.mxu0 0
      %3355 = vmatpush2.bf16.msra.mxu0 0
      %3356 = vmatprep.subr.bf16.mxu0 0
      %3357 = vmatpush2.bf16.msra.mxu0 0
      %3358 = vmatprep.subr.bf16.mxu0 0
      %3359 = vmatpush2.bf16.msra.mxu0 0
      %3360 = vmatprep.subr.bf16.mxu0 0
      %3361 = vmatpush2.bf16.msra.mxu0 0
      %3362 = vmatprep.mubr.bf16.mxu0 0
      %3363 = vmatmul.mubr.bf16.gmra.mxu0 %v3122
      %v3364 = vpop.f32.mrf.mxu0
      %v3365 = vadd.f32 %v3204, %v3364
      %v3366 = vpop.f32.mrf.mxu0
      %v3367 = vpop.f32.mrf.mxu0
      %v3368 = vadd.f32 %v3207, %v3367
      %v3369 = vpop.f32.mrf.mxu0
      %3370 = vmatprep.mubr.bf16.mxu0 0
      %3371 = vmatmul.mubr.bf16.gmra.mxu0 %v3125
      %v3372 = vpop.f32.mrf.mxu0
      %v3373 = vadd.f32 %v3212, %v3372
      %v3374 = vpop.f32.mrf.mxu0
      %v3375 = vpop.f32.mrf.mxu0
      %v3376 = vadd.f32 %v3215, %v3375
      %v3377 = vpop.f32.mrf.mxu0
      %3378 = vmatprep.mubr.bf16.mxu0 0
      %3379 = vmatmul.mubr.bf16.gmra.mxu0 %v3128
      %v3380 = vpop.f32.mrf.mxu0
      %v3381 = vadd.f32 %v3220, %v3380
      %v3382 = vpop.f32.mrf.mxu0
      %v3383 = vpop.f32.mrf.mxu0
      %v3384 = vadd.f32 %v3223, %v3383
      %v3385 = vpop.f32.mrf.mxu0
      %3386 = vmatprep.mubr.bf16.mxu0 0
      %3387 = vmatmul.mubr.bf16.gmra.mxu0 %v3131
      %v3388 = vpop.f32.mrf.mxu0
      %v3389 = vadd.f32 %v3228, %v3388
      %v3390 = vpop.f32.mrf.mxu0
      %v3391 = vpop.f32.mrf.mxu0
      %v3392 = vadd.f32 %v3231, %v3391
      %v3393 = vpop.f32.mrf.mxu0
      %3394 = vmatprep.mubr.bf16.mxu0 0
      %3395 = vmatmul.mubr.bf16.gmra.mxu0 %v3134
      %v3396 = vpop.f32.mrf.mxu0
      %v3397 = vadd.f32 %v3236, %v3396
      %v3398 = vpop.f32.mrf.mxu0
      %v3399 = vpop.f32.mrf.mxu0
      %v3400 = vadd.f32 %v3239, %v3399
      %v3401 = vpop.f32.mrf.mxu0
      %3402 = vmatprep.mubr.bf16.mxu0 0
      %3403 = vmatmul.mubr.bf16.gmra.mxu0 %v3137
      %v3404 = vpop.f32.mrf.mxu0
      %v3405 = vadd.f32 %v3244, %v3404
      %v3406 = vpop.f32.mrf.mxu0
      %v3407 = vpop.f32.mrf.mxu0
      %v3408 = vadd.f32 %v3247, %v3407
      %v3409 = vpop.f32.mrf.mxu0
      %3410 = vmatprep.mubr.bf16.mxu0 0
      %3411 = vmatmul.mubr.bf16.gmra.mxu0 %v3140
      %v3412 = vpop.f32.mrf.mxu0
      %v3413 = vadd.f32 %v3252, %v3412
      %v3414 = vpop.f32.mrf.mxu0
      %v3415 = vpop.f32.mrf.mxu0
      %v3416 = vadd.f32 %v3255, %v3415
      %v3417 = vpop.f32.mrf.mxu0
      %3418 = vmatprep.mubr.bf16.mxu0 0
      %3419 = vmatmul.mubr.bf16.gmra.mxu0 %v3143
      %v3420 = vpop.f32.mrf.mxu0
      %v3421 = vadd.f32 %v3260, %v3420
      %v3422 = vpop.f32.mrf.mxu0
      %v3423 = vpop.f32.mrf.mxu0
      %v3424 = vadd.f32 %v3263, %v3423
      %v3425 = vpop.f32.mrf.mxu0
      %3426 = vmatprep.mubr.bf16.mxu0 0
      %3427 = vmatmul.mubr.bf16.gmra.mxu0 %v3146
      %v3428 = vpop.f32.mrf.mxu0
      %v3429 = vadd.f32 %v3268, %v3428
      %v3430 = vpop.f32.mrf.mxu0
      %v3431 = vpop.f32.mrf.mxu0
      %v3432 = vadd.f32 %v3271, %v3431
      %v3433 = vpop.f32.mrf.mxu0
      %3434 = vmatprep.mubr.bf16.mxu0 0
      %3435 = vmatmul.mubr.bf16.gmra.mxu0 %v3149
      %v3436 = vpop.f32.mrf.mxu0
      %v3437 = vadd.f32 %v3276, %v3436
      %v3438 = vpop.f32.mrf.mxu0
      %v3439 = vpop.f32.mrf.mxu0
      %v3440 = vadd.f32 %v3279, %v3439
      %v3441 = vpop.f32.mrf.mxu0
      %3442 = vmatprep.mubr.bf16.mxu0 0
      %3443 = vmatmul.mubr.bf16.gmra.mxu0 %v3152
      %v3444 = vpop.f32.mrf.mxu0
      %v3445 = vadd.f32 %v3284, %v3444
      %v3446 = vpop.f32.mrf.mxu0
      %v3447 = vpop.f32.mrf.mxu0
      %v3448 = vadd.f32 %v3287, %v3447
      %v3449 = vpop.f32.mrf.mxu0
      %3450 = vmatprep.mubr.bf16.mxu0 0
      %3451 = vmatmul.mubr.bf16.gmra.mxu0 %v3155
      %v3452 = vpop.f32.mrf.mxu0
      %v3453 = vadd.f32 %v3292, %v3452
      %v3454 = vpop.f32.mrf.mxu0
      %v3455 = vpop.f32.mrf.mxu0
      %v3456 = vadd.f32 %v3295, %v3455
      %v3457 = vpop.f32.mrf.mxu0
      %3458 = vmatprep.mubr.bf16.mxu0 0
      %3459 = vmatmul.mubr.bf16.gmra.mxu0 %v3158
      %v3460 = vpop.f32.mrf.mxu0
      %v3461 = vadd.f32 %v3300, %v3460
      %v3462 = vpop.f32.mrf.mxu0
      %v3463 = vpop.f32.mrf.mxu0
      %v3464 = vadd.f32 %v3303, %v3463
      %v3465 = vpop.f32.mrf.mxu0
      %3466 = vmatprep.mubr.bf16.mxu0 0
      %3467 = vmatmul.mubr.bf16.gmra.mxu0 %v3161
      %v3468 = vpop.f32.mrf.mxu0
      %v3469 = vadd.f32 %v3308, %v3468
      %v3470 = vpop.f32.mrf.mxu0
      %v3471 = vpop.f32.mrf.mxu0
      %v3472 = vadd.f32 %v3311, %v3471
      %v3473 = vpop.f32.mrf.mxu0
      %3474 = vmatprep.mubr.bf16.mxu0 0
      %3475 = vmatmul.mubr.bf16.gmra.mxu0 %v3164
      %v3476 = vpop.f32.mrf.mxu0
      %v3477 = vadd.f32 %v3316, %v3476
      %v3478 = vpop.f32.mrf.mxu0
      %v3479 = vpop.f32.mrf.mxu0
      %v3480 = vadd.f32 %v3319, %v3479
      %v3481 = vpop.f32.mrf.mxu0
      %3482 = vmatprep.mubr.bf16.mxu0 0
      %3483 = vmatmul.mubr.bf16.gmra.mxu0 %v3167
      %v3484 = vpop.f32.mrf.mxu0
      %v3485 = vadd.f32 %v3324, %v3484
      %v3486 = vpop.f32.mrf.mxu0
      %v3487 = vpop.f32.mrf.mxu0
      %v3488 = vadd.f32 %v3327, %v3487
      %v3489 = vpop.f32.mrf.mxu0
      %3490 = vdwg.mxu0
      %v3491 = vsel %vm2734, %v3365, 0.0
      %v3492 = vsel %vm2734, %v3368, 0.0
      %v3493 = vadd.f32 %v3491, %v3492
      %v3494 = vsel %vm2734, %v3373, 0.0
      %v3495 = vadd.f32 %v3493, %v3494
      %v3496 = vsel %vm2734, %v3376, 0.0
      %v3497 = vadd.f32 %v3495, %v3496
      %v3498 = vsel %vm2734, %v3381, 0.0
      %v3499 = vadd.f32 %v3497, %v3498
      %v3500 = vsel %vm2734, %v3384, 0.0
      %v3501 = vadd.f32 %v3499, %v3500
      %v3502 = vsel %vm2734, %v3389, 0.0
      %v3503 = vadd.f32 %v3501, %v3502
      %v3504 = vsel %vm2734, %v3392, 0.0
      %v3505 = vadd.f32 %v3503, %v3504
      %v3506 = vsel %vm2734, %v3397, 0.0
      %v3507 = vadd.f32 %v3505, %v3506
      %v3508 = vsel %vm2734, %v3400, 0.0
      %v3509 = vadd.f32 %v3507, %v3508
      %v3510 = vsel %vm2734, %v3405, 0.0
      %v3511 = vadd.f32 %v3509, %v3510
      %v3512 = vsel %vm2734, %v3408, 0.0
      %v3513 = vadd.f32 %v3511, %v3512
      %v3514 = vsel %vm2734, %v3413, 0.0
      %v3515 = vadd.f32 %v3513, %v3514
      %v3516 = vsel %vm2734, %v3416, 0.0
      %v3517 = vadd.f32 %v3515, %v3516
      %v3518 = vsel %vm2734, %v3421, 0.0
      %v3519 = vadd.f32 %v3517, %v3518
      %v3520 = vsel %vm2734, %v3424, 0.0
      %v3521 = vadd.f32 %v3519, %v3520
      %v3522 = vsel %vm2734, %v3429, 0.0
      %v3523 = vadd.f32 %v3521, %v3522
      %v3524 = vsel %vm2734, %v3432, 0.0
      %v3525 = vadd.f32 %v3523, %v3524
      %v3526 = vsel %vm2734, %v3437, 0.0
      %v3527 = vadd.f32 %v3525, %v3526
      %v3528 = vsel %vm2734, %v3440, 0.0
      %v3529 = vadd.f32 %v3527, %v3528
      %v3530 = vsel %vm2734, %v3445, 0.0
      %v3531 = vadd.f32 %v3529, %v3530
      %v3532 = vsel %vm2734, %v3448, 0.0
      %v3533 = vadd.f32 %v3531, %v3532
      %v3534 = vsel %vm2734, %v3453, 0.0
      %v3535 = vadd.f32 %v3533, %v3534
      %v3536 = vsel %vm2734, %v3456, 0.0
      %v3537 = vadd.f32 %v3535, %v3536
      %v3538 = vsel %vm2734, %v3461, 0.0
      %v3539 = vadd.f32 %v3537, %v3538
      %v3540 = vsel %vm2734, %v3464, 0.0
      %v3541 = vadd.f32 %v3539, %v3540
      %v3542 = vsel %vm2734, %v3469, 0.0
      %v3543 = vadd.f32 %v3541, %v3542
      %v3544 = vsel %vm2734, %v3472, 0.0
      %v3545 = vadd.f32 %v3543, %v3544
      %v3546 = vsel %vm2734, %v3477, 0.0
      %v3547 = vadd.f32 %v3545, %v3546
      %v3548 = vsel %vm2734, %v3480, 0.0
      %v3549 = vadd.f32 %v3547, %v3548
      %v3550 = vsel %vm2734, %v3485, 0.0
      %v3551 = vadd.f32 %v3549, %v3550
      %v3552 = vsel %vm2734, %v3488, 0.0
      %v3553 = vadd.f32 %v3551, %v3552
      %v3554 = vrot.slane %v3553, 4
      %v3555 = vadd.f32 %v3553, %v3554
      %v3556 = vrot.slane %v3555, 2
      %v3557 = vadd.f32 %v3555, %v3556
      %v3558 = vrot.slane %v3557, 1
      %v3559 = vadd.f32 %v3557, %v3558
      %3560 = vst.msk [vmem:[%s265] sm:$0x1] %vm273, %v3559
      %v3561 = vmul.f32 %v3365, %v3365
      %v3562 = vmul.f32 %v3368, %v3368
      %v3563 = vmul.f32 %v3373, %v3373
      %v3564 = vmul.f32 %v3376, %v3376
      %v3565 = vmul.f32 %v3381, %v3381
      %v3566 = vmul.f32 %v3384, %v3384
      %v3567 = vmul.f32 %v3389, %v3389
      %v3568 = vmul.f32 %v3392, %v3392
      %v3569 = vmul.f32 %v3397, %v3397
      %v3570 = vmul.f32 %v3400, %v3400
      %v3571 = vmul.f32 %v3405, %v3405
      %v3572 = vmul.f32 %v3408, %v3408
      %v3573 = vmul.f32 %v3413, %v3413
      %v3574 = vmul.f32 %v3416, %v3416
      %v3575 = vmul.f32 %v3421, %v3421
      %v3576 = vmul.f32 %v3424, %v3424
      %v3577 = vmul.f32 %v3429, %v3429
      %v3578 = vmul.f32 %v3432, %v3432
      %v3579 = vmul.f32 %v3437, %v3437
      %v3580 = vmul.f32 %v3440, %v3440
      %v3581 = vmul.f32 %v3445, %v3445
      %v3582 = vmul.f32 %v3448, %v3448
      %v3583 = vmul.f32 %v3453, %v3453
      %v3584 = vmul.f32 %v3456, %v3456
      %v3585 = vmul.f32 %v3461, %v3461
      %v3586 = vmul.f32 %v3464, %v3464
      %v3587 = vmul.f32 %v3469, %v3469
      %v3588 = vmul.f32 %v3472, %v3472
      %v3589 = vmul.f32 %v3477, %v3477
      %v3590 = vmul.f32 %v3480, %v3480
      %v3591 = vmul.f32 %v3485, %v3485
      %v3592 = vmul.f32 %v3488, %v3488
      %v3593 = vsel %vm2734, %v3561, 0.0
      %v3594 = vsel %vm2734, %v3562, 0.0
      %v3595 = vadd.f32 %v3593, %v3594
      %v3596 = vsel %vm2734, %v3563, 0.0
      %v3597 = vadd.f32 %v3595, %v3596
      %v3598 = vsel %vm2734, %v3564, 0.0
      %v3599 = vadd.f32 %v3597, %v3598
      %v3600 = vsel %vm2734, %v3565, 0.0
      %v3601 = vadd.f32 %v3599, %v3600
      %v3602 = vsel %vm2734, %v3566, 0.0
      %v3603 = vadd.f32 %v3601, %v3602
      %v3604 = vsel %vm2734, %v3567, 0.0
      %v3605 = vadd.f32 %v3603, %v3604
      %v3606 = vsel %vm2734, %v3568, 0.0
      %v3607 = vadd.f32 %v3605, %v3606
      %v3608 = vsel %vm2734, %v3569, 0.0
      %v3609 = vadd.f32 %v3607, %v3608
      %v3610 = vsel %vm2734, %v3570, 0.0
      %v3611 = vadd.f32 %v3609, %v3610
      %v3612 = vsel %vm2734, %v3571, 0.0
      %v3613 = vadd.f32 %v3611, %v3612
      %v3614 = vsel %vm2734, %v3572, 0.0
      %v3615 = vadd.f32 %v3613, %v3614
      %v3616 = vsel %vm2734, %v3573, 0.0
      %v3617 = vadd.f32 %v3615, %v3616
      %v3618 = vsel %vm2734, %v3574, 0.0
      %v3619 = vadd.f32 %v3617, %v3618
      %v3620 = vsel %vm2734, %v3575, 0.0
      %v3621 = vadd.f32 %v3619, %v3620
      %v3622 = vsel %vm2734, %v3576, 0.0
      %v3623 = vadd.f32 %v3621, %v3622
      %v3624 = vsel %vm2734, %v3577, 0.0
      %v3625 = vadd.f32 %v3623, %v3624
      %v3626 = vsel %vm2734, %v3578, 0.0
      %v3627 = vadd.f32 %v3625, %v3626
      %v3628 = vsel %vm2734, %v3579, 0.0
      %v3629 = vadd.f32 %v3627, %v3628
      %v3630 = vsel %vm2734, %v3580, 0.0
      %v3631 = vadd.f32 %v3629, %v3630
      %v3632 = vsel %vm2734, %v3581, 0.0
      %v3633 = vadd.f32 %v3631, %v3632
      %v3634 = vsel %vm2734, %v3582, 0.0
      %v3635 = vadd.f32 %v3633, %v3634
      %v3636 = vsel %vm2734, %v3583, 0.0
      %v3637 = vadd.f32 %v3635, %v3636
      %v3638 = vsel %vm2734, %v3584, 0.0
      %v3639 = vadd.f32 %v3637, %v3638
      %v3640 = vsel %vm2734, %v3585, 0.0
      %v3641 = vadd.f32 %v3639, %v3640
      %v3642 = vsel %vm2734, %v3586, 0.0
      %v3643 = vadd.f32 %v3641, %v3642
      %v3644 = vsel %vm2734, %v3587, 0.0
      %v3645 = vadd.f32 %v3643, %v3644
      %v3646 = vsel %vm2734, %v3588, 0.0
      %v3647 = vadd.f32 %v3645, %v3646
      %v3648 = vsel %vm2734, %v3589, 0.0
      %v3649 = vadd.f32 %v3647, %v3648
      %v3650 = vsel %vm2734, %v3590, 0.0
      %v3651 = vadd.f32 %v3649, %v3650
      %v3652 = vsel %vm2734, %v3591, 0.0
      %v3653 = vadd.f32 %v3651, %v3652
      %v3654 = vsel %vm2734, %v3592, 0.0
      %v3655 = vadd.f32 %v3653, %v3654
      %v3656 = vrot.slane %v3655, 4
      %v3657 = vadd.f32 %v3655, %v3656
      %v3658 = vrot.slane %v3657, 2
      %v3659 = vadd.f32 %v3657, %v3658
      %v3660 = vrot.slane %v3659, 1
      %v3661 = vadd.f32 %v3659, %v3660
      %3662 = vst.msk [vmem:[%s268] sm:$0x1] %vm273, %v3661
      %v3663 = vpack.c.bf16 %v3368, %v3365
      %v3664 = vpack.c.bf16 %v3376, %v3373
      %v3665 = vpack.c.bf16 %v3384, %v3381
      %v3666 = vpack.c.bf16 %v3392, %v3389
      %v3667 = vpack.c.bf16 %v3400, %v3397
      %v3668 = vpack.c.bf16 %v3408, %v3405
      %v3669 = vpack.c.bf16 %v3416, %v3413
      %v3670 = vpack.c.bf16 %v3424, %v3421
      %v3671 = vpack.c.bf16 %v3432, %v3429
      %v3672 = vpack.c.bf16 %v3440, %v3437
      %v3673 = vpack.c.bf16 %v3448, %v3445
      %v3674 = vpack.c.bf16 %v3456, %v3453
      %v3675 = vpack.c.bf16 %v3464, %v3461
      %v3676 = vpack.c.bf16 %v3472, %v3469
      %v3677 = vpack.c.bf16 %v3480, %v3477
      %v3678 = vpack.c.bf16 %v3488, %v3485
      %v3695 = vunpack.c.l.b16 %v3663
      %v3696 = vunpack.c.h.b16 %v3663
      %v3697 = vunpack.c.l.b16 %v3664
      %v3698 = vunpack.c.h.b16 %v3664
      %v3699 = vunpack.c.l.b16 %v3665
      %v3700 = vunpack.c.h.b16 %v3665
      %v3701 = vunpack.c.l.b16 %v3666
      %v3702 = vunpack.c.h.b16 %v3666
      %v3703 = vunpack.c.l.b16 %v3667
      %v3704 = vunpack.c.h.b16 %v3667
      %v3705 = vunpack.c.l.b16 %v3668
      %v3706 = vunpack.c.h.b16 %v3668
      %v3707 = vunpack.c.l.b16 %v3669
      %v3708 = vunpack.c.h.b16 %v3669
      %v3709 = vunpack.c.l.b16 %v3670
      %v3710 = vunpack.c.h.b16 %v3670
      %v3711 = vunpack.c.l.b16 %v3671
      %v3712 = vunpack.c.h.b16 %v3671
      %v3713 = vunpack.c.l.b16 %v3672
      %v3714 = vunpack.c.h.b16 %v3672
      %v3715 = vunpack.c.l.b16 %v3673
      %v3716 = vunpack.c.h.b16 %v3673
      %v3717 = vunpack.c.l.b16 %v3674
      %v3718 = vunpack.c.h.b16 %v3674
      %v3719 = vunpack.c.l.b16 %v3675
      %v3720 = vunpack.c.h.b16 %v3675
      %v3721 = vunpack.c.l.b16 %v3676
      %v3722 = vunpack.c.h.b16 %v3676
      %v3723 = vunpack.c.l.b16 %v3677
      %v3724 = vunpack.c.h.b16 %v3677
      %v3725 = vunpack.c.l.b16 %v3678
      %v3726 = vunpack.c.h.b16 %v3678
      %v3727 = vpack.c.b16 %v3695, %v3695
      %v3728 = vpack.c.b16 %v3696, %v3696
      %v3729 = vpack.c.b16 %v3697, %v3697
      %v3730 = vpack.c.b16 %v3698, %v3698
      %v3731 = vpack.c.b16 %v3699, %v3699
      %v3732 = vpack.c.b16 %v3700, %v3700
      %v3733 = vpack.c.b16 %v3701, %v3701
      %v3734 = vpack.c.b16 %v3702, %v3702
      %v3735 = vpack.c.b16 %v3703, %v3703
      %v3736 = vpack.c.b16 %v3704, %v3704
      %v3737 = vpack.c.b16 %v3705, %v3705
      %v3738 = vpack.c.b16 %v3706, %v3706
      %v3739 = vpack.c.b16 %v3707, %v3707
      %v3740 = vpack.c.b16 %v3708, %v3708
      %v3741 = vpack.c.b16 %v3709, %v3709
      %v3742 = vpack.c.b16 %v3710, %v3710
      %v3743 = vpack.c.b16 %v3711, %v3711
      %v3744 = vpack.c.b16 %v3712, %v3712
      %v3745 = vpack.c.b16 %v3713, %v3713
      %v3746 = vpack.c.b16 %v3714, %v3714
      %v3747 = vpack.c.b16 %v3715, %v3715
      %v3748 = vpack.c.b16 %v3716, %v3716
      %v3749 = vpack.c.b16 %v3717, %v3717
      %v3750 = vpack.c.b16 %v3718, %v3718
      %v3751 = vpack.c.b16 %v3719, %v3719
      %v3752 = vpack.c.b16 %v3720, %v3720
      %v3753 = vpack.c.b16 %v3721, %v3721
      %v3754 = vpack.c.b16 %v3722, %v3722
      %v3755 = vpack.c.b16 %v3723, %v3723
      %v3756 = vpack.c.b16 %v3724, %v3724
      %v3757 = vpack.c.b16 %v3725, %v3725
      %v3758 = vpack.c.b16 %v3726, %v3726
      %3791 = vst.msk [vmem:[%s262] sm:$0xf] %vm270, %v3727
      %3792 = vst.msk [vmem:[%s262 + $0x4] sm:$0xf] %vm270, %v3728
      %3793 = vst.msk [vmem:[%s262 + $0x8] sm:$0xf] %vm270, %v3729
      %3794 = vst.msk [vmem:[%s262 + $0xc] sm:$0xf] %vm270, %v3730
      %3795 = vst.msk [vmem:[%s262 + $0x10] sm:$0xf] %vm270, %v3731
      %3796 = vst.msk [vmem:[%s262 + $0x14] sm:$0xf] %vm270, %v3732
      %3797 = vst.msk [vmem:[%s262 + $0x18] sm:$0xf] %vm270, %v3733
      %3798 = vst.msk [vmem:[%s262 + $0x1c] sm:$0xf] %vm270, %v3734
      %3799 = vst.msk [vmem:[%s262 + $0x20] sm:$0xf] %vm270, %v3735
      %3800 = vst.msk [vmem:[%s262 + $0x24] sm:$0xf] %vm270, %v3736
      %3801 = vst.msk [vmem:[%s262 + $0x28] sm:$0xf] %vm270, %v3737
      %3802 = vst.msk [vmem:[%s262 + $0x2c] sm:$0xf] %vm270, %v3738
      %3803 = vst.msk [vmem:[%s262 + $0x30] sm:$0xf] %vm270, %v3739
      %3804 = vst.msk [vmem:[%s262 + $0x34] sm:$0xf] %vm270, %v3740
      %3805 = vst.msk [vmem:[%s262 + $0x38] sm:$0xf] %vm270, %v3741
      %3806 = vst.msk [vmem:[%s262 + $0x3c] sm:$0xf] %vm270, %v3742
      %3807 = vst.msk [vmem:[%s262 + $0x40] sm:$0xf] %vm270, %v3743
      %3808 = vst.msk [vmem:[%s262 + $0x44] sm:$0xf] %vm270, %v3744
      %3809 = vst.msk [vmem:[%s262 + $0x48] sm:$0xf] %vm270, %v3745
      %3810 = vst.msk [vmem:[%s262 + $0x4c] sm:$0xf] %vm270, %v3746
      %3811 = vst.msk [vmem:[%s262 + $0x50] sm:$0xf] %vm270, %v3747
      %3812 = vst.msk [vmem:[%s262 + $0x54] sm:$0xf] %vm270, %v3748
      %3813 = vst.msk [vmem:[%s262 + $0x58] sm:$0xf] %vm270, %v3749
      %3814 = vst.msk [vmem:[%s262 + $0x5c] sm:$0xf] %vm270, %v3750
      %3815 = vst.msk [vmem:[%s262 + $0x60] sm:$0xf] %vm270, %v3751
      %3816 = vst.msk [vmem:[%s262 + $0x64] sm:$0xf] %vm270, %v3752
      %3817 = vst.msk [vmem:[%s262 + $0x68] sm:$0xf] %vm270, %v3753
      %3818 = vst.msk [vmem:[%s262 + $0x6c] sm:$0xf] %vm270, %v3754
      %3819 = vst.msk [vmem:[%s262 + $0x70] sm:$0xf] %vm270, %v3755
      %3820 = vst.msk [vmem:[%s262 + $0x74] sm:$0xf] %vm270, %v3756
      %3821 = vst.msk [vmem:[%s262 + $0x78] sm:$0xf] %vm270, %v3757
      %3822 = vst.msk [vmem:[%s262 + $0x7c] sm:$0xf] %vm270, %v3758
      %p3823 = scmp.lt.s32.totalorder %s18, 3
      %s3824 = scalar_select %p3823, %s18, 3
      %s3825 = smul.addr %s3824, 32
      %s3826 = smul.addr %s3825, 4
      %s3827 = scalar_lea.vmem %s4, %s3826
      %p3828 = scmp.lt.s32.totalorder %s18, 3
      %s3829 = scalar_select %p3828, %s18, 3
      %s3830 = scalar_lea.vmem %s5, %s3829
      %p3831 = scmp.lt.s32.totalorder %s18, 3
      %s3832 = scalar_select %p3831, %s18, 3
      %s3833 = scalar_lea.vmem %s6, %s3832
      // Predicated region
      $region37: #{preact_bottleneck_nchw.6} parent=35 // pred_check
        %p3834 = pneg %p125
      $region38: #{preact_bottleneck_nchw.6} parent=35 // pred_check_branch
        %3836 = sbr.rel (%p3834) target = $region40
      $region39: #{preact_bottleneck_nchw.6} parent=35 // pred_region
        _
      $region40: #{preact_bottleneck_nchw.6} parent=35 // pred_fallthru
        _
      // Predicated region
      $region41: #{preact_bottleneck_nchw.6} parent=35 // pred_check
        %p3837 = pneg %p151
      $region42: #{preact_bottleneck_nchw.6} parent=35 // pred_check_branch
        %3839 = sbr.rel (%p3837) target = $region44
      $region43: #{preact_bottleneck_nchw.6} parent=35 // pred_region
        _
      $region44: #{preact_bottleneck_nchw.6} parent=35 // pred_fallthru
        _
      // Predicated region
      $region45: #{preact_bottleneck_nchw.6} parent=35 // pred_check
        %p3840 = pneg %p177
      $region46: #{preact_bottleneck_nchw.6} parent=35 // pred_check_branch
        %3842 = sbr.rel (%p3840) target = $region48
      $region47: #{preact_bottleneck_nchw.6} parent=35 // pred_region
        _
      $region48: #{preact_bottleneck_nchw.6} parent=35 // pred_fallthru
        _
    $region36: #{preact_bottleneck_nchw.6} parent=5 // pred_fallthru
      _
    %p3843 = scmp.le.s32.totalorder 2, %s13
    // Predicated region
    $region49: #{preact_bottleneck_nchw.6} parent=5 // pred_check
      %p3844 = pneg %p3843
    $region50: #{preact_bottleneck_nchw.6} parent=5 // pred_check_branch
      %3846 = sbr.rel (%p3844) target = $region52
    $region51: #{preact_bottleneck_nchw.6} parent=5 // pred_region
      %s3847 = ssub.s32 %s13, 2
      // Predicated region
      $region53: #{preact_bottleneck_nchw.6} parent=51 // pred_check
        %p3848 = pneg %p131
      $region54: #{preact_bottleneck_nchw.6} parent=51 // pred_check_branch
        %3850 = sbr.rel (%p3848) target = $region56
      $region55: #{preact_bottleneck_nchw.6} parent=51 // pred_region
        %p3851 = scmp.lt.s32.totalorder %s19, 3
        %s3852 = scalar_select %p3851, %s19, 3
        %s3853 = smul.addr %s3852, 32
        %s3854 = smul.addr %s3853, 4
        %s3855 = scalar_lea.vmem %s4, %s3854
      $region56: #{preact_bottleneck_nchw.6} parent=51 // pred_fallthru
        _
      // Predicated region
      $region57: #{preact_bottleneck_nchw.6} parent=51 // pred_check
        %p3856 = pneg %p157
      $region58: #{preact_bottleneck_nchw.6} parent=51 // pred_check_branch
        %3858 = sbr.rel (%p3856) target = $region60
      $region59: #{preact_bottleneck_nchw.6} parent=51 // pred_region
        %p3859 = scmp.lt.s32.totalorder %s19, 3
        %s3860 = scalar_select %p3859, %s19, 3
        %s3861 = scalar_lea.vmem %s5, %s3860
      $region60: #{preact_bottleneck_nchw.6} parent=51 // pred_fallthru
        _
      // Predicated region
      $region61: #{preact_bottleneck_nchw.6} parent=51 // pred_check
        %p3862 = pneg %p183
      $region62: #{preact_bottleneck_nchw.6} parent=51 // pred_check_branch
        %3864 = sbr.rel (%p3862) target = $region64
      $region63: #{preact_bottleneck_nchw.6} parent=51 // pred_region
        %p3865 = scmp.lt.s32.totalorder %s19, 3
        %s3866 = scalar_select %p3865, %s19, 3
        %s3867 = scalar_lea.vmem %s6, %s3866
      $region64: #{preact_bottleneck_nchw.6} parent=51 // pred_fallthru
        _
    $region52: #{preact_bottleneck_nchw.6} parent=5 // pred_fallthru
      _
  $region6: #{preact_bottleneck_nchw.6} parent=0 // loop_footer
    %s17 = sadd.s32 1, %s13
  $region7: #{preact_bottleneck_nchw.6} parent=0 // loop_footer_branch
    %12 = sbr.rel target = $region3
  $region8: #{preact_bottleneck_nchw.6} parent=0 // loop_exit
    _

</llo_original>
